<compile_context>
chip_gen: v6e
topology: v6e:2x2x1
jax: 0.10.0
libtpu: 0.0.40
codegen_flags: <defaults>
</compile_context>

<pallas_src>
import jax
import jax.numpy as jnp
from jax.experimental import pallas as pl
from jax.experimental.pallas import tpu as pltpu

# ----------------------------- configuration -------------------------------
N = 2              # batch
C_IN = 8           # backbone.high_outc (synthetic)
H = W = 16         # feature-map spatial size
HW = H * W         # 256
MID = 128          # hidden channels of each head
SE_RED = 16        # SELayer reduction -> hidden 128 // 16 = 8
SE_HID = MID // SE_RED
BN_EPS = 1e-5      # nn.BatchNorm2d default eps
REGION_OUT = 2
DENSITY_OUT = 1

K_IM2COL = 9 * C_IN        # 72 (already a multiple of 8 sublanes -> no padding)
MID2 = 2 * MID             # 256: both heads stacked along the MXU M dimension
SE2 = 2 * SE_HID           # 16: block-diagonal SE hidden dim for both heads
OUT_TOTAL = 4              # region(2) + density(1) + 1 zero pad row
W1B_ROWS = 8               # rows 0:4 = stacked 1x1 weights, rows 4:8 = bias bcast


# ------------------------------- kernel ------------------------------------
def _heads_kernel(x_ref, w3_ref, fc1_ref, fc2_ref, bns_ref, w1b_ref,
                  pool_ref, bcast_ref, out_ref):
    # x_ref     : (K_IM2COL, N*HW)  im2col'd backbone feature (shared by heads)
    # w3_ref    : (MID2, K_IM2COL)  stacked 3x3 conv weights (region | density)
    # fc1_ref   : (SE2, MID2)       block-diagonal SE fc1 for both heads
    # fc2_ref   : (MID2, SE2)       block-diagonal SE fc2 for both heads
    # bns_ref   : (MID2, 2)         frozen-BN per-channel scale | shift
    # w1b_ref   : (8, MID2)         rows 0:4 = 1x1 conv weights, rows 4:8 = bias
    # pool_ref  : (N*HW, N)         block-averaging matrix (entries 1/HW)
    # bcast_ref : (N, N*HW)         0/1 per-sample indicator matrix
    # out_ref   : (OUT_TOTAL, N*HW) lane-dense transposed 1x1-conv output
    feat = jnp.dot(w3_ref[...], x_ref[...],
                   preferred_element_type=jnp.float32)            # (256, N*HW)

    # SELayer: global average pool as one MXU matmul, then block-diag FCs.
    pooled = jnp.dot(feat, pool_ref[...],
                     preferred_element_type=jnp.float32)          # (256, N)
    s = jnp.maximum(jnp.dot(fc1_ref[...], pooled,
                            preferred_element_type=jnp.float32), 0.0)  # (16, N)
    s = jnp.dot(fc2_ref[...], s, preferred_element_type=jnp.float32)    # (256, N)
    # Fold the frozen-BN per-channel scale into the sigmoid gate.
    gate = jax.nn.sigmoid(s) * bns_ref[:, 0:1]                     # (256, N)

    # Broadcast the per-sample gate across each sample's HW lanes on the MXU,
    # then one fused gate*feat + BN-shift + ReLU elementwise pass.
    gate_full = jnp.dot(gate, bcast_ref[...],
                        preferred_element_type=jnp.float32)        # (256, N*HW)
    act = jnp.maximum(feat * gate_full + bns_ref[:, 1:2], 0.0)

    # Conv2d(128, out_c, k=1) computed transposed -> single lane-dense store.
    out = jnp.dot(w1b_ref[0:OUT_TOTAL, :], act,
                  preferred_element_type=jnp.float32)              # (4, N*HW)
    out_ref[...] = out + w1b_ref[OUT_TOTAL:2 * OUT_TOTAL, 0:1]


# ------------------------- wrapper (per-call, jitted) ------------------------
def _im2col_3x3_t(x_nchw):
    """(N,C,H,W) -> (9C, N*H*W); pad=1, stride=1, K order (ky, kx, c)."""
    n, c, h, w = x_nchw.shape
    xp = jnp.pad(x_nchw, ((0, 0), (0, 0), (1, 1), (1, 1)))
    cols = [xp[:, :, dy:dy + h, dx:dx + w] for dy in range(3) for dx in range(3)]
    xc = jnp.concatenate(cols, axis=1).reshape(n, 9 * c, h * w)     # (N, 9C, HW)
    return jnp.transpose(xc, (1, 0, 2)).reshape(9 * c, n * h * w)   # (9C, N*HW)


@jax.jit
def csmnet_heads(x_nchw, w3, fc1, fc2, bns, w1b, pool, bcast):
    """x_nchw: (N, C_IN, H, W) backbone feature.  Returns (region, density) NCHW."""
    n, c, h, w = x_nchw.shape
    hw = h * w
    # Lane-dense layout assumption (trace-time check): N*H*W must be 128-aligned.
    assert (n * hw) % 128 == 0, "lane-dense layout needs N*H*W % 128 == 0"
    xc = _im2col_3x3_t(x_nchw)                                      # (72, N*HW)

    out = pl.pallas_call(
        _heads_kernel,
        out_shape=jax.ShapeDtypeStruct((OUT_TOTAL, n * hw), jnp.float32),
        grid_spec=pltpu.PrefetchScalarGridSpec(
            num_scalar_prefetch=0,
            grid=(1,),                               # both heads fused in one step
            in_specs=[
                pl.BlockSpec((K_IM2COL, n * hw), lambda i: (0, 0)),
                pl.BlockSpec((MID2, K_IM2COL), lambda i: (0, 0)),
                pl.BlockSpec((SE2, MID2), lambda i: (0, 0)),
                pl.BlockSpec((MID2, SE2), lambda i: (0, 0)),
                pl.BlockSpec((MID2, 2), lambda i: (0, 0)),
                pl.BlockSpec((W1B_ROWS, MID2), lambda i: (0, 0)),
                pl.BlockSpec((n * hw, n), lambda i: (0, 0)),
                pl.BlockSpec((n, n * hw), lambda i: (0, 0)),
            ],
            out_specs=pl.BlockSpec((OUT_TOTAL, n * hw), lambda i: (0, 0)),
        ),
        compiler_params=pltpu.CompilerParams(
            dimension_semantics=("arbitrary",)),
    )(xc, w3, fc1, fc2, bns, w1b, pool, bcast)

    # Lane-dense (out_row, N*HW) tiles -> NCHW (tiny 8 KiB wrapper reorder).
    region = jnp.transpose(out[0:REGION_OUT].reshape(REGION_OUT, n, h, w),
                           (1, 0, 2, 3))
    density = jnp.transpose(
        out[REGION_OUT:REGION_OUT + DENSITY_OUT].reshape(DENSITY_OUT, n, h, w),
        (1, 0, 2, 3))
    return region, density


# --------------------- one-time parameter packing (frozen) -------------------
def pack_params(p_region, p_density, n=N, hw=HW):
    """Fold BN + stack both heads into the kernel's input slabs.  Run once."""
    def conv3_mat(p):
        # torch (O, C, kH, kW) -> (O, 9C) with K order (ky, kx, c).
        return jnp.transpose(p["w3"], (0, 2, 3, 1)).reshape(MID, K_IM2COL)

    w3 = jnp.concatenate([conv3_mat(p_region), conv3_mat(p_density)], axis=0)

    fc1 = jnp.zeros((SE2, MID2), jnp.float32)
    fc1 = fc1.at[0:SE_HID, 0:MID].set(p_region["fc1"])
    fc1 = fc1.at[SE_HID:SE2, MID:MID2].set(p_density["fc1"])

    fc2 = jnp.zeros((MID2, SE2), jnp.float32)
    fc2 = fc2.at[0:MID, 0:SE_HID].set(p_region["fc2"])
    fc2 = fc2.at[MID:MID2, SE_HID:SE2].set(p_density["fc2"])

    def bn_fold(p):
        scale = p["bn_gamma"] / jnp.sqrt(p["bn_var"] + BN_EPS)
        shift = p["bn_beta"] - p["bn_mean"] * scale
        return scale, shift

    sc_r, sh_r = bn_fold(p_region)
    sc_d, sh_d = bn_fold(p_density)
    bns = jnp.stack([jnp.concatenate([sc_r, sc_d]),
                     jnp.concatenate([sh_r, sh_d])], axis=1)        # (256, 2)

    w1b = jnp.zeros((W1B_ROWS, MID2), jnp.float32)
    w1b = w1b.at[0:REGION_OUT, 0:MID].set(p_region["w1"][:, :, 0, 0])
    w1b = w1b.at[REGION_OUT:REGION_OUT + DENSITY_OUT, MID:MID2].set(
        p_density["w1"][:, :, 0, 0])
    bias = jnp.concatenate(
        [p_region["b1"], p_density["b1"],
         jnp.zeros((OUT_TOTAL - REGION_OUT - DENSITY_OUT,), jnp.float32)])
    w1b = w1b.at[OUT_TOTAL:2 * OUT_TOTAL, :].set(
        jnp.broadcast_to(bias[:, None], (OUT_TOTAL, MID2)))

    # Constant pooling / broadcast matrices (depend only on n, hw).
    sample = jnp.repeat(jnp.arange(n), hw)                           # (n*hw,)
    onehot = (sample[:, None] == jnp.arange(n)[None, :]).astype(jnp.float32)
    pool = onehot / hw                                               # (n*hw, n)
    bcast = jnp.transpose(onehot)                                    # (n, n*hw)
    return w3, fc1, fc2, bns, w1b, pool, bcast


# ------------------------- deterministic parameters --------------------------
def make_params(key):
    def kaiming(k, shape, fan_in):
        # kaiming_normal_ (fan_in mode, ReLU gain): std = sqrt(2 / fan_in)
        return jax.random.normal(k, shape, jnp.float32) * jnp.sqrt(2.0 / fan_in)

    def head(k, out_c):
        ks = jax.random.split(k, 5)
        w3 = kaiming(ks[0], (MID, C_IN, 3, 3), C_IN * 9)
        fc1 = jax.random.normal(ks[1], (SE_HID, MID), jnp.float32) / jnp.sqrt(MID)
        fc2 = jax.random.normal(ks[2], (MID, SE_HID), jnp.float32) / jnp.sqrt(SE_HID)
        w1 = kaiming(ks[3], (out_c, MID, 1, 1), MID)
        b1 = jax.random.uniform(ks[4], (out_c,), jnp.float32, -1.0, 1.0) / jnp.sqrt(MID)
        return dict(
            w3=w3, fc1=fc1, fc2=fc2, w1=w1, b1=b1,
            # BatchNorm2d: _init_weight + freeze_bn (eval, fresh running stats).
            bn_gamma=jnp.ones((MID,), jnp.float32),
            bn_beta=jnp.zeros((MID,), jnp.float32),
            bn_mean=jnp.zeros((MID,), jnp.float32),
            bn_var=jnp.ones((MID,), jnp.float32))

    kr, kd = jax.random.split(key)
    return head(kr, REGION_OUT), head(kd, DENSITY_OUT)


# ------------------------------ pure-JAX reference ---------------------------
def reference_heads(x_nchw, params_region, params_density):
    hp = jax.lax.Precision.HIGHEST

    def head(p):
        feat = jax.lax.conv_general_dilated(
            x_nchw, p["w3"], window_strides=(1, 1), padding=((1, 1), (1, 1)),
            dimension_numbers=("NCHW", "OIHW", "NCHW"), precision=hp)
        pooled = jnp.mean(feat, axis=(2, 3))                         # (N, 128)
        s = jnp.maximum(jnp.dot(pooled, p["fc1"].T, precision=hp), 0.0)
        s = jax.nn.sigmoid(jnp.dot(s, p["fc2"].T, precision=hp))     # (N, 128)
        feat = feat * s[:, :, None, None]
        scale = p["bn_gamma"] / jnp.sqrt(p["bn_var"] + BN_EPS)
        shift = p["bn_beta"] - p["bn_mean"] * scale
        feat = jnp.maximum(feat * scale[None, :, None, None]
                           + shift[None, :, None, None], 0.0)
        out = jax.lax.conv_general_dilated(
            feat, p["w1"], window_strides=(1, 1), padding=((0, 0), (0, 0)),
            dimension_numbers=("NCHW", "OIHW", "NCHW"), precision=hp)
        return out + p["b1"][None, :, None, None]

    return head(params_region), head(params_density)


# ---------------------------------- main -------------------------------------
if __name__ == "__main__":
    key = jax.random.PRNGKey(0)
    k_x, k_p = jax.random.split(key)
    x = jax.random.normal(k_x, (N, C_IN, H, W), jnp.float32)   # backbone feature, NCHW
    p_region, p_density = make_params(k_p)

    # Frozen weights: pack once, outside the per-call path.
    packed = jax.block_until_ready(pack_params(p_region, p_density))

    region, density = csmnet_heads(x, *packed)
    jax.block_until_ready((region, density))

    ref_region, ref_density = reference_heads(x, p_region, p_density)
    assert region.shape == (N, REGION_OUT, H, W)
    assert density.shape == (N, DENSITY_OUT, H, W)
    assert jnp.allclose(region, ref_region, rtol=1e-3, atol=1e-3), \
        float(jnp.max(jnp.abs(region - ref_region)))
    assert jnp.allclose(density, ref_density, rtol=1e-3, atol=1e-3), \
        float(jnp.max(jnp.abs(density - ref_density)))

    print("KERNEL_OK")
</pallas_src>

<mosaic_0001>
module attributes {stable_mosaic.version = 11 : i64} {
  func.func @_heads_kernel(%arg0: i32, %arg1: memref<72x512xf32, #tpu.memory_space<vmem>>, %arg2: memref<256x72xf32, #tpu.memory_space<vmem>>, %arg3: memref<16x256xf32, #tpu.memory_space<vmem>>, %arg4: memref<256x16xf32, #tpu.memory_space<vmem>>, %arg5: memref<256x2xf32, #tpu.memory_space<vmem>>, %arg6: memref<8x256xf32, #tpu.memory_space<vmem>>, %arg7: memref<512x2xf32, #tpu.memory_space<vmem>>, %arg8: memref<2x512xf32, #tpu.memory_space<vmem>>, %arg9: memref<4x512xf32, #tpu.memory_space<vmem>>) attributes {dimension_semantics = [#tpu.dimension_semantics<arbitrary>], iteration_bounds = array<i64: 1>, scalar_prefetch = 0 : i64, scratch_operands = 0 : i64, tpu.core_type = #tpu.core_type<tc>, window_params = [{pipeline_mode = #tpu.pipeline_mode<synchronous>, transform_indices = @transform_0, window_bounds = array<i64: 72, 512>}, {pipeline_mode = #tpu.pipeline_mode<synchronous>, transform_indices = @transform_1, window_bounds = array<i64: 256, 72>}, {pipeline_mode = #tpu.pipeline_mode<synchronous>, transform_indices = @transform_2, window_bounds = array<i64: 16, 256>}, {pipeline_mode = #tpu.pipeline_mode<synchronous>, transform_indices = @transform_3, window_bounds = array<i64: 256, 16>}, {pipeline_mode = #tpu.pipeline_mode<synchronous>, transform_indices = @transform_4, window_bounds = array<i64: 256, 2>}, {pipeline_mode = #tpu.pipeline_mode<synchronous>, transform_indices = @transform_5, window_bounds = array<i64: 8, 256>}, {pipeline_mode = #tpu.pipeline_mode<synchronous>, transform_indices = @transform_6, window_bounds = array<i64: 512, 2>}, {pipeline_mode = #tpu.pipeline_mode<synchronous>, transform_indices = @transform_7, window_bounds = array<i64: 2, 512>}, {pipeline_mode = #tpu.pipeline_mode<synchronous>, transform_indices = @transform_8, window_bounds = array<i64: 4, 512>}]} {
    %c0 = arith.constant 0 : index
    %c0_0 = arith.constant 0 : index
    %0 = vector.load %arg2[%c0, %c0_0] : memref<256x72xf32, #tpu.memory_space<vmem>>, vector<256x72xf32>
    %c0_1 = arith.constant 0 : index
    %c0_2 = arith.constant 0 : index
    %1 = vector.load %arg1[%c0_1, %c0_2] : memref<72x512xf32, #tpu.memory_space<vmem>>, vector<72x512xf32>
    %cst = arith.constant dense<0.000000e+00> : vector<256x512xf32>
    %2 = tpu.matmul %0, %1, %cst {dimension_numbers = #tpu.dot_dimension_numbers<[1], [0], [0], [1], [0, 0, 1, 1], [], []>} : vector<256x72xf32>, vector<72x512xf32>, vector<256x512xf32> -> vector<256x512xf32>
    %c0_3 = arith.constant 0 : index
    %c0_4 = arith.constant 0 : index
    %3 = vector.load %arg7[%c0_3, %c0_4] : memref<512x2xf32, #tpu.memory_space<vmem>>, vector<512x2xf32>
    %cst_5 = arith.constant dense<0.000000e+00> : vector<256x2xf32>
    %4 = tpu.matmul %2, %3, %cst_5 {dimension_numbers = #tpu.dot_dimension_numbers<[1], [0], [0], [1], [0, 0, 1, 1], [], []>} : vector<256x512xf32>, vector<512x2xf32>, vector<256x2xf32> -> vector<256x2xf32>
    %c0_6 = arith.constant 0 : index
    %c0_7 = arith.constant 0 : index
    %5 = vector.load %arg3[%c0_6, %c0_7] : memref<16x256xf32, #tpu.memory_space<vmem>>, vector<16x256xf32>
    %cst_8 = arith.constant dense<0.000000e+00> : vector<16x2xf32>
    %6 = tpu.matmul %5, %4, %cst_8 {dimension_numbers = #tpu.dot_dimension_numbers<[1], [0], [0], [1], [0, 0, 1, 1], [], []>} : vector<16x256xf32>, vector<256x2xf32>, vector<16x2xf32> -> vector<16x2xf32>
    %cst_9 = arith.constant 0.000000e+00 : f32
    %7 = vector.broadcast %cst_9 : f32 to vector<16x2xf32>
    %8 = arith.maximumf %6, %7 : vector<16x2xf32>
    %c0_10 = arith.constant 0 : index
    %c0_11 = arith.constant 0 : index
    %9 = vector.load %arg4[%c0_10, %c0_11] : memref<256x16xf32, #tpu.memory_space<vmem>>, vector<256x16xf32>
    %cst_12 = arith.constant dense<0.000000e+00> : vector<256x2xf32>
    %10 = tpu.matmul %9, %8, %cst_12 {dimension_numbers = #tpu.dot_dimension_numbers<[1], [0], [0], [1], [0, 0, 1, 1], [], []>} : vector<256x16xf32>, vector<16x2xf32>, vector<256x2xf32> -> vector<256x2xf32>
    %11 = arith.negf %10 : vector<256x2xf32>
    %12 = math.exp %11 : vector<256x2xf32>
    %cst_13 = arith.constant 1.000000e+00 : f32
    %13 = vector.broadcast %cst_13 : f32 to vector<256x2xf32>
    %14 = arith.addf %13, %12 : vector<256x2xf32>
    %15 = arith.divf %13, %14 : vector<256x2xf32>
    %c0_14 = arith.constant 0 : index
    %c0_15 = arith.constant 0 : index
    %16 = vector.load %arg5[%c0_14, %c0_15] : memref<256x2xf32, #tpu.memory_space<vmem>>, vector<256x1xf32>
    %17 = vector.broadcast %16 : vector<256x1xf32> to vector<256x2xf32>
    %18 = arith.mulf %15, %17 : vector<256x2xf32>
    %c0_16 = arith.constant 0 : index
    %c0_17 = arith.constant 0 : index
    %19 = vector.load %arg8[%c0_16, %c0_17] : memref<2x512xf32, #tpu.memory_space<vmem>>, vector<2x512xf32>
    %cst_18 = arith.constant dense<0.000000e+00> : vector<256x512xf32>
    %20 = tpu.matmul %18, %19, %cst_18 {dimension_numbers = #tpu.dot_dimension_numbers<[1], [0], [0], [1], [0, 0, 1, 1], [], []>} : vector<256x2xf32>, vector<2x512xf32>, vector<256x512xf32> -> vector<256x512xf32>
    %21 = arith.mulf %2, %20 : vector<256x512xf32>
    %c0_19 = arith.constant 0 : index
    %c1 = arith.constant 1 : index
    %22 = vector.load %arg5[%c0_19, %c1] : memref<256x2xf32, #tpu.memory_space<vmem>>, vector<256x1xf32>
    %23 = vector.broadcast %22 : vector<256x1xf32> to vector<256x512xf32>
    %24 = arith.addf %21, %23 : vector<256x512xf32>
    %cst_20 = arith.constant 0.000000e+00 : f32
    %25 = vector.broadcast %cst_20 : f32 to vector<256x512xf32>
    %26 = arith.maximumf %24, %25 : vector<256x512xf32>
    %c0_21 = arith.constant 0 : index
    %c0_22 = arith.constant 0 : index
    %27 = vector.load %arg6[%c0_21, %c0_22] : memref<8x256xf32, #tpu.memory_space<vmem>>, vector<4x256xf32>
    %cst_23 = arith.constant dense<0.000000e+00> : vector<4x512xf32>
    %28 = tpu.matmul %27, %26, %cst_23 {dimension_numbers = #tpu.dot_dimension_numbers<[1], [0], [0], [1], [0, 0, 1, 1], [], []>} : vector<4x256xf32>, vector<256x512xf32>, vector<4x512xf32> -> vector<4x512xf32>
    %c4 = arith.constant 4 : index
    %c0_24 = arith.constant 0 : index
    %29 = vector.load %arg6[%c4, %c0_24] : memref<8x256xf32, #tpu.memory_space<vmem>>, vector<4x1xf32>
    %30 = vector.broadcast %29 : vector<4x1xf32> to vector<4x512xf32>
    %31 = arith.addf %28, %30 : vector<4x512xf32>
    %c0_25 = arith.constant 0 : index
    %c0_26 = arith.constant 0 : index
    %32 = vector.load %arg9[%c0_25, %c0_26] : memref<4x512xf32, #tpu.memory_space<vmem>>, vector<4x512xf32>
    tpu.vector_store %arg9[%c0_25, %c0_26], %31 {strides = array<i32>} : memref<4x512xf32, #tpu.memory_space<vmem>>, vector<4x512xf32>,
    return
  }
  func.func @transform_0(%arg0: i32) -> (i32, i32) {
    %c0_i32 = arith.constant 0 : i32
    %c0_i32_0 = arith.constant 0 : i32
    %c0_i32_1 = arith.constant 0 : i32
    return %c0_i32, %c0_i32_0 : i32, i32
  }
  func.func @transform_1(%arg0: i32) -> (i32, i32) {
    %c0_i32 = arith.constant 0 : i32
    %c0_i32_0 = arith.constant 0 : i32
    %c0_i32_1 = arith.constant 0 : i32
    return %c0_i32, %c0_i32_0 : i32, i32
  }
  func.func @transform_2(%arg0: i32) -> (i32, i32) {
    %c0_i32 = arith.constant 0 : i32
    %c0_i32_0 = arith.constant 0 : i32
    %c0_i32_1 = arith.constant 0 : i32
    return %c0_i32, %c0_i32_0 : i32, i32
  }
  func.func @transform_3(%arg0: i32) -> (i32, i32) {
    %c0_i32 = arith.constant 0 : i32
    %c0_i32_0 = arith.constant 0 : i32
    %c0_i32_1 = arith.constant 0 : i32
    return %c0_i32, %c0_i32_0 : i32, i32
  }
  func.func @transform_4(%arg0: i32) -> (i32, i32) {
    %c0_i32 = arith.constant 0 : i32
    %c0_i32_0 = arith.constant 0 : i32
    %c0_i32_1 = arith.constant 0 : i32
    return %c0_i32, %c0_i32_0 : i32, i32
  }
  func.func @transform_5(%arg0: i32) -> (i32, i32) {
    %c0_i32 = arith.constant 0 : i32
    %c0_i32_0 = arith.constant 0 : i32
    %c0_i32_1 = arith.constant 0 : i32
    return %c0_i32, %c0_i32_0 : i32, i32
  }
  func.func @transform_6(%arg0: i32) -> (i32, i32) {
    %c0_i32 = arith.constant 0 : i32
    %c0_i32_0 = arith.constant 0 : i32
    %c0_i32_1 = arith.constant 0 : i32
    return %c0_i32, %c0_i32_0 : i32, i32
  }
  func.func @transform_7(%arg0: i32) -> (i32, i32) {
    %c0_i32 = arith.constant 0 : i32
    %c0_i32_0 = arith.constant 0 : i32
    %c0_i32_1 = arith.constant 0 : i32
    return %c0_i32, %c0_i32_0 : i32, i32
  }
  func.func @transform_8(%arg0: i32) -> (i32, i32) {
    %c0_i32 = arith.constant 0 : i32
    %c0_i32_0 = arith.constant 0 : i32
    %c0_i32_1 = arith.constant 0 : i32
    return %c0_i32, %c0_i32_0 : i32, i32
  }
}

</mosaic_0001>

<llo_original>
// kernel: csmnet_heads.1
$region0: #{csmnet_heads.1}
  #allocation0 [shape = 'u32[]', space=smem, size = 0x4, offset = 0x4, fixed_abs, tag = 'smem constant byte address 0x4 - core index']
  #allocation1 [shape = 'u32[144,128]{1,0:T(1,128)}', space=vmem, size = 0x12000, scoped, tag = 'internal scratch']
  %s0 = inlined_call_operand.vmem [shape: f32[72,512], index: 0, kind: input, shape index: {}]
  %s1 = inlined_call_operand.vmem [shape: f32[256,72], index: 1, kind: input, shape index: {}]
  %s2 = inlined_call_operand.vmem [shape: f32[16,256], index: 2, kind: input, shape index: {}]
  %s3 = inlined_call_operand.vmem [shape: f32[256,16], index: 3, kind: input, shape index: {}]
  %s4 = inlined_call_operand.vmem [shape: f32[256,2], index: 4, kind: input, shape index: {}]
  %s5 = inlined_call_operand.vmem [shape: f32[8,256], index: 5, kind: input, shape index: {}]
  %s6 = inlined_call_operand.vmem [shape: f32[512,2], index: 6, kind: input, shape index: {}]
  %s7 = inlined_call_operand.vmem [shape: f32[2,512], index: 7, kind: input, shape index: {}]
  %s8 = inlined_call_operand.vmem [shape: f32[4,512], index: 8, kind: output, shape index: {}]
  %s9 = sld [smem:[#allocation0]]
  $region42: #{csmnet_heads.1} parent=0
    _
  %s11 = ssub.s32 1, %s9
  %s12 = scalar_select 0, %s11, %s9
  // Predicated region
  $region2: #{csmnet_heads.1} parent=0 // pred_check
    _
  $region3: #{csmnet_heads.1} parent=0 // pred_check_branch
    %14 = sbr.rel (0) target = $region5
  $region4: #{csmnet_heads.1} parent=0 // pred_region
    _
  $region5: #{csmnet_heads.1} parent=0 // pred_fallthru
    _
  // Predicated region
  $region6: #{csmnet_heads.1} parent=0 // pred_check
    _
  $region7: #{csmnet_heads.1} parent=0 // pred_check_branch
    %16 = sbr.rel (0) target = $region9
  $region8: #{csmnet_heads.1} parent=0 // pred_region
    _
  $region9: #{csmnet_heads.1} parent=0 // pred_fallthru
    _
  // Predicated region
  $region10: #{csmnet_heads.1} parent=0 // pred_check
    _
  $region11: #{csmnet_heads.1} parent=0 // pred_check_branch
    %18 = sbr.rel (0) target = $region13
  $region12: #{csmnet_heads.1} parent=0 // pred_region
    _
  $region13: #{csmnet_heads.1} parent=0 // pred_fallthru
    _
  // Predicated region
  $region14: #{csmnet_heads.1} parent=0 // pred_check
    _
  $region15: #{csmnet_heads.1} parent=0 // pred_check_branch
    %20 = sbr.rel (0) target = $region17
  $region16: #{csmnet_heads.1} parent=0 // pred_region
    _
  $region17: #{csmnet_heads.1} parent=0 // pred_fallthru
    _
  // Predicated region
  $region18: #{csmnet_heads.1} parent=0 // pred_check
    _
  $region19: #{csmnet_heads.1} parent=0 // pred_check_branch
    %22 = sbr.rel (0) target = $region21
  $region20: #{csmnet_heads.1} parent=0 // pred_region
    _
  $region21: #{csmnet_heads.1} parent=0 // pred_fallthru
    _
  // Predicated region
  $region22: #{csmnet_heads.1} parent=0 // pred_check
    _
  $region23: #{csmnet_heads.1} parent=0 // pred_check_branch
    %24 = sbr.rel (0) target = $region25
  $region24: #{csmnet_heads.1} parent=0 // pred_region
    _
  $region25: #{csmnet_heads.1} parent=0 // pred_fallthru
    _
  // Predicated region
  $region26: #{csmnet_heads.1} parent=0 // pred_check
    _
  $region27: #{csmnet_heads.1} parent=0 // pred_check_branch
    %26 = sbr.rel (0) target = $region29
  $region28: #{csmnet_heads.1} parent=0 // pred_region
    _
  $region29: #{csmnet_heads.1} parent=0 // pred_fallthru
    _
  // Predicated region
  $region30: #{csmnet_heads.1} parent=0 // pred_check
    _
  $region31: #{csmnet_heads.1} parent=0 // pred_check_branch
    %28 = sbr.rel (0) target = $region33
  $region32: #{csmnet_heads.1} parent=0 // pred_region
    _
  $region33: #{csmnet_heads.1} parent=0 // pred_fallthru
    _
  %v29 = vld [vmem:[%s1] sm:$0xff]
  %v30 = vld [vmem:[%s1 + $0x8] sm:$0xff]
  %v31 = vld [vmem:[%s1 + $0x10] sm:$0xff]
  %v32 = vld [vmem:[%s1 + $0x18] sm:$0xff]
  %v33 = vld [vmem:[%s1 + $0x20] sm:$0xff]
  %v34 = vld [vmem:[%s1 + $0x28] sm:$0xff]
  %v35 = vld [vmem:[%s1 + $0x30] sm:$0xff]
  %v36 = vld [vmem:[%s1 + $0x38] sm:$0xff]
  %v37 = vld [vmem:[%s1 + $0x40] sm:$0xff]
  %v38 = vld [vmem:[%s1 + $0x48] sm:$0xff]
  %v39 = vld [vmem:[%s1 + $0x50] sm:$0xff]
  %v40 = vld [vmem:[%s1 + $0x58] sm:$0xff]
  %v41 = vld [vmem:[%s1 + $0x60] sm:$0xff]
  %v42 = vld [vmem:[%s1 + $0x68] sm:$0xff]
  %v43 = vld [vmem:[%s1 + $0x70] sm:$0xff]
  %v44 = vld [vmem:[%s1 + $0x78] sm:$0xff]
  %v45 = vld [vmem:[%s1 + $0x80] sm:$0xff]
  %v46 = vld [vmem:[%s1 + $0x88] sm:$0xff]
  %v47 = vld [vmem:[%s1 + $0x90] sm:$0xff]
  %v48 = vld [vmem:[%s1 + $0x98] sm:$0xff]
  %v49 = vld [vmem:[%s1 + $0xa0] sm:$0xff]
  %v50 = vld [vmem:[%s1 + $0xa8] sm:$0xff]
  %v51 = vld [vmem:[%s1 + $0xb0] sm:$0xff]
  %v52 = vld [vmem:[%s1 + $0xb8] sm:$0xff]
  %v53 = vld [vmem:[%s1 + $0xc0] sm:$0xff]
  %v54 = vld [vmem:[%s1 + $0xc8] sm:$0xff]
  %v55 = vld [vmem:[%s1 + $0xd0] sm:$0xff]
  %v56 = vld [vmem:[%s1 + $0xd8] sm:$0xff]
  %v57 = vld [vmem:[%s1 + $0xe0] sm:$0xff]
  %v58 = vld [vmem:[%s1 + $0xe8] sm:$0xff]
  %v59 = vld [vmem:[%s1 + $0xf0] sm:$0xff]
  %v60 = vld [vmem:[%s1 + $0xf8] sm:$0xff]
  %v61 = vld [vmem:[%s0] sm:$0xff]
  %v62 = vld [vmem:[%s0 + $0x8] sm:$0xff]
  %v63 = vld [vmem:[%s0 + $0x10] sm:$0xff]
  %v64 = vld [vmem:[%s0 + $0x18] sm:$0xff]
  %v65 = vld [vmem:[%s0 + $0x20] sm:$0xff]
  %v66 = vld [vmem:[%s0 + $0x28] sm:$0xff]
  %v67 = vld [vmem:[%s0 + $0x30] sm:$0xff]
  %v68 = vld [vmem:[%s0 + $0x38] sm:$0xff]
  %v69 = vld [vmem:[%s0 + $0x40] sm:$0xff]
  %v70 = vld [vmem:[%s0 + $0x48] sm:$0xff]
  %v71 = vld [vmem:[%s0 + $0x50] sm:$0xff]
  %v72 = vld [vmem:[%s0 + $0x58] sm:$0xff]
  %v73 = vld [vmem:[%s0 + $0x60] sm:$0xff]
  %v74 = vld [vmem:[%s0 + $0x68] sm:$0xff]
  %v75 = vld [vmem:[%s0 + $0x70] sm:$0xff]
  %v76 = vld [vmem:[%s0 + $0x78] sm:$0xff]
  %v77 = vld [vmem:[%s0 + $0x80] sm:$0xff]
  %v78 = vld [vmem:[%s0 + $0x88] sm:$0xff]
  %v79 = vld [vmem:[%s0 + $0x90] sm:$0xff]
  %v80 = vld [vmem:[%s0 + $0x98] sm:$0xff]
  %v81 = vld [vmem:[%s0 + $0xa0] sm:$0xff]
  %v82 = vld [vmem:[%s0 + $0xa8] sm:$0xff]
  %v83 = vld [vmem:[%s0 + $0xb0] sm:$0xff]
  %v84 = vld [vmem:[%s0 + $0xb8] sm:$0xff]
  %v85 = vld [vmem:[%s0 + $0xc0] sm:$0xff]
  %v86 = vld [vmem:[%s0 + $0xc8] sm:$0xff]
  %v87 = vld [vmem:[%s0 + $0xd0] sm:$0xff]
  %v88 = vld [vmem:[%s0 + $0xd8] sm:$0xff]
  %v89 = vld [vmem:[%s0 + $0xe0] sm:$0xff]
  %v90 = vld [vmem:[%s0 + $0xe8] sm:$0xff]
  %v91 = vld [vmem:[%s0 + $0xf0] sm:$0xff]
  %v92 = vld [vmem:[%s0 + $0xf8] sm:$0xff]
  %v93 = vld [vmem:[%s0 + $0x100] sm:$0xff]
  %v94 = vld [vmem:[%s0 + $0x108] sm:$0xff]
  %v95 = vld [vmem:[%s0 + $0x110] sm:$0xff]
  %v96 = vld [vmem:[%s0 + $0x118] sm:$0xff]
  %vm97 = vcmask 588800
  %v99 = vsel %vm97, %v29, 0
  %v102 = vsel %vm97, %v30, 0
  %v105 = vsel %vm97, %v31, 0
  %v108 = vsel %vm97, %v32, 0
  %v111 = vsel %vm97, %v33, 0
  %v114 = vsel %vm97, %v34, 0
  %v117 = vsel %vm97, %v35, 0
  %v120 = vsel %vm97, %v36, 0
  %v123 = vsel %vm97, %v37, 0
  %v126 = vsel %vm97, %v38, 0
  %v129 = vsel %vm97, %v39, 0
  %v132 = vsel %vm97, %v40, 0
  %v135 = vsel %vm97, %v41, 0
  %v138 = vsel %vm97, %v42, 0
  %v141 = vsel %vm97, %v43, 0
  %v144 = vsel %vm97, %v44, 0
  %v147 = vsel %vm97, %v45, 0
  %v150 = vsel %vm97, %v46, 0
  %v153 = vsel %vm97, %v47, 0
  %v156 = vsel %vm97, %v48, 0
  %v159 = vsel %vm97, %v49, 0
  %v162 = vsel %vm97, %v50, 0
  %v165 = vsel %vm97, %v51, 0
  %v168 = vsel %vm97, %v52, 0
  %v171 = vsel %vm97, %v53, 0
  %v174 = vsel %vm97, %v54, 0
  %v177 = vsel %vm97, %v55, 0
  %v180 = vsel %vm97, %v56, 0
  %v183 = vsel %vm97, %v57, 0
  %v186 = vsel %vm97, %v58, 0
  %v189 = vsel %vm97, %v59, 0
  %v192 = vsel %vm97, %v60, 0
  %194 = vmatprep.subr.mxu0 0.0
  %195 = vmatpush1.msra.mxu0 0.0
  %196 = vmatprep.subr.mxu0 0.0
  %197 = vmatpush1.msra.mxu0 0.0
  %198 = vmatprep.subr.mxu0 0.0
  %199 = vmatpush1.msra.mxu0 0.0
  %200 = vmatprep.subr.mxu0 0.0
  %201 = vmatpush1.msra.mxu0 0.0
  %202 = vmatprep.subr.mxu0 0.0
  %203 = vmatpush1.msra.mxu0 0.0
  %204 = vmatprep.subr.mxu0 0.0
  %205 = vmatpush1.msra.mxu0 0.0
  %206 = vmatprep.subr.mxu0 0.0
  %207 = vmatpush1.msra.mxu0 0.0
  %208 = vmatprep.subr.mxu0 %v94
  %209 = vmatpush1.msra.mxu0 %v93
  %210 = vmatprep.subr.mxu0 %v90
  %211 = vmatpush1.msra.mxu0 %v89
  %212 = vmatprep.subr.mxu0 %v86
  %213 = vmatpush1.msra.mxu0 %v85
  %214 = vmatprep.subr.mxu0 %v82
  %215 = vmatpush1.msra.mxu0 %v81
  %216 = vmatprep.subr.mxu0 %v78
  %217 = vmatpush1.msra.mxu0 %v77
  %218 = vmatprep.subr.mxu0 %v74
  %219 = vmatpush1.msra.mxu0 %v73
  %220 = vmatprep.subr.mxu0 %v70
  %221 = vmatpush1.msra.mxu0 %v69
  %222 = vmatprep.subr.mxu0 %v66
  %223 = vmatpush1.msra.mxu0 %v65
  %224 = vmatprep.subr.mxu0 %v62
  %225 = vmatpush1.msra.mxu0 %v61
  %226 = vmatprep.subr.mxu0 0.0
  %227 = vmatpush2.msra.mxu0 0.0
  %228 = vmatprep.subr.mxu0 0.0
  %229 = vmatpush2.msra.mxu0 0.0
  %230 = vmatprep.subr.mxu0 0.0
  %231 = vmatpush2.msra.mxu0 0.0
  %232 = vmatprep.subr.mxu0 0.0
  %233 = vmatpush2.msra.mxu0 0.0
  %234 = vmatprep.subr.mxu0 0.0
  %235 = vmatpush2.msra.mxu0 0.0
  %236 = vmatprep.subr.mxu0 0.0
  %237 = vmatpush2.msra.mxu0 0.0
  %238 = vmatprep.subr.mxu0 0.0
  %239 = vmatpush2.msra.mxu0 0.0
  %240 = vmatprep.subr.mxu0 0.0
  %241 = vmatpush2.msra.mxu0 0.0
  %242 = vmatprep.subr.mxu0 0.0
  %243 = vmatpush2.msra.mxu0 0.0
  %244 = vmatprep.subr.mxu0 0.0
  %245 = vmatpush2.msra.mxu0 0.0
  %246 = vmatprep.subr.mxu0 0.0
  %247 = vmatpush2.msra.mxu0 0.0
  %248 = vmatprep.subr.mxu0 0.0
  %249 = vmatpush2.msra.mxu0 0.0
  %250 = vmatprep.subr.mxu0 0.0
  %251 = vmatpush2.msra.mxu0 0.0
  %252 = vmatprep.subr.mxu0 0.0
  %253 = vmatpush2.msra.mxu0 0.0
  %254 = vmatprep.subr.mxu0 0.0
  %255 = vmatpush2.msra.mxu0 0.0
  %256 = vmatprep.subr.mxu0 0.0
  %257 = vmatpush2.msra.mxu0 0.0
  %258 = vmatprep.mubr.f32.mxu0 0.0
  %259 = vmatmul.mubr.f32.gmra.mxu0 %v99
  %v260 = vpop.f32.mrf.mxu0
  %v261 = vadd.f32 0.0, %v260
  %v262 = vpop.f32.mrf.mxu0
  %v263 = vadd.f32 0.0, %v262
  %264 = vmatprep.mubr.f32.mxu0 0.0
  %265 = vmatmul.mubr.f32.gmra.mxu0 %v102
  %v266 = vpop.f32.mrf.mxu0
  %v267 = vadd.f32 0.0, %v266
  %v268 = vpop.f32.mrf.mxu0
  %v269 = vadd.f32 0.0, %v268
  %270 = vmatprep.mubr.f32.mxu0 0.0
  %271 = vmatmul.mubr.f32.gmra.mxu0 %v105
  %v272 = vpop.f32.mrf.mxu0
  %v273 = vadd.f32 0.0, %v272
  %v274 = vpop.f32.mrf.mxu0
  %v275 = vadd.f32 0.0, %v274
  %276 = vmatprep.mubr.f32.mxu0 0.0
  %277 = vmatmul.mubr.f32.gmra.mxu0 %v108
  %v278 = vpop.f32.mrf.mxu0
  %v279 = vadd.f32 0.0, %v278
  %v280 = vpop.f32.mrf.mxu0
  %v281 = vadd.f32 0.0, %v280
  %282 = vmatprep.mubr.f32.mxu0 0.0
  %283 = vmatmul.mubr.f32.gmra.mxu0 %v111
  %v284 = vpop.f32.mrf.mxu0
  %v285 = vadd.f32 0.0, %v284
  %v286 = vpop.f32.mrf.mxu0
  %v287 = vadd.f32 0.0, %v286
  %288 = vmatprep.mubr.f32.mxu0 0.0
  %289 = vmatmul.mubr.f32.gmra.mxu0 %v114
  %v290 = vpop.f32.mrf.mxu0
  %v291 = vadd.f32 0.0, %v290
  %v292 = vpop.f32.mrf.mxu0
  %v293 = vadd.f32 0.0, %v292
  %294 = vmatprep.mubr.f32.mxu0 0.0
  %295 = vmatmul.mubr.f32.gmra.mxu0 %v117
  %v296 = vpop.f32.mrf.mxu0
  %v297 = vadd.f32 0.0, %v296
  %v298 = vpop.f32.mrf.mxu0
  %v299 = vadd.f32 0.0, %v298
  %300 = vmatprep.mubr.f32.mxu0 0.0
  %301 = vmatmul.mubr.f32.gmra.mxu0 %v120
  %v302 = vpop.f32.mrf.mxu0
  %v303 = vadd.f32 0.0, %v302
  %v304 = vpop.f32.mrf.mxu0
  %v305 = vadd.f32 0.0, %v304
  %306 = vmatprep.mubr.f32.mxu0 0.0
  %307 = vmatmul.mubr.f32.gmra.mxu0 %v123
  %v308 = vpop.f32.mrf.mxu0
  %v309 = vadd.f32 0.0, %v308
  %v310 = vpop.f32.mrf.mxu0
  %v311 = vadd.f32 0.0, %v310
  %312 = vmatprep.mubr.f32.mxu0 0.0
  %313 = vmatmul.mubr.f32.gmra.mxu0 %v126
  %v314 = vpop.f32.mrf.mxu0
  %v315 = vadd.f32 0.0, %v314
  %v316 = vpop.f32.mrf.mxu0
  %v317 = vadd.f32 0.0, %v316
  %318 = vmatprep.mubr.f32.mxu0 0.0
  %319 = vmatmul.mubr.f32.gmra.mxu0 %v129
  %v320 = vpop.f32.mrf.mxu0
  %v321 = vadd.f32 0.0, %v320
  %v322 = vpop.f32.mrf.mxu0
  %v323 = vadd.f32 0.0, %v322
  %324 = vmatprep.mubr.f32.mxu0 0.0
  %325 = vmatmul.mubr.f32.gmra.mxu0 %v132
  %v326 = vpop.f32.mrf.mxu0
  %v327 = vadd.f32 0.0, %v326
  %v328 = vpop.f32.mrf.mxu0
  %v329 = vadd.f32 0.0, %v328
  %330 = vmatprep.mubr.f32.mxu0 0.0
  %331 = vmatmul.mubr.f32.gmra.mxu0 %v135
  %v332 = vpop.f32.mrf.mxu0
  %v333 = vadd.f32 0.0, %v332
  %v334 = vpop.f32.mrf.mxu0
  %v335 = vadd.f32 0.0, %v334
  %336 = vmatprep.mubr.f32.mxu0 0.0
  %337 = vmatmul.mubr.f32.gmra.mxu0 %v138
  %v338 = vpop.f32.mrf.mxu0
  %v339 = vadd.f32 0.0, %v338
  %v340 = vpop.f32.mrf.mxu0
  %v341 = vadd.f32 0.0, %v340
  %342 = vmatprep.mubr.f32.mxu0 0.0
  %343 = vmatmul.mubr.f32.gmra.mxu0 %v141
  %v344 = vpop.f32.mrf.mxu0
  %v345 = vadd.f32 0.0, %v344
  %v346 = vpop.f32.mrf.mxu0
  %v347 = vadd.f32 0.0, %v346
  %348 = vmatprep.mubr.f32.mxu0 0.0
  %349 = vmatmul.mubr.f32.gmra.mxu0 %v144
  %v350 = vpop.f32.mrf.mxu0
  %v351 = vadd.f32 0.0, %v350
  %v352 = vpop.f32.mrf.mxu0
  %v353 = vadd.f32 0.0, %v352
  %354 = vmatprep.mubr.f32.mxu0 0.0
  %355 = vmatmul.mubr.f32.gmra.mxu0 %v147
  %v356 = vpop.f32.mrf.mxu0
  %v357 = vadd.f32 0.0, %v356
  %v358 = vpop.f32.mrf.mxu0
  %v359 = vadd.f32 0.0, %v358
  %360 = vmatprep.mubr.f32.mxu0 0.0
  %361 = vmatmul.mubr.f32.gmra.mxu0 %v150
  %v362 = vpop.f32.mrf.mxu0
  %v363 = vadd.f32 0.0, %v362
  %v364 = vpop.f32.mrf.mxu0
  %v365 = vadd.f32 0.0, %v364
  %366 = vmatprep.mubr.f32.mxu0 0.0
  %367 = vmatmul.mubr.f32.gmra.mxu0 %v153
  %v368 = vpop.f32.mrf.mxu0
  %v369 = vadd.f32 0.0, %v368
  %v370 = vpop.f32.mrf.mxu0
  %v371 = vadd.f32 0.0, %v370
  %372 = vmatprep.mubr.f32.mxu0 0.0
  %373 = vmatmul.mubr.f32.gmra.mxu0 %v156
  %v374 = vpop.f32.mrf.mxu0
  %v375 = vadd.f32 0.0, %v374
  %v376 = vpop.f32.mrf.mxu0
  %v377 = vadd.f32 0.0, %v376
  %378 = vmatprep.mubr.f32.mxu0 0.0
  %379 = vmatmul.mubr.f32.gmra.mxu0 %v159
  %v380 = vpop.f32.mrf.mxu0
  %v381 = vadd.f32 0.0, %v380
  %v382 = vpop.f32.mrf.mxu0
  %v383 = vadd.f32 0.0, %v382
  %384 = vmatprep.mubr.f32.mxu0 0.0
  %385 = vmatmul.mubr.f32.gmra.mxu0 %v162
  %v386 = vpop.f32.mrf.mxu0
  %v387 = vadd.f32 0.0, %v386
  %v388 = vpop.f32.mrf.mxu0
  %v389 = vadd.f32 0.0, %v388
  %390 = vmatprep.mubr.f32.mxu0 0.0
  %391 = vmatmul.mubr.f32.gmra.mxu0 %v165
  %v392 = vpop.f32.mrf.mxu0
  %v393 = vadd.f32 0.0, %v392
  %v394 = vpop.f32.mrf.mxu0
  %v395 = vadd.f32 0.0, %v394
  %396 = vmatprep.mubr.f32.mxu0 0.0
  %397 = vmatmul.mubr.f32.gmra.mxu0 %v168
  %v398 = vpop.f32.mrf.mxu0
  %v399 = vadd.f32 0.0, %v398
  %v400 = vpop.f32.mrf.mxu0
  %v401 = vadd.f32 0.0, %v400
  %402 = vmatprep.mubr.f32.mxu0 0.0
  %403 = vmatmul.mubr.f32.gmra.mxu0 %v171
  %v404 = vpop.f32.mrf.mxu0
  %v405 = vadd.f32 0.0, %v404
  %v406 = vpop.f32.mrf.mxu0
  %v407 = vadd.f32 0.0, %v406
  %408 = vmatprep.mubr.f32.mxu0 0.0
  %409 = vmatmul.mubr.f32.gmra.mxu0 %v174
  %v410 = vpop.f32.mrf.mxu0
  %v411 = vadd.f32 0.0, %v410
  %v412 = vpop.f32.mrf.mxu0
  %v413 = vadd.f32 0.0, %v412
  %414 = vmatprep.mubr.f32.mxu0 0.0
  %415 = vmatmul.mubr.f32.gmra.mxu0 %v177
  %v416 = vpop.f32.mrf.mxu0
  %v417 = vadd.f32 0.0, %v416
  %v418 = vpop.f32.mrf.mxu0
  %v419 = vadd.f32 0.0, %v418
  %420 = vmatprep.mubr.f32.mxu0 0.0
  %421 = vmatmul.mubr.f32.gmra.mxu0 %v180
  %v422 = vpop.f32.mrf.mxu0
  %v423 = vadd.f32 0.0, %v422
  %v424 = vpop.f32.mrf.mxu0
  %v425 = vadd.f32 0.0, %v424
  %426 = vmatprep.mubr.f32.mxu0 0.0
  %427 = vmatmul.mubr.f32.gmra.mxu0 %v183
  %v428 = vpop.f32.mrf.mxu0
  %v429 = vadd.f32 0.0, %v428
  %v430 = vpop.f32.mrf.mxu0
  %v431 = vadd.f32 0.0, %v430
  %432 = vmatprep.mubr.f32.mxu0 0.0
  %433 = vmatmul.mubr.f32.gmra.mxu0 %v186
  %v434 = vpop.f32.mrf.mxu0
  %v435 = vadd.f32 0.0, %v434
  %v436 = vpop.f32.mrf.mxu0
  %v437 = vadd.f32 0.0, %v436
  %438 = vmatprep.mubr.f32.mxu0 0.0
  %439 = vmatmul.mubr.f32.gmra.mxu0 %v189
  %v440 = vpop.f32.mrf.mxu0
  %v441 = vadd.f32 0.0, %v440
  %v442 = vpop.f32.mrf.mxu0
  %v443 = vadd.f32 0.0, %v442
  %444 = vmatprep.mubr.f32.mxu0 0.0
  %445 = vmatmul.mubr.f32.gmra.mxu0 %v192
  %v446 = vpop.f32.mrf.mxu0
  %v447 = vadd.f32 0.0, %v446
  %v448 = vpop.f32.mrf.mxu0
  %v449 = vadd.f32 0.0, %v448
  %450 = vdwg.mxu0
  %451 = vmatprep.subr.mxu0 0.0
  %452 = vmatpush1.msra.mxu0 0.0
  %453 = vmatprep.subr.mxu0 0.0
  %454 = vmatpush1.msra.mxu0 0.0
  %455 = vmatprep.subr.mxu0 0.0
  %456 = vmatpush1.msra.mxu0 0.0
  %457 = vmatprep.subr.mxu0 0.0
  %458 = vmatpush1.msra.mxu0 0.0
  %459 = vmatprep.subr.mxu0 0.0
  %460 = vmatpush1.msra.mxu0 0.0
  %461 = vmatprep.subr.mxu0 0.0
  %462 = vmatpush1.msra.mxu0 0.0
  %463 = vmatprep.subr.mxu0 0.0
  %464 = vmatpush1.msra.mxu0 0.0
  %465 = vmatprep.subr.mxu0 %v96
  %466 = vmatpush1.msra.mxu0 %v95
  %467 = vmatprep.subr.mxu0 %v92
  %468 = vmatpush1.msra.mxu0 %v91
  %469 = vmatprep.subr.mxu0 %v88
  %470 = vmatpush1.msra.mxu0 %v87
  %471 = vmatprep.subr.mxu0 %v84
  %472 = vmatpush1.msra.mxu0 %v83
  %473 = vmatprep.subr.mxu0 %v80
  %474 = vmatpush1.msra.mxu0 %v79
  %475 = vmatprep.subr.mxu0 %v76
  %476 = vmatpush1.msra.mxu0 %v75
  %477 = vmatprep.subr.mxu0 %v72
  %478 = vmatpush1.msra.mxu0 %v71
  %479 = vmatprep.subr.mxu0 %v68
  %480 = vmatpush1.msra.mxu0 %v67
  %481 = vmatprep.subr.mxu0 %v64
  %482 = vmatpush1.msra.mxu0 %v63
  %483 = vmatprep.subr.mxu0 0.0
  %484 = vmatpush2.msra.mxu0 0.0
  %485 = vmatprep.subr.mxu0 0.0
  %486 = vmatpush2.msra.mxu0 0.0
  %487 = vmatprep.subr.mxu0 0.0
  %488 = vmatpush2.msra.mxu0 0.0
  %489 = vmatprep.subr.mxu0 0.0
  %490 = vmatpush2.msra.mxu0 0.0
  %491 = vmatprep.subr.mxu0 0.0
  %492 = vmatpush2.msra.mxu0 0.0
  %493 = vmatprep.subr.mxu0 0.0
  %494 = vmatpush2.msra.mxu0 0.0
  %495 = vmatprep.subr.mxu0 0.0
  %496 = vmatpush2.msra.mxu0 0.0
  %497 = vmatprep.subr.mxu0 0.0
  %498 = vmatpush2.msra.mxu0 0.0
  %499 = vmatprep.subr.mxu0 0.0
  %500 = vmatpush2.msra.mxu0 0.0
  %501 = vmatprep.subr.mxu0 0.0
  %502 = vmatpush2.msra.mxu0 0.0
  %503 = vmatprep.subr.mxu0 0.0
  %504 = vmatpush2.msra.mxu0 0.0
  %505 = vmatprep.subr.mxu0 0.0
  %506 = vmatpush2.msra.mxu0 0.0
  %507 = vmatprep.subr.mxu0 0.0
  %508 = vmatpush2.msra.mxu0 0.0
  %509 = vmatprep.subr.mxu0 0.0
  %510 = vmatpush2.msra.mxu0 0.0
  %511 = vmatprep.subr.mxu0 0.0
  %512 = vmatpush2.msra.mxu0 0.0
  %513 = vmatprep.subr.mxu0 0.0
  %514 = vmatpush2.msra.mxu0 0.0
  %515 = vmatprep.mubr.f32.mxu0 0.0
  %516 = vmatmul.mubr.f32.gmra.mxu0 %v99
  %v517 = vpop.f32.mrf.mxu0
  %v518 = vadd.f32 0.0, %v517
  %v519 = vpop.f32.mrf.mxu0
  %v520 = vadd.f32 0.0, %v519
  %521 = vmatprep.mubr.f32.mxu0 0.0
  %522 = vmatmul.mubr.f32.gmra.mxu0 %v102
  %v523 = vpop.f32.mrf.mxu0
  %v524 = vadd.f32 0.0, %v523
  %v525 = vpop.f32.mrf.mxu0
  %v526 = vadd.f32 0.0, %v525
  %527 = vmatprep.mubr.f32.mxu0 0.0
  %528 = vmatmul.mubr.f32.gmra.mxu0 %v105
  %v529 = vpop.f32.mrf.mxu0
  %v530 = vadd.f32 0.0, %v529
  %v531 = vpop.f32.mrf.mxu0
  %v532 = vadd.f32 0.0, %v531
  %533 = vmatprep.mubr.f32.mxu0 0.0
  %534 = vmatmul.mubr.f32.gmra.mxu0 %v108
  %v535 = vpop.f32.mrf.mxu0
  %v536 = vadd.f32 0.0, %v535
  %v537 = vpop.f32.mrf.mxu0
  %v538 = vadd.f32 0.0, %v537
  %539 = vmatprep.mubr.f32.mxu0 0.0
  %540 = vmatmul.mubr.f32.gmra.mxu0 %v111
  %v541 = vpop.f32.mrf.mxu0
  %v542 = vadd.f32 0.0, %v541
  %v543 = vpop.f32.mrf.mxu0
  %v544 = vadd.f32 0.0, %v543
  %545 = vmatprep.mubr.f32.mxu0 0.0
  %546 = vmatmul.mubr.f32.gmra.mxu0 %v114
  %v547 = vpop.f32.mrf.mxu0
  %v548 = vadd.f32 0.0, %v547
  %v549 = vpop.f32.mrf.mxu0
  %v550 = vadd.f32 0.0, %v549
  %551 = vmatprep.mubr.f32.mxu0 0.0
  %552 = vmatmul.mubr.f32.gmra.mxu0 %v117
  %v553 = vpop.f32.mrf.mxu0
  %v554 = vadd.f32 0.0, %v553
  %v555 = vpop.f32.mrf.mxu0
  %v556 = vadd.f32 0.0, %v555
  %557 = vmatprep.mubr.f32.mxu0 0.0
  %558 = vmatmul.mubr.f32.gmra.mxu0 %v120
  %v559 = vpop.f32.mrf.mxu0
  %v560 = vadd.f32 0.0, %v559
  %v561 = vpop.f32.mrf.mxu0
  %v562 = vadd.f32 0.0, %v561
  %563 = vmatprep.mubr.f32.mxu0 0.0
  %564 = vmatmul.mubr.f32.gmra.mxu0 %v123
  %v565 = vpop.f32.mrf.mxu0
  %v566 = vadd.f32 0.0, %v565
  %v567 = vpop.f32.mrf.mxu0
  %v568 = vadd.f32 0.0, %v567
  %569 = vmatprep.mubr.f32.mxu0 0.0
  %570 = vmatmul.mubr.f32.gmra.mxu0 %v126
  %v571 = vpop.f32.mrf.mxu0
  %v572 = vadd.f32 0.0, %v571
  %v573 = vpop.f32.mrf.mxu0
  %v574 = vadd.f32 0.0, %v573
  %575 = vmatprep.mubr.f32.mxu0 0.0
  %576 = vmatmul.mubr.f32.gmra.mxu0 %v129
  %v577 = vpop.f32.mrf.mxu0
  %v578 = vadd.f32 0.0, %v577
  %v579 = vpop.f32.mrf.mxu0
  %v580 = vadd.f32 0.0, %v579
  %581 = vmatprep.mubr.f32.mxu0 0.0
  %582 = vmatmul.mubr.f32.gmra.mxu0 %v132
  %v583 = vpop.f32.mrf.mxu0
  %v584 = vadd.f32 0.0, %v583
  %v585 = vpop.f32.mrf.mxu0
  %v586 = vadd.f32 0.0, %v585
  %587 = vmatprep.mubr.f32.mxu0 0.0
  %588 = vmatmul.mubr.f32.gmra.mxu0 %v135
  %v589 = vpop.f32.mrf.mxu0
  %v590 = vadd.f32 0.0, %v589
  %v591 = vpop.f32.mrf.mxu0
  %v592 = vadd.f32 0.0, %v591
  %593 = vmatprep.mubr.f32.mxu0 0.0
  %594 = vmatmul.mubr.f32.gmra.mxu0 %v138
  %v595 = vpop.f32.mrf.mxu0
  %v596 = vadd.f32 0.0, %v595
  %v597 = vpop.f32.mrf.mxu0
  %v598 = vadd.f32 0.0, %v597
  %599 = vmatprep.mubr.f32.mxu0 0.0
  %600 = vmatmul.mubr.f32.gmra.mxu0 %v141
  %v601 = vpop.f32.mrf.mxu0
  %v602 = vadd.f32 0.0, %v601
  %v603 = vpop.f32.mrf.mxu0
  %v604 = vadd.f32 0.0, %v603
  %605 = vmatprep.mubr.f32.mxu0 0.0
  %606 = vmatmul.mubr.f32.gmra.mxu0 %v144
  %v607 = vpop.f32.mrf.mxu0
  %v608 = vadd.f32 0.0, %v607
  %v609 = vpop.f32.mrf.mxu0
  %v610 = vadd.f32 0.0, %v609
  %611 = vmatprep.mubr.f32.mxu0 0.0
  %612 = vmatmul.mubr.f32.gmra.mxu0 %v147
  %v613 = vpop.f32.mrf.mxu0
  %v614 = vadd.f32 0.0, %v613
  %v615 = vpop.f32.mrf.mxu0
  %v616 = vadd.f32 0.0, %v615
  %617 = vmatprep.mubr.f32.mxu0 0.0
  %618 = vmatmul.mubr.f32.gmra.mxu0 %v150
  %v619 = vpop.f32.mrf.mxu0
  %v620 = vadd.f32 0.0, %v619
  %v621 = vpop.f32.mrf.mxu0
  %v622 = vadd.f32 0.0, %v621
  %623 = vmatprep.mubr.f32.mxu0 0.0
  %624 = vmatmul.mubr.f32.gmra.mxu0 %v153
  %v625 = vpop.f32.mrf.mxu0
  %v626 = vadd.f32 0.0, %v625
  %v627 = vpop.f32.mrf.mxu0
  %v628 = vadd.f32 0.0, %v627
  %629 = vmatprep.mubr.f32.mxu0 0.0
  %630 = vmatmul.mubr.f32.gmra.mxu0 %v156
  %v631 = vpop.f32.mrf.mxu0
  %v632 = vadd.f32 0.0, %v631
  %v633 = vpop.f32.mrf.mxu0
  %v634 = vadd.f32 0.0, %v633
  %635 = vmatprep.mubr.f32.mxu0 0.0
  %636 = vmatmul.mubr.f32.gmra.mxu0 %v159
  %v637 = vpop.f32.mrf.mxu0
  %v638 = vadd.f32 0.0, %v637
  %v639 = vpop.f32.mrf.mxu0
  %v640 = vadd.f32 0.0, %v639
  %641 = vmatprep.mubr.f32.mxu0 0.0
  %642 = vmatmul.mubr.f32.gmra.mxu0 %v162
  %v643 = vpop.f32.mrf.mxu0
  %v644 = vadd.f32 0.0, %v643
  %v645 = vpop.f32.mrf.mxu0
  %v646 = vadd.f32 0.0, %v645
  %647 = vmatprep.mubr.f32.mxu0 0.0
  %648 = vmatmul.mubr.f32.gmra.mxu0 %v165
  %v649 = vpop.f32.mrf.mxu0
  %v650 = vadd.f32 0.0, %v649
  %v651 = vpop.f32.mrf.mxu0
  %v652 = vadd.f32 0.0, %v651
  %653 = vmatprep.mubr.f32.mxu0 0.0
  %654 = vmatmul.mubr.f32.gmra.mxu0 %v168
  %v655 = vpop.f32.mrf.mxu0
  %v656 = vadd.f32 0.0, %v655
  %v657 = vpop.f32.mrf.mxu0
  %v658 = vadd.f32 0.0, %v657
  %659 = vmatprep.mubr.f32.mxu0 0.0
  %660 = vmatmul.mubr.f32.gmra.mxu0 %v171
  %v661 = vpop.f32.mrf.mxu0
  %v662 = vadd.f32 0.0, %v661
  %v663 = vpop.f32.mrf.mxu0
  %v664 = vadd.f32 0.0, %v663
  %665 = vmatprep.mubr.f32.mxu0 0.0
  %666 = vmatmul.mubr.f32.gmra.mxu0 %v174
  %v667 = vpop.f32.mrf.mxu0
  %v668 = vadd.f32 0.0, %v667
  %v669 = vpop.f32.mrf.mxu0
  %v670 = vadd.f32 0.0, %v669
  %671 = vmatprep.mubr.f32.mxu0 0.0
  %672 = vmatmul.mubr.f32.gmra.mxu0 %v177
  %v673 = vpop.f32.mrf.mxu0
  %v674 = vadd.f32 0.0, %v673
  %v675 = vpop.f32.mrf.mxu0
  %v676 = vadd.f32 0.0, %v675
  %677 = vmatprep.mubr.f32.mxu0 0.0
  %678 = vmatmul.mubr.f32.gmra.mxu0 %v180
  %v679 = vpop.f32.mrf.mxu0
  %v680 = vadd.f32 0.0, %v679
  %v681 = vpop.f32.mrf.mxu0
  %v682 = vadd.f32 0.0, %v681
  %683 = vmatprep.mubr.f32.mxu0 0.0
  %684 = vmatmul.mubr.f32.gmra.mxu0 %v183
  %v685 = vpop.f32.mrf.mxu0
  %v686 = vadd.f32 0.0, %v685
  %v687 = vpop.f32.mrf.mxu0
  %v688 = vadd.f32 0.0, %v687
  %689 = vmatprep.mubr.f32.mxu0 0.0
  %690 = vmatmul.mubr.f32.gmra.mxu0 %v186
  %v691 = vpop.f32.mrf.mxu0
  %v692 = vadd.f32 0.0, %v691
  %v693 = vpop.f32.mrf.mxu0
  %v694 = vadd.f32 0.0, %v693
  %695 = vmatprep.mubr.f32.mxu0 0.0
  %696 = vmatmul.mubr.f32.gmra.mxu0 %v189
  %v697 = vpop.f32.mrf.mxu0
  %v698 = vadd.f32 0.0, %v697
  %v699 = vpop.f32.mrf.mxu0
  %v700 = vadd.f32 0.0, %v699
  %701 = vmatprep.mubr.f32.mxu0 0.0
  %702 = vmatmul.mubr.f32.gmra.mxu0 %v192
  %v703 = vpop.f32.mrf.mxu0
  %v704 = vadd.f32 0.0, %v703
  %v705 = vpop.f32.mrf.mxu0
  %v706 = vadd.f32 0.0, %v705
  %707 = vdwg.mxu0
  %v708 = vld [vmem:[%s6] sm:$0xff]
  %v709 = vld [vmem:[%s6 + $0x8] sm:$0xff]
  %v710 = vld [vmem:[%s6 + $0x10] sm:$0xff]
  %v711 = vld [vmem:[%s6 + $0x18] sm:$0xff]
  %v712 = vld [vmem:[%s6 + $0x20] sm:$0xff]
  %v713 = vld [vmem:[%s6 + $0x28] sm:$0xff]
  %v714 = vld [vmem:[%s6 + $0x30] sm:$0xff]
  %v715 = vld [vmem:[%s6 + $0x38] sm:$0xff]
  %v716 = vld [vmem:[%s6 + $0x40] sm:$0xff]
  %v717 = vld [vmem:[%s6 + $0x48] sm:$0xff]
  %v718 = vld [vmem:[%s6 + $0x50] sm:$0xff]
  %v719 = vld [vmem:[%s6 + $0x58] sm:$0xff]
  %v720 = vld [vmem:[%s6 + $0x60] sm:$0xff]
  %v721 = vld [vmem:[%s6 + $0x68] sm:$0xff]
  %v722 = vld [vmem:[%s6 + $0x70] sm:$0xff]
  %v723 = vld [vmem:[%s6 + $0x78] sm:$0xff]
  %v724 = vld [vmem:[%s6 + $0x80] sm:$0xff]
  %v725 = vld [vmem:[%s6 + $0x88] sm:$0xff]
  %v726 = vld [vmem:[%s6 + $0x90] sm:$0xff]
  %v727 = vld [vmem:[%s6 + $0x98] sm:$0xff]
  %v728 = vld [vmem:[%s6 + $0xa0] sm:$0xff]
  %v729 = vld [vmem:[%s6 + $0xa8] sm:$0xff]
  %v730 = vld [vmem:[%s6 + $0xb0] sm:$0xff]
  %v731 = vld [vmem:[%s6 + $0xb8] sm:$0xff]
  %v732 = vld [vmem:[%s6 + $0xc0] sm:$0xff]
  %v733 = vld [vmem:[%s6 + $0xc8] sm:$0xff]
  %v734 = vld [vmem:[%s6 + $0xd0] sm:$0xff]
  %v735 = vld [vmem:[%s6 + $0xd8] sm:$0xff]
  %v736 = vld [vmem:[%s6 + $0xe0] sm:$0xff]
  %v737 = vld [vmem:[%s6 + $0xe8] sm:$0xff]
  %v738 = vld [vmem:[%s6 + $0xf0] sm:$0xff]
  %v739 = vld [vmem:[%s6 + $0xf8] sm:$0xff]
  %v740 = vld [vmem:[%s6 + $0x100] sm:$0xff]
  %v741 = vld [vmem:[%s6 + $0x108] sm:$0xff]
  %v742 = vld [vmem:[%s6 + $0x110] sm:$0xff]
  %v743 = vld [vmem:[%s6 + $0x118] sm:$0xff]
  %v744 = vld [vmem:[%s6 + $0x120] sm:$0xff]
  %v745 = vld [vmem:[%s6 + $0x128] sm:$0xff]
  %v746 = vld [vmem:[%s6 + $0x130] sm:$0xff]
  %v747 = vld [vmem:[%s6 + $0x138] sm:$0xff]
  %v748 = vld [vmem:[%s6 + $0x140] sm:$0xff]
  %v749 = vld [vmem:[%s6 + $0x148] sm:$0xff]
  %v750 = vld [vmem:[%s6 + $0x150] sm:$0xff]
  %v751 = vld [vmem:[%s6 + $0x158] sm:$0xff]
  %v752 = vld [vmem:[%s6 + $0x160] sm:$0xff]
  %v753 = vld [vmem:[%s6 + $0x168] sm:$0xff]
  %v754 = vld [vmem:[%s6 + $0x170] sm:$0xff]
  %v755 = vld [vmem:[%s6 + $0x178] sm:$0xff]
  %v756 = vld [vmem:[%s6 + $0x180] sm:$0xff]
  %v757 = vld [vmem:[%s6 + $0x188] sm:$0xff]
  %v758 = vld [vmem:[%s6 + $0x190] sm:$0xff]
  %v759 = vld [vmem:[%s6 + $0x198] sm:$0xff]
  %v760 = vld [vmem:[%s6 + $0x1a0] sm:$0xff]
  %v761 = vld [vmem:[%s6 + $0x1a8] sm:$0xff]
  %v762 = vld [vmem:[%s6 + $0x1b0] sm:$0xff]
  %v763 = vld [vmem:[%s6 + $0x1b8] sm:$0xff]
  %v764 = vld [vmem:[%s6 + $0x1c0] sm:$0xff]
  %v765 = vld [vmem:[%s6 + $0x1c8] sm:$0xff]
  %v766 = vld [vmem:[%s6 + $0x1d0] sm:$0xff]
  %v767 = vld [vmem:[%s6 + $0x1d8] sm:$0xff]
  %v768 = vld [vmem:[%s6 + $0x1e0] sm:$0xff]
  %v769 = vld [vmem:[%s6 + $0x1e8] sm:$0xff]
  %v770 = vld [vmem:[%s6 + $0x1f0] sm:$0xff]
  %v771 = vld [vmem:[%s6 + $0x1f8] sm:$0xff]
  %772 = vmatprep.subr.mxu0 0.0
  %773 = vmatpush1.msra.mxu0 %v723
  %774 = vmatprep.subr.mxu0 0.0
  %775 = vmatpush1.msra.mxu0 %v722
  %776 = vmatprep.subr.mxu0 0.0
  %777 = vmatpush1.msra.mxu0 %v721
  %778 = vmatprep.subr.mxu0 0.0
  %779 = vmatpush1.msra.mxu0 %v720
  %780 = vmatprep.subr.mxu0 0.0
  %781 = vmatpush1.msra.mxu0 %v719
  %782 = vmatprep.subr.mxu0 0.0
  %783 = vmatpush1.msra.mxu0 %v718
  %784 = vmatprep.subr.mxu0 0.0
  %785 = vmatpush1.msra.mxu0 %v717
  %786 = vmatprep.subr.mxu0 0.0
  %787 = vmatpush1.msra.mxu0 %v716
  %788 = vmatprep.subr.mxu0 0.0
  %789 = vmatpush1.msra.mxu0 %v715
  %790 = vmatprep.subr.mxu0 0.0
  %791 = vmatpush1.msra.mxu0 %v714
  %792 = vmatprep.subr.mxu0 0.0
  %793 = vmatpush1.msra.mxu0 %v713
  %794 = vmatprep.subr.mxu0 0.0
  %795 = vmatpush1.msra.mxu0 %v712
  %796 = vmatprep.subr.mxu0 0.0
  %797 = vmatpush1.msra.mxu0 %v711
  %798 = vmatprep.subr.mxu0 0.0
  %799 = vmatpush1.msra.mxu0 %v710
  %800 = vmatprep.subr.mxu0 0.0
  %801 = vmatpush1.msra.mxu0 %v709
  %802 = vmatprep.subr.mxu0 0.0
  %803 = vmatpush1.msra.mxu0 %v708
  %804 = vmatprep.subr.mxu0 0.0
  %805 = vmatpush2.msra.mxu0 %v739
  %806 = vmatprep.subr.mxu0 0.0
  %807 = vmatpush2.msra.mxu0 %v738
  %808 = vmatprep.subr.mxu0 0.0
  %809 = vmatpush2.msra.mxu0 %v737
  %810 = vmatprep.subr.mxu0 0.0
  %811 = vmatpush2.msra.mxu0 %v736
  %812 = vmatprep.subr.mxu0 0.0
  %813 = vmatpush2.msra.mxu0 %v735
  %814 = vmatprep.subr.mxu0 0.0
  %815 = vmatpush2.msra.mxu0 %v734
  %816 = vmatprep.subr.mxu0 0.0
  %817 = vmatpush2.msra.mxu0 %v733
  %818 = vmatprep.subr.mxu0 0.0
  %819 = vmatpush2.msra.mxu0 %v732
  %820 = vmatprep.subr.mxu0 0.0
  %821 = vmatpush2.msra.mxu0 %v731
  %822 = vmatprep.subr.mxu0 0.0
  %823 = vmatpush2.msra.mxu0 %v730
  %824 = vmatprep.subr.mxu0 0.0
  %825 = vmatpush2.msra.mxu0 %v729
  %826 = vmatprep.subr.mxu0 0.0
  %827 = vmatpush2.msra.mxu0 %v728
  %828 = vmatprep.subr.mxu0 0.0
  %829 = vmatpush2.msra.mxu0 %v727
  %830 = vmatprep.subr.mxu0 0.0
  %831 = vmatpush2.msra.mxu0 %v726
  %832 = vmatprep.subr.mxu0 0.0
  %833 = vmatpush2.msra.mxu0 %v725
  %834 = vmatprep.subr.mxu0 0.0
  %835 = vmatpush2.msra.mxu0 %v724
  %836 = vmatprep.mubr.f32.mxu0 %v263
  %837 = vmatmul.mubr.f32.gmra.mxu0 %v261
  %v838 = vpop.f32.mrf.mxu0
  %v839 = vadd.f32 0.0, %v838
  %v840 = vpop.f32.mrf.mxu0
  %841 = vmatprep.mubr.f32.mxu0 %v269
  %842 = vmatmul.mubr.f32.gmra.mxu0 %v267
  %v843 = vpop.f32.mrf.mxu0
  %v844 = vadd.f32 0.0, %v843
  %v845 = vpop.f32.mrf.mxu0
  %846 = vmatprep.mubr.f32.mxu0 %v275
  %847 = vmatmul.mubr.f32.gmra.mxu0 %v273
  %v848 = vpop.f32.mrf.mxu0
  %v849 = vadd.f32 0.0, %v848
  %v850 = vpop.f32.mrf.mxu0
  %851 = vmatprep.mubr.f32.mxu0 %v281
  %852 = vmatmul.mubr.f32.gmra.mxu0 %v279
  %v853 = vpop.f32.mrf.mxu0
  %v854 = vadd.f32 0.0, %v853
  %v855 = vpop.f32.mrf.mxu0
  %856 = vmatprep.mubr.f32.mxu0 %v287
  %857 = vmatmul.mubr.f32.gmra.mxu0 %v285
  %v858 = vpop.f32.mrf.mxu0
  %v859 = vadd.f32 0.0, %v858
  %v860 = vpop.f32.mrf.mxu0
  %861 = vmatprep.mubr.f32.mxu0 %v293
  %862 = vmatmul.mubr.f32.gmra.mxu0 %v291
  %v863 = vpop.f32.mrf.mxu0
  %v864 = vadd.f32 0.0, %v863
  %v865 = vpop.f32.mrf.mxu0
  %866 = vmatprep.mubr.f32.mxu0 %v299
  %867 = vmatmul.mubr.f32.gmra.mxu0 %v297
  %v868 = vpop.f32.mrf.mxu0
  %v869 = vadd.f32 0.0, %v868
  %v870 = vpop.f32.mrf.mxu0
  %871 = vmatprep.mubr.f32.mxu0 %v305
  %872 = vmatmul.mubr.f32.gmra.mxu0 %v303
  %v873 = vpop.f32.mrf.mxu0
  %v874 = vadd.f32 0.0, %v873
  %v875 = vpop.f32.mrf.mxu0
  %876 = vmatprep.mubr.f32.mxu0 %v311
  %877 = vmatmul.mubr.f32.gmra.mxu0 %v309
  %v878 = vpop.f32.mrf.mxu0
  %v879 = vadd.f32 0.0, %v878
  %v880 = vpop.f32.mrf.mxu0
  %881 = vmatprep.mubr.f32.mxu0 %v317
  %882 = vmatmul.mubr.f32.gmra.mxu0 %v315
  %v883 = vpop.f32.mrf.mxu0
  %v884 = vadd.f32 0.0, %v883
  %v885 = vpop.f32.mrf.mxu0
  %886 = vmatprep.mubr.f32.mxu0 %v323
  %887 = vmatmul.mubr.f32.gmra.mxu0 %v321
  %v888 = vpop.f32.mrf.mxu0
  %v889 = vadd.f32 0.0, %v888
  %v890 = vpop.f32.mrf.mxu0
  %891 = vmatprep.mubr.f32.mxu0 %v329
  %892 = vmatmul.mubr.f32.gmra.mxu0 %v327
  %v893 = vpop.f32.mrf.mxu0
  %v894 = vadd.f32 0.0, %v893
  %v895 = vpop.f32.mrf.mxu0
  %896 = vmatprep.mubr.f32.mxu0 %v335
  %897 = vmatmul.mubr.f32.gmra.mxu0 %v333
  %v898 = vpop.f32.mrf.mxu0
  %v899 = vadd.f32 0.0, %v898
  %v900 = vpop.f32.mrf.mxu0
  %901 = vmatprep.mubr.f32.mxu0 %v341
  %902 = vmatmul.mubr.f32.gmra.mxu0 %v339
  %v903 = vpop.f32.mrf.mxu0
  %v904 = vadd.f32 0.0, %v903
  %v905 = vpop.f32.mrf.mxu0
  %906 = vmatprep.mubr.f32.mxu0 %v347
  %907 = vmatmul.mubr.f32.gmra.mxu0 %v345
  %v908 = vpop.f32.mrf.mxu0
  %v909 = vadd.f32 0.0, %v908
  %v910 = vpop.f32.mrf.mxu0
  %911 = vmatprep.mubr.f32.mxu0 %v353
  %912 = vmatmul.mubr.f32.gmra.mxu0 %v351
  %v913 = vpop.f32.mrf.mxu0
  %v914 = vadd.f32 0.0, %v913
  %v915 = vpop.f32.mrf.mxu0
  %916 = vmatprep.mubr.f32.mxu0 %v359
  %917 = vmatmul.mubr.f32.gmra.mxu0 %v357
  %v918 = vpop.f32.mrf.mxu0
  %v919 = vadd.f32 0.0, %v918
  %v920 = vpop.f32.mrf.mxu0
  %921 = vmatprep.mubr.f32.mxu0 %v365
  %922 = vmatmul.mubr.f32.gmra.mxu0 %v363
  %v923 = vpop.f32.mrf.mxu0
  %v924 = vadd.f32 0.0, %v923
  %v925 = vpop.f32.mrf.mxu0
  %926 = vmatprep.mubr.f32.mxu0 %v371
  %927 = vmatmul.mubr.f32.gmra.mxu0 %v369
  %v928 = vpop.f32.mrf.mxu0
  %v929 = vadd.f32 0.0, %v928
  %v930 = vpop.f32.mrf.mxu0
  %931 = vmatprep.mubr.f32.mxu0 %v377
  %932 = vmatmul.mubr.f32.gmra.mxu0 %v375
  %v933 = vpop.f32.mrf.mxu0
  %v934 = vadd.f32 0.0, %v933
  %v935 = vpop.f32.mrf.mxu0
  %936 = vmatprep.mubr.f32.mxu0 %v383
  %937 = vmatmul.mubr.f32.gmra.mxu0 %v381
  %v938 = vpop.f32.mrf.mxu0
  %v939 = vadd.f32 0.0, %v938
  %v940 = vpop.f32.mrf.mxu0
  %941 = vmatprep.mubr.f32.mxu0 %v389
  %942 = vmatmul.mubr.f32.gmra.mxu0 %v387
  %v943 = vpop.f32.mrf.mxu0
  %v944 = vadd.f32 0.0, %v943
  %v945 = vpop.f32.mrf.mxu0
  %946 = vmatprep.mubr.f32.mxu0 %v395
  %947 = vmatmul.mubr.f32.gmra.mxu0 %v393
  %v948 = vpop.f32.mrf.mxu0
  %v949 = vadd.f32 0.0, %v948
  %v950 = vpop.f32.mrf.mxu0
  %951 = vmatprep.mubr.f32.mxu0 %v401
  %952 = vmatmul.mubr.f32.gmra.mxu0 %v399
  %v953 = vpop.f32.mrf.mxu0
  %v954 = vadd.f32 0.0, %v953
  %v955 = vpop.f32.mrf.mxu0
  %956 = vmatprep.mubr.f32.mxu0 %v407
  %957 = vmatmul.mubr.f32.gmra.mxu0 %v405
  %v958 = vpop.f32.mrf.mxu0
  %v959 = vadd.f32 0.0, %v958
  %v960 = vpop.f32.mrf.mxu0
  %961 = vmatprep.mubr.f32.mxu0 %v413
  %962 = vmatmul.mubr.f32.gmra.mxu0 %v411
  %v963 = vpop.f32.mrf.mxu0
  %v964 = vadd.f32 0.0, %v963
  %v965 = vpop.f32.mrf.mxu0
  %966 = vmatprep.mubr.f32.mxu0 %v419
  %967 = vmatmul.mubr.f32.gmra.mxu0 %v417
  %v968 = vpop.f32.mrf.mxu0
  %v969 = vadd.f32 0.0, %v968
  %v970 = vpop.f32.mrf.mxu0
  %971 = vmatprep.mubr.f32.mxu0 %v425
  %972 = vmatmul.mubr.f32.gmra.mxu0 %v423
  %v973 = vpop.f32.mrf.mxu0
  %v974 = vadd.f32 0.0, %v973
  %v975 = vpop.f32.mrf.mxu0
  %976 = vmatprep.mubr.f32.mxu0 %v431
  %977 = vmatmul.mubr.f32.gmra.mxu0 %v429
  %v978 = vpop.f32.mrf.mxu0
  %v979 = vadd.f32 0.0, %v978
  %v980 = vpop.f32.mrf.mxu0
  %981 = vmatprep.mubr.f32.mxu0 %v437
  %982 = vmatmul.mubr.f32.gmra.mxu0 %v435
  %v983 = vpop.f32.mrf.mxu0
  %v984 = vadd.f32 0.0, %v983
  %v985 = vpop.f32.mrf.mxu0
  %986 = vmatprep.mubr.f32.mxu0 %v443
  %987 = vmatmul.mubr.f32.gmra.mxu0 %v441
  %v988 = vpop.f32.mrf.mxu0
  %v989 = vadd.f32 0.0, %v988
  %v990 = vpop.f32.mrf.mxu0
  %991 = vmatprep.mubr.f32.mxu0 %v449
  %992 = vmatmul.mubr.f32.gmra.mxu0 %v447
  %v993 = vpop.f32.mrf.mxu0
  %v994 = vadd.f32 0.0, %v993
  %v995 = vpop.f32.mrf.mxu0
  %996 = vdwg.mxu0
  %997 = vmatprep.subr.mxu0 0.0
  %998 = vmatpush1.msra.mxu0 %v755
  %999 = vmatprep.subr.mxu0 0.0
  %1000 = vmatpush1.msra.mxu0 %v754
  %1001 = vmatprep.subr.mxu0 0.0
  %1002 = vmatpush1.msra.mxu0 %v753
  %1003 = vmatprep.subr.mxu0 0.0
  %1004 = vmatpush1.msra.mxu0 %v752
  %1005 = vmatprep.subr.mxu0 0.0
  %1006 = vmatpush1.msra.mxu0 %v751
  %1007 = vmatprep.subr.mxu0 0.0
  %1008 = vmatpush1.msra.mxu0 %v750
  %1009 = vmatprep.subr.mxu0 0.0
  %1010 = vmatpush1.msra.mxu0 %v749
  %1011 = vmatprep.subr.mxu0 0.0
  %1012 = vmatpush1.msra.mxu0 %v748
  %1013 = vmatprep.subr.mxu0 0.0
  %1014 = vmatpush1.msra.mxu0 %v747
  %1015 = vmatprep.subr.mxu0 0.0
  %1016 = vmatpush1.msra.mxu0 %v746
  %1017 = vmatprep.subr.mxu0 0.0
  %1018 = vmatpush1.msra.mxu0 %v745
  %1019 = vmatprep.subr.mxu0 0.0
  %1020 = vmatpush1.msra.mxu0 %v744
  %1021 = vmatprep.subr.mxu0 0.0
  %1022 = vmatpush1.msra.mxu0 %v743
  %1023 = vmatprep.subr.mxu0 0.0
  %1024 = vmatpush1.msra.mxu0 %v742
  %1025 = vmatprep.subr.mxu0 0.0
  %1026 = vmatpush1.msra.mxu0 %v741
  %1027 = vmatprep.subr.mxu0 0.0
  %1028 = vmatpush1.msra.mxu0 %v740
  %1029 = vmatprep.subr.mxu0 0.0
  %1030 = vmatpush2.msra.mxu0 %v771
  %1031 = vmatprep.subr.mxu0 0.0
  %1032 = vmatpush2.msra.mxu0 %v770
  %1033 = vmatprep.subr.mxu0 0.0
  %1034 = vmatpush2.msra.mxu0 %v769
  %1035 = vmatprep.subr.mxu0 0.0
  %1036 = vmatpush2.msra.mxu0 %v768
  %1037 = vmatprep.subr.mxu0 0.0
  %1038 = vmatpush2.msra.mxu0 %v767
  %1039 = vmatprep.subr.mxu0 0.0
  %1040 = vmatpush2.msra.mxu0 %v766
  %1041 = vmatprep.subr.mxu0 0.0
  %1042 = vmatpush2.msra.mxu0 %v765
  %1043 = vmatprep.subr.mxu0 0.0
  %1044 = vmatpush2.msra.mxu0 %v764
  %1045 = vmatprep.subr.mxu0 0.0
  %1046 = vmatpush2.msra.mxu0 %v763
  %1047 = vmatprep.subr.mxu0 0.0
  %1048 = vmatpush2.msra.mxu0 %v762
  %1049 = vmatprep.subr.mxu0 0.0
  %1050 = vmatpush2.msra.mxu0 %v761
  %1051 = vmatprep.subr.mxu0 0.0
  %1052 = vmatpush2.msra.mxu0 %v760
  %1053 = vmatprep.subr.mxu0 0.0
  %1054 = vmatpush2.msra.mxu0 %v759
  %1055 = vmatprep.subr.mxu0 0.0
  %1056 = vmatpush2.msra.mxu0 %v758
  %1057 = vmatprep.subr.mxu0 0.0
  %1058 = vmatpush2.msra.mxu0 %v757
  %1059 = vmatprep.subr.mxu0 0.0
  %1060 = vmatpush2.msra.mxu0 %v756
  %1061 = vmatprep.mubr.f32.mxu0 %v520
  %1062 = vmatmul.mubr.f32.gmra.mxu0 %v518
  %v1063 = vpop.f32.mrf.mxu0
  %v1064 = vadd.f32 %v839, %v1063
  %v1065 = vpop.f32.mrf.mxu0
  %1066 = vmatprep.mubr.f32.mxu0 %v526
  %1067 = vmatmul.mubr.f32.gmra.mxu0 %v524
  %v1068 = vpop.f32.mrf.mxu0
  %v1069 = vadd.f32 %v844, %v1068
  %v1070 = vpop.f32.mrf.mxu0
  %1071 = vmatprep.mubr.f32.mxu0 %v532
  %1072 = vmatmul.mubr.f32.gmra.mxu0 %v530
  %v1073 = vpop.f32.mrf.mxu0
  %v1074 = vadd.f32 %v849, %v1073
  %v1075 = vpop.f32.mrf.mxu0
  %1076 = vmatprep.mubr.f32.mxu0 %v538
  %1077 = vmatmul.mubr.f32.gmra.mxu0 %v536
  %v1078 = vpop.f32.mrf.mxu0
  %v1079 = vadd.f32 %v854, %v1078
  %v1080 = vpop.f32.mrf.mxu0
  %1081 = vmatprep.mubr.f32.mxu0 %v544
  %1082 = vmatmul.mubr.f32.gmra.mxu0 %v542
  %v1083 = vpop.f32.mrf.mxu0
  %v1084 = vadd.f32 %v859, %v1083
  %v1085 = vpop.f32.mrf.mxu0
  %1086 = vmatprep.mubr.f32.mxu0 %v550
  %1087 = vmatmul.mubr.f32.gmra.mxu0 %v548
  %v1088 = vpop.f32.mrf.mxu0
  %v1089 = vadd.f32 %v864, %v1088
  %v1090 = vpop.f32.mrf.mxu0
  %1091 = vmatprep.mubr.f32.mxu0 %v556
  %1092 = vmatmul.mubr.f32.gmra.mxu0 %v554
  %v1093 = vpop.f32.mrf.mxu0
  %v1094 = vadd.f32 %v869, %v1093
  %v1095 = vpop.f32.mrf.mxu0
  %1096 = vmatprep.mubr.f32.mxu0 %v562
  %1097 = vmatmul.mubr.f32.gmra.mxu0 %v560
  %v1098 = vpop.f32.mrf.mxu0
  %v1099 = vadd.f32 %v874, %v1098
  %v1100 = vpop.f32.mrf.mxu0
  %1101 = vmatprep.mubr.f32.mxu0 %v568
  %1102 = vmatmul.mubr.f32.gmra.mxu0 %v566
  %v1103 = vpop.f32.mrf.mxu0
  %v1104 = vadd.f32 %v879, %v1103
  %v1105 = vpop.f32.mrf.mxu0
  %1106 = vmatprep.mubr.f32.mxu0 %v574
  %1107 = vmatmul.mubr.f32.gmra.mxu0 %v572
  %v1108 = vpop.f32.mrf.mxu0
  %v1109 = vadd.f32 %v884, %v1108
  %v1110 = vpop.f32.mrf.mxu0
  %1111 = vmatprep.mubr.f32.mxu0 %v580
  %1112 = vmatmul.mubr.f32.gmra.mxu0 %v578
  %v1113 = vpop.f32.mrf.mxu0
  %v1114 = vadd.f32 %v889, %v1113
  %v1115 = vpop.f32.mrf.mxu0
  %1116 = vmatprep.mubr.f32.mxu0 %v586
  %1117 = vmatmul.mubr.f32.gmra.mxu0 %v584
  %v1118 = vpop.f32.mrf.mxu0
  %v1119 = vadd.f32 %v894, %v1118
  %v1120 = vpop.f32.mrf.mxu0
  %1121 = vmatprep.mubr.f32.mxu0 %v592
  %1122 = vmatmul.mubr.f32.gmra.mxu0 %v590
  %v1123 = vpop.f32.mrf.mxu0
  %v1124 = vadd.f32 %v899, %v1123
  %v1125 = vpop.f32.mrf.mxu0
  %1126 = vmatprep.mubr.f32.mxu0 %v598
  %1127 = vmatmul.mubr.f32.gmra.mxu0 %v596
  %v1128 = vpop.f32.mrf.mxu0
  %v1129 = vadd.f32 %v904, %v1128
  %v1130 = vpop.f32.mrf.mxu0
  %1131 = vmatprep.mubr.f32.mxu0 %v604
  %1132 = vmatmul.mubr.f32.gmra.mxu0 %v602
  %v1133 = vpop.f32.mrf.mxu0
  %v1134 = vadd.f32 %v909, %v1133
  %v1135 = vpop.f32.mrf.mxu0
  %1136 = vmatprep.mubr.f32.mxu0 %v610
  %1137 = vmatmul.mubr.f32.gmra.mxu0 %v608
  %v1138 = vpop.f32.mrf.mxu0
  %v1139 = vadd.f32 %v914, %v1138
  %v1140 = vpop.f32.mrf.mxu0
  %1141 = vmatprep.mubr.f32.mxu0 %v616
  %1142 = vmatmul.mubr.f32.gmra.mxu0 %v614
  %v1143 = vpop.f32.mrf.mxu0
  %v1144 = vadd.f32 %v919, %v1143
  %v1145 = vpop.f32.mrf.mxu0
  %1146 = vmatprep.mubr.f32.mxu0 %v622
  %1147 = vmatmul.mubr.f32.gmra.mxu0 %v620
  %v1148 = vpop.f32.mrf.mxu0
  %v1149 = vadd.f32 %v924, %v1148
  %v1150 = vpop.f32.mrf.mxu0
  %1151 = vmatprep.mubr.f32.mxu0 %v628
  %1152 = vmatmul.mubr.f32.gmra.mxu0 %v626
  %v1153 = vpop.f32.mrf.mxu0
  %v1154 = vadd.f32 %v929, %v1153
  %v1155 = vpop.f32.mrf.mxu0
  %1156 = vmatprep.mubr.f32.mxu0 %v634
  %1157 = vmatmul.mubr.f32.gmra.mxu0 %v632
  %v1158 = vpop.f32.mrf.mxu0
  %v1159 = vadd.f32 %v934, %v1158
  %v1160 = vpop.f32.mrf.mxu0
  %1161 = vmatprep.mubr.f32.mxu0 %v640
  %1162 = vmatmul.mubr.f32.gmra.mxu0 %v638
  %v1163 = vpop.f32.mrf.mxu0
  %v1164 = vadd.f32 %v939, %v1163
  %v1165 = vpop.f32.mrf.mxu0
  %1166 = vmatprep.mubr.f32.mxu0 %v646
  %1167 = vmatmul.mubr.f32.gmra.mxu0 %v644
  %v1168 = vpop.f32.mrf.mxu0
  %v1169 = vadd.f32 %v944, %v1168
  %v1170 = vpop.f32.mrf.mxu0
  %1171 = vmatprep.mubr.f32.mxu0 %v652
  %1172 = vmatmul.mubr.f32.gmra.mxu0 %v650
  %v1173 = vpop.f32.mrf.mxu0
  %v1174 = vadd.f32 %v949, %v1173
  %v1175 = vpop.f32.mrf.mxu0
  %1176 = vmatprep.mubr.f32.mxu0 %v658
  %1177 = vmatmul.mubr.f32.gmra.mxu0 %v656
  %v1178 = vpop.f32.mrf.mxu0
  %v1179 = vadd.f32 %v954, %v1178
  %v1180 = vpop.f32.mrf.mxu0
  %1181 = vmatprep.mubr.f32.mxu0 %v664
  %1182 = vmatmul.mubr.f32.gmra.mxu0 %v662
  %v1183 = vpop.f32.mrf.mxu0
  %v1184 = vadd.f32 %v959, %v1183
  %v1185 = vpop.f32.mrf.mxu0
  %1186 = vmatprep.mubr.f32.mxu0 %v670
  %1187 = vmatmul.mubr.f32.gmra.mxu0 %v668
  %v1188 = vpop.f32.mrf.mxu0
  %v1189 = vadd.f32 %v964, %v1188
  %v1190 = vpop.f32.mrf.mxu0
  %1191 = vmatprep.mubr.f32.mxu0 %v676
  %1192 = vmatmul.mubr.f32.gmra.mxu0 %v674
  %v1193 = vpop.f32.mrf.mxu0
  %v1194 = vadd.f32 %v969, %v1193
  %v1195 = vpop.f32.mrf.mxu0
  %1196 = vmatprep.mubr.f32.mxu0 %v682
  %1197 = vmatmul.mubr.f32.gmra.mxu0 %v680
  %v1198 = vpop.f32.mrf.mxu0
  %v1199 = vadd.f32 %v974, %v1198
  %v1200 = vpop.f32.mrf.mxu0
  %1201 = vmatprep.mubr.f32.mxu0 %v688
  %1202 = vmatmul.mubr.f32.gmra.mxu0 %v686
  %v1203 = vpop.f32.mrf.mxu0
  %v1204 = vadd.f32 %v979, %v1203
  %v1205 = vpop.f32.mrf.mxu0
  %1206 = vmatprep.mubr.f32.mxu0 %v694
  %1207 = vmatmul.mubr.f32.gmra.mxu0 %v692
  %v1208 = vpop.f32.mrf.mxu0
  %v1209 = vadd.f32 %v984, %v1208
  %v1210 = vpop.f32.mrf.mxu0
  %1211 = vmatprep.mubr.f32.mxu0 %v700
  %1212 = vmatmul.mubr.f32.gmra.mxu0 %v698
  %v1213 = vpop.f32.mrf.mxu0
  %v1214 = vadd.f32 %v989, %v1213
  %v1215 = vpop.f32.mrf.mxu0
  %1216 = vmatprep.mubr.f32.mxu0 %v706
  %1217 = vmatmul.mubr.f32.gmra.mxu0 %v704
  %v1218 = vpop.f32.mrf.mxu0
  %v1219 = vadd.f32 %v994, %v1218
  %v1220 = vpop.f32.mrf.mxu0
  %1221 = vdwg.mxu0
  %v1222 = vld [vmem:[%s2] sm:$0xff]
  %v1223 = vld [vmem:[%s2 + $0x8] sm:$0xff]
  %v1224 = vld [vmem:[%s2 + $0x10] sm:$0xff]
  %v1225 = vld [vmem:[%s2 + $0x18] sm:$0xff]
  %1226 = vmatprep.subr.mxu0 0.0
  %1227 = vmatpush1.msra.mxu0 %v1139
  %1228 = vmatprep.subr.mxu0 0.0
  %1229 = vmatpush1.msra.mxu0 %v1134
  %1230 = vmatprep.subr.mxu0 0.0
  %1231 = vmatpush1.msra.mxu0 %v1129
  %1232 = vmatprep.subr.mxu0 0.0
  %1233 = vmatpush1.msra.mxu0 %v1124
  %1234 = vmatprep.subr.mxu0 0.0
  %1235 = vmatpush1.msra.mxu0 %v1119
  %1236 = vmatprep.subr.mxu0 0.0
  %1237 = vmatpush1.msra.mxu0 %v1114
  %1238 = vmatprep.subr.mxu0 0.0
  %1239 = vmatpush1.msra.mxu0 %v1109
  %1240 = vmatprep.subr.mxu0 0.0
  %1241 = vmatpush1.msra.mxu0 %v1104
  %1242 = vmatprep.subr.mxu0 0.0
  %1243 = vmatpush1.msra.mxu0 %v1099
  %1244 = vmatprep.subr.mxu0 0.0
  %1245 = vmatpush1.msra.mxu0 %v1094
  %1246 = vmatprep.subr.mxu0 0.0
  %1247 = vmatpush1.msra.mxu0 %v1089
  %1248 = vmatprep.subr.mxu0 0.0
  %1249 = vmatpush1.msra.mxu0 %v1084
  %1250 = vmatprep.subr.mxu0 0.0
  %1251 = vmatpush1.msra.mxu0 %v1079
  %1252 = vmatprep.subr.mxu0 0.0
  %1253 = vmatpush1.msra.mxu0 %v1074
  %1254 = vmatprep.subr.mxu0 0.0
  %1255 = vmatpush1.msra.mxu0 %v1069
  %1256 = vmatprep.subr.mxu0 0.0
  %1257 = vmatpush1.msra.mxu0 %v1064
  %1258 = vmatprep.subr.mxu0 0.0
  %1259 = vmatpush2.msra.mxu0 %v1219
  %1260 = vmatprep.subr.mxu0 0.0
  %1261 = vmatpush2.msra.mxu0 %v1214
  %1262 = vmatprep.subr.mxu0 0.0
  %1263 = vmatpush2.msra.mxu0 %v1209
  %1264 = vmatprep.subr.mxu0 0.0
  %1265 = vmatpush2.msra.mxu0 %v1204
  %1266 = vmatprep.subr.mxu0 0.0
  %1267 = vmatpush2.msra.mxu0 %v1199
  %1268 = vmatprep.subr.mxu0 0.0
  %1269 = vmatpush2.msra.mxu0 %v1194
  %1270 = vmatprep.subr.mxu0 0.0
  %1271 = vmatpush2.msra.mxu0 %v1189
  %1272 = vmatprep.subr.mxu0 0.0
  %1273 = vmatpush2.msra.mxu0 %v1184
  %1274 = vmatprep.subr.mxu0 0.0
  %1275 = vmatpush2.msra.mxu0 %v1179
  %1276 = vmatprep.subr.mxu0 0.0
  %1277 = vmatpush2.msra.mxu0 %v1174
  %1278 = vmatprep.subr.mxu0 0.0
  %1279 = vmatpush2.msra.mxu0 %v1169
  %1280 = vmatprep.subr.mxu0 0.0
  %1281 = vmatpush2.msra.mxu0 %v1164
  %1282 = vmatprep.subr.mxu0 0.0
  %1283 = vmatpush2.msra.mxu0 %v1159
  %1284 = vmatprep.subr.mxu0 0.0
  %1285 = vmatpush2.msra.mxu0 %v1154
  %1286 = vmatprep.subr.mxu0 0.0
  %1287 = vmatpush2.msra.mxu0 %v1149
  %1288 = vmatprep.subr.mxu0 0.0
  %1289 = vmatpush2.msra.mxu0 %v1144
  %1290 = vmatprep.mubr.f32.mxu0 %v1223
  %1291 = vmatmul.mubr.f32.gmra.mxu0 %v1222
  %v1292 = vpop.f32.mrf.mxu0
  %v1293 = vadd.f32 0.0, %v1292
  %v1294 = vpop.f32.mrf.mxu0
  %1295 = vmatprep.mubr.f32.mxu0 %v1225
  %1296 = vmatmul.mubr.f32.gmra.mxu0 %v1224
  %v1297 = vpop.f32.mrf.mxu0
  %v1298 = vadd.f32 0.0, %v1297
  %v1299 = vpop.f32.mrf.mxu0
  %1300 = vdwg.mxu0
  %v1301 = vmax.f32 %v1293, 0.0
  %v1302 = vmax.f32 %v1298, 0.0
  %v1303 = vld [vmem:[%s3] sm:$0xff]
  %v1304 = vld [vmem:[%s3 + $0x8] sm:$0xff]
  %v1305 = vld [vmem:[%s3 + $0x10] sm:$0xff]
  %v1306 = vld [vmem:[%s3 + $0x18] sm:$0xff]
  %v1307 = vld [vmem:[%s3 + $0x20] sm:$0xff]
  %v1308 = vld [vmem:[%s3 + $0x28] sm:$0xff]
  %v1309 = vld [vmem:[%s3 + $0x30] sm:$0xff]
  %v1310 = vld [vmem:[%s3 + $0x38] sm:$0xff]
  %v1311 = vld [vmem:[%s3 + $0x40] sm:$0xff]
  %v1312 = vld [vmem:[%s3 + $0x48] sm:$0xff]
  %v1313 = vld [vmem:[%s3 + $0x50] sm:$0xff]
  %v1314 = vld [vmem:[%s3 + $0x58] sm:$0xff]
  %v1315 = vld [vmem:[%s3 + $0x60] sm:$0xff]
  %v1316 = vld [vmem:[%s3 + $0x68] sm:$0xff]
  %v1317 = vld [vmem:[%s3 + $0x70] sm:$0xff]
  %v1318 = vld [vmem:[%s3 + $0x78] sm:$0xff]
  %v1319 = vld [vmem:[%s3 + $0x80] sm:$0xff]
  %v1320 = vld [vmem:[%s3 + $0x88] sm:$0xff]
  %v1321 = vld [vmem:[%s3 + $0x90] sm:$0xff]
  %v1322 = vld [vmem:[%s3 + $0x98] sm:$0xff]
  %v1323 = vld [vmem:[%s3 + $0xa0] sm:$0xff]
  %v1324 = vld [vmem:[%s3 + $0xa8] sm:$0xff]
  %v1325 = vld [vmem:[%s3 + $0xb0] sm:$0xff]
  %v1326 = vld [vmem:[%s3 + $0xb8] sm:$0xff]
  %v1327 = vld [vmem:[%s3 + $0xc0] sm:$0xff]
  %v1328 = vld [vmem:[%s3 + $0xc8] sm:$0xff]
  %v1329 = vld [vmem:[%s3 + $0xd0] sm:$0xff]
  %v1330 = vld [vmem:[%s3 + $0xd8] sm:$0xff]
  %v1331 = vld [vmem:[%s3 + $0xe0] sm:$0xff]
  %v1332 = vld [vmem:[%s3 + $0xe8] sm:$0xff]
  %v1333 = vld [vmem:[%s3 + $0xf0] sm:$0xff]
  %v1334 = vld [vmem:[%s3 + $0xf8] sm:$0xff]
  %vm1335 = vcmask 130048
  %v1337 = vsel %vm1335, %v1303, 0
  %v1340 = vsel %vm1335, %v1304, 0
  %v1343 = vsel %vm1335, %v1305, 0
  %v1346 = vsel %vm1335, %v1306, 0
  %v1349 = vsel %vm1335, %v1307, 0
  %v1352 = vsel %vm1335, %v1308, 0
  %v1355 = vsel %vm1335, %v1309, 0
  %v1358 = vsel %vm1335, %v1310, 0
  %v1361 = vsel %vm1335, %v1311, 0
  %v1364 = vsel %vm1335, %v1312, 0
  %v1367 = vsel %vm1335, %v1313, 0
  %v1370 = vsel %vm1335, %v1314, 0
  %v1373 = vsel %vm1335, %v1315, 0
  %v1376 = vsel %vm1335, %v1316, 0
  %v1379 = vsel %vm1335, %v1317, 0
  %v1382 = vsel %vm1335, %v1318, 0
  %v1385 = vsel %vm1335, %v1319, 0
  %v1388 = vsel %vm1335, %v1320, 0
  %v1391 = vsel %vm1335, %v1321, 0
  %v1394 = vsel %vm1335, %v1322, 0
  %v1397 = vsel %vm1335, %v1323, 0
  %v1400 = vsel %vm1335, %v1324, 0
  %v1403 = vsel %vm1335, %v1325, 0
  %v1406 = vsel %vm1335, %v1326, 0
  %v1409 = vsel %vm1335, %v1327, 0
  %v1412 = vsel %vm1335, %v1328, 0
  %v1415 = vsel %vm1335, %v1329, 0
  %v1418 = vsel %vm1335, %v1330, 0
  %v1421 = vsel %vm1335, %v1331, 0
  %v1424 = vsel %vm1335, %v1332, 0
  %v1427 = vsel %vm1335, %v1333, 0
  %v1430 = vsel %vm1335, %v1334, 0
  %1432 = vmatprep.subr.mxu0 0.0
  %1433 = vmatpush1.msra.mxu0 0.0
  %1434 = vmatprep.subr.mxu0 0.0
  %1435 = vmatpush1.msra.mxu0 0.0
  %1436 = vmatprep.subr.mxu0 0.0
  %1437 = vmatpush1.msra.mxu0 0.0
  %1438 = vmatprep.subr.mxu0 0.0
  %1439 = vmatpush1.msra.mxu0 0.0
  %1440 = vmatprep.subr.mxu0 0.0
  %1441 = vmatpush1.msra.mxu0 0.0
  %1442 = vmatprep.subr.mxu0 0.0
  %1443 = vmatpush1.msra.mxu0 0.0
  %1444 = vmatprep.subr.mxu0 0.0
  %1445 = vmatpush1.msra.mxu0 0.0
  %1446 = vmatprep.subr.mxu0 0.0
  %1447 = vmatpush1.msra.mxu0 0.0
  %1448 = vmatprep.subr.mxu0 0.0
  %1449 = vmatpush1.msra.mxu0 0.0
  %1450 = vmatprep.subr.mxu0 0.0
  %1451 = vmatpush1.msra.mxu0 0.0
  %1452 = vmatprep.subr.mxu0 0.0
  %1453 = vmatpush1.msra.mxu0 0.0
  %1454 = vmatprep.subr.mxu0 0.0
  %1455 = vmatpush1.msra.mxu0 0.0
  %1456 = vmatprep.subr.mxu0 0.0
  %1457 = vmatpush1.msra.mxu0 0.0
  %1458 = vmatprep.subr.mxu0 0.0
  %1459 = vmatpush1.msra.mxu0 0.0
  %1460 = vmatprep.subr.mxu0 0.0
  %1461 = vmatpush1.msra.mxu0 %v1302
  %1462 = vmatprep.subr.mxu0 0.0
  %1463 = vmatpush1.msra.mxu0 %v1301
  %1464 = vmatprep.subr.mxu0 0.0
  %1465 = vmatpush2.msra.mxu0 0.0
  %1466 = vmatprep.subr.mxu0 0.0
  %1467 = vmatpush2.msra.mxu0 0.0
  %1468 = vmatprep.subr.mxu0 0.0
  %1469 = vmatpush2.msra.mxu0 0.0
  %1470 = vmatprep.subr.mxu0 0.0
  %1471 = vmatpush2.msra.mxu0 0.0
  %1472 = vmatprep.subr.mxu0 0.0
  %1473 = vmatpush2.msra.mxu0 0.0
  %1474 = vmatprep.subr.mxu0 0.0
  %1475 = vmatpush2.msra.mxu0 0.0
  %1476 = vmatprep.subr.mxu0 0.0
  %1477 = vmatpush2.msra.mxu0 0.0
  %1478 = vmatprep.subr.mxu0 0.0
  %1479 = vmatpush2.msra.mxu0 0.0
  %1480 = vmatprep.subr.mxu0 0.0
  %1481 = vmatpush2.msra.mxu0 0.0
  %1482 = vmatprep.subr.mxu0 0.0
  %1483 = vmatpush2.msra.mxu0 0.0
  %1484 = vmatprep.subr.mxu0 0.0
  %1485 = vmatpush2.msra.mxu0 0.0
  %1486 = vmatprep.subr.mxu0 0.0
  %1487 = vmatpush2.msra.mxu0 0.0
  %1488 = vmatprep.subr.mxu0 0.0
  %1489 = vmatpush2.msra.mxu0 0.0
  %1490 = vmatprep.subr.mxu0 0.0
  %1491 = vmatpush2.msra.mxu0 0.0
  %1492 = vmatprep.subr.mxu0 0.0
  %1493 = vmatpush2.msra.mxu0 0.0
  %1494 = vmatprep.subr.mxu0 0.0
  %1495 = vmatpush2.msra.mxu0 0.0
  %1496 = vmatprep.mubr.f32.mxu0 0.0
  %1497 = vmatmul.mubr.f32.gmra.mxu0 %v1337
  %v1498 = vpop.f32.mrf.mxu0
  %v1499 = vadd.f32 0.0, %v1498
  %v1500 = vpop.f32.mrf.mxu0
  %1501 = vmatprep.mubr.f32.mxu0 0.0
  %1502 = vmatmul.mubr.f32.gmra.mxu0 %v1340
  %v1503 = vpop.f32.mrf.mxu0
  %v1504 = vadd.f32 0.0, %v1503
  %v1505 = vpop.f32.mrf.mxu0
  %1506 = vmatprep.mubr.f32.mxu0 0.0
  %1507 = vmatmul.mubr.f32.gmra.mxu0 %v1343
  %v1508 = vpop.f32.mrf.mxu0
  %v1509 = vadd.f32 0.0, %v1508
  %v1510 = vpop.f32.mrf.mxu0
  %1511 = vmatprep.mubr.f32.mxu0 0.0
  %1512 = vmatmul.mubr.f32.gmra.mxu0 %v1346
  %v1513 = vpop.f32.mrf.mxu0
  %v1514 = vadd.f32 0.0, %v1513
  %v1515 = vpop.f32.mrf.mxu0
  %1516 = vmatprep.mubr.f32.mxu0 0.0
  %1517 = vmatmul.mubr.f32.gmra.mxu0 %v1349
  %v1518 = vpop.f32.mrf.mxu0
  %v1519 = vadd.f32 0.0, %v1518
  %v1520 = vpop.f32.mrf.mxu0
  %1521 = vmatprep.mubr.f32.mxu0 0.0
  %1522 = vmatmul.mubr.f32.gmra.mxu0 %v1352
  %v1523 = vpop.f32.mrf.mxu0
  %v1524 = vadd.f32 0.0, %v1523
  %v1525 = vpop.f32.mrf.mxu0
  %1526 = vmatprep.mubr.f32.mxu0 0.0
  %1527 = vmatmul.mubr.f32.gmra.mxu0 %v1355
  %v1528 = vpop.f32.mrf.mxu0
  %v1529 = vadd.f32 0.0, %v1528
  %v1530 = vpop.f32.mrf.mxu0
  %1531 = vmatprep.mubr.f32.mxu0 0.0
  %1532 = vmatmul.mubr.f32.gmra.mxu0 %v1358
  %v1533 = vpop.f32.mrf.mxu0
  %v1534 = vadd.f32 0.0, %v1533
  %v1535 = vpop.f32.mrf.mxu0
  %1536 = vmatprep.mubr.f32.mxu0 0.0
  %1537 = vmatmul.mubr.f32.gmra.mxu0 %v1361
  %v1538 = vpop.f32.mrf.mxu0
  %v1539 = vadd.f32 0.0, %v1538
  %v1540 = vpop.f32.mrf.mxu0
  %1541 = vmatprep.mubr.f32.mxu0 0.0
  %1542 = vmatmul.mubr.f32.gmra.mxu0 %v1364
  %v1543 = vpop.f32.mrf.mxu0
  %v1544 = vadd.f32 0.0, %v1543
  %v1545 = vpop.f32.mrf.mxu0
  %1546 = vmatprep.mubr.f32.mxu0 0.0
  %1547 = vmatmul.mubr.f32.gmra.mxu0 %v1367
  %v1548 = vpop.f32.mrf.mxu0
  %v1549 = vadd.f32 0.0, %v1548
  %v1550 = vpop.f32.mrf.mxu0
  %1551 = vmatprep.mubr.f32.mxu0 0.0
  %1552 = vmatmul.mubr.f32.gmra.mxu0 %v1370
  %v1553 = vpop.f32.mrf.mxu0
  %v1554 = vadd.f32 0.0, %v1553
  %v1555 = vpop.f32.mrf.mxu0
  %1556 = vmatprep.mubr.f32.mxu0 0.0
  %1557 = vmatmul.mubr.f32.gmra.mxu0 %v1373
  %v1558 = vpop.f32.mrf.mxu0
  %v1559 = vadd.f32 0.0, %v1558
  %v1560 = vpop.f32.mrf.mxu0
  %1561 = vmatprep.mubr.f32.mxu0 0.0
  %1562 = vmatmul.mubr.f32.gmra.mxu0 %v1376
  %v1563 = vpop.f32.mrf.mxu0
  %v1564 = vadd.f32 0.0, %v1563
  %v1565 = vpop.f32.mrf.mxu0
  %1566 = vmatprep.mubr.f32.mxu0 0.0
  %1567 = vmatmul.mubr.f32.gmra.mxu0 %v1379
  %v1568 = vpop.f32.mrf.mxu0
  %v1569 = vadd.f32 0.0, %v1568
  %v1570 = vpop.f32.mrf.mxu0
  %1571 = vmatprep.mubr.f32.mxu0 0.0
  %1572 = vmatmul.mubr.f32.gmra.mxu0 %v1382
  %v1573 = vpop.f32.mrf.mxu0
  %v1574 = vadd.f32 0.0, %v1573
  %v1575 = vpop.f32.mrf.mxu0
  %1576 = vmatprep.mubr.f32.mxu0 0.0
  %1577 = vmatmul.mubr.f32.gmra.mxu0 %v1385
  %v1578 = vpop.f32.mrf.mxu0
  %v1579 = vadd.f32 0.0, %v1578
  %v1580 = vpop.f32.mrf.mxu0
  %1581 = vmatprep.mubr.f32.mxu0 0.0
  %1582 = vmatmul.mubr.f32.gmra.mxu0 %v1388
  %v1583 = vpop.f32.mrf.mxu0
  %v1584 = vadd.f32 0.0, %v1583
  %v1585 = vpop.f32.mrf.mxu0
  %1586 = vmatprep.mubr.f32.mxu0 0.0
  %1587 = vmatmul.mubr.f32.gmra.mxu0 %v1391
  %v1588 = vpop.f32.mrf.mxu0
  %v1589 = vadd.f32 0.0, %v1588
  %v1590 = vpop.f32.mrf.mxu0
  %1591 = vmatprep.mubr.f32.mxu0 0.0
  %1592 = vmatmul.mubr.f32.gmra.mxu0 %v1394
  %v1593 = vpop.f32.mrf.mxu0
  %v1594 = vadd.f32 0.0, %v1593
  %v1595 = vpop.f32.mrf.mxu0
  %1596 = vmatprep.mubr.f32.mxu0 0.0
  %1597 = vmatmul.mubr.f32.gmra.mxu0 %v1397
  %v1598 = vpop.f32.mrf.mxu0
  %v1599 = vadd.f32 0.0, %v1598
  %v1600 = vpop.f32.mrf.mxu0
  %1601 = vmatprep.mubr.f32.mxu0 0.0
  %1602 = vmatmul.mubr.f32.gmra.mxu0 %v1400
  %v1603 = vpop.f32.mrf.mxu0
  %v1604 = vadd.f32 0.0, %v1603
  %v1605 = vpop.f32.mrf.mxu0
  %1606 = vmatprep.mubr.f32.mxu0 0.0
  %1607 = vmatmul.mubr.f32.gmra.mxu0 %v1403
  %v1608 = vpop.f32.mrf.mxu0
  %v1609 = vadd.f32 0.0, %v1608
  %v1610 = vpop.f32.mrf.mxu0
  %1611 = vmatprep.mubr.f32.mxu0 0.0
  %1612 = vmatmul.mubr.f32.gmra.mxu0 %v1406
  %v1613 = vpop.f32.mrf.mxu0
  %v1614 = vadd.f32 0.0, %v1613
  %v1615 = vpop.f32.mrf.mxu0
  %1616 = vmatprep.mubr.f32.mxu0 0.0
  %1617 = vmatmul.mubr.f32.gmra.mxu0 %v1409
  %v1618 = vpop.f32.mrf.mxu0
  %v1619 = vadd.f32 0.0, %v1618
  %v1620 = vpop.f32.mrf.mxu0
  %1621 = vmatprep.mubr.f32.mxu0 0.0
  %1622 = vmatmul.mubr.f32.gmra.mxu0 %v1412
  %v1623 = vpop.f32.mrf.mxu0
  %v1624 = vadd.f32 0.0, %v1623
  %v1625 = vpop.f32.mrf.mxu0
  %1626 = vmatprep.mubr.f32.mxu0 0.0
  %1627 = vmatmul.mubr.f32.gmra.mxu0 %v1415
  %v1628 = vpop.f32.mrf.mxu0
  %v1629 = vadd.f32 0.0, %v1628
  %v1630 = vpop.f32.mrf.mxu0
  %1631 = vmatprep.mubr.f32.mxu0 0.0
  %1632 = vmatmul.mubr.f32.gmra.mxu0 %v1418
  %v1633 = vpop.f32.mrf.mxu0
  %v1634 = vadd.f32 0.0, %v1633
  %v1635 = vpop.f32.mrf.mxu0
  %1636 = vmatprep.mubr.f32.mxu0 0.0
  %1637 = vmatmul.mubr.f32.gmra.mxu0 %v1421
  %v1638 = vpop.f32.mrf.mxu0
  %v1639 = vadd.f32 0.0, %v1638
  %v1640 = vpop.f32.mrf.mxu0
  %1641 = vmatprep.mubr.f32.mxu0 0.0
  %1642 = vmatmul.mubr.f32.gmra.mxu0 %v1424
  %v1643 = vpop.f32.mrf.mxu0
  %v1644 = vadd.f32 0.0, %v1643
  %v1645 = vpop.f32.mrf.mxu0
  %1646 = vmatprep.mubr.f32.mxu0 0.0
  %1647 = vmatmul.mubr.f32.gmra.mxu0 %v1427
  %v1648 = vpop.f32.mrf.mxu0
  %v1649 = vadd.f32 0.0, %v1648
  %v1650 = vpop.f32.mrf.mxu0
  %1651 = vmatprep.mubr.f32.mxu0 0.0
  %1652 = vmatmul.mubr.f32.gmra.mxu0 %v1430
  %v1653 = vpop.f32.mrf.mxu0
  %v1654 = vadd.f32 0.0, %v1653
  %v1655 = vpop.f32.mrf.mxu0
  %1656 = vdwg.mxu0
  %v1657 = vxor.u32 %v1499, 2147483648
  %v1658 = vxor.u32 %v1504, 2147483648
  %v1659 = vxor.u32 %v1509, 2147483648
  %v1660 = vxor.u32 %v1514, 2147483648
  %v1661 = vxor.u32 %v1519, 2147483648
  %v1662 = vxor.u32 %v1524, 2147483648
  %v1663 = vxor.u32 %v1529, 2147483648
  %v1664 = vxor.u32 %v1534, 2147483648
  %v1665 = vxor.u32 %v1539, 2147483648
  %v1666 = vxor.u32 %v1544, 2147483648
  %v1667 = vxor.u32 %v1549, 2147483648
  %v1668 = vxor.u32 %v1554, 2147483648
  %v1669 = vxor.u32 %v1559, 2147483648
  %v1670 = vxor.u32 %v1564, 2147483648
  %v1671 = vxor.u32 %v1569, 2147483648
  %v1672 = vxor.u32 %v1574, 2147483648
  %v1673 = vxor.u32 %v1579, 2147483648
  %v1674 = vxor.u32 %v1584, 2147483648
  %v1675 = vxor.u32 %v1589, 2147483648
  %v1676 = vxor.u32 %v1594, 2147483648
  %v1677 = vxor.u32 %v1599, 2147483648
  %v1678 = vxor.u32 %v1604, 2147483648
  %v1679 = vxor.u32 %v1609, 2147483648
  %v1680 = vxor.u32 %v1614, 2147483648
  %v1681 = vxor.u32 %v1619, 2147483648
  %v1682 = vxor.u32 %v1624, 2147483648
  %v1683 = vxor.u32 %v1629, 2147483648
  %v1684 = vxor.u32 %v1634, 2147483648
  %v1685 = vxor.u32 %v1639, 2147483648
  %v1686 = vxor.u32 %v1644, 2147483648
  %v1687 = vxor.u32 %v1649, 2147483648
  %v1688 = vxor.u32 %v1654, 2147483648
  %v1689 = vmul.f32 %v1657, 1.442695
  %v1690 = vpow.pop %v1689
  %v1691 = vmul.f32 %v1658, 1.442695
  %v1692 = vpow.pop %v1691
  %v1693 = vmul.f32 %v1659, 1.442695
  %v1694 = vpow.pop %v1693
  %v1695 = vmul.f32 %v1660, 1.442695
  %v1696 = vpow.pop %v1695
  %v1697 = vmul.f32 %v1661, 1.442695
  %v1698 = vpow.pop %v1697
  %v1699 = vmul.f32 %v1662, 1.442695
  %v1700 = vpow.pop %v1699
  %v1701 = vmul.f32 %v1663, 1.442695
  %v1702 = vpow.pop %v1701
  %v1703 = vmul.f32 %v1664, 1.442695
  %v1704 = vpow.pop %v1703
  %v1705 = vmul.f32 %v1665, 1.442695
  %v1706 = vpow.pop %v1705
  %v1707 = vmul.f32 %v1666, 1.442695
  %v1708 = vpow.pop %v1707
  %v1709 = vmul.f32 %v1667, 1.442695
  %v1710 = vpow.pop %v1709
  %v1711 = vmul.f32 %v1668, 1.442695
  %v1712 = vpow.pop %v1711
  %v1713 = vmul.f32 %v1669, 1.442695
  %v1714 = vpow.pop %v1713
  %v1715 = vmul.f32 %v1670, 1.442695
  %v1716 = vpow.pop %v1715
  %v1717 = vmul.f32 %v1671, 1.442695
  %v1718 = vpow.pop %v1717
  %v1719 = vmul.f32 %v1672, 1.442695
  %v1720 = vpow.pop %v1719
  %v1721 = vmul.f32 %v1673, 1.442695
  %v1722 = vpow.pop %v1721
  %v1723 = vmul.f32 %v1674, 1.442695
  %v1724 = vpow.pop %v1723
  %v1725 = vmul.f32 %v1675, 1.442695
  %v1726 = vpow.pop %v1725
  %v1727 = vmul.f32 %v1676, 1.442695
  %v1728 = vpow.pop %v1727
  %v1729 = vmul.f32 %v1677, 1.442695
  %v1730 = vpow.pop %v1729
  %v1731 = vmul.f32 %v1678, 1.442695
  %v1732 = vpow.pop %v1731
  %v1733 = vmul.f32 %v1679, 1.442695
  %v1734 = vpow.pop %v1733
  %v1735 = vmul.f32 %v1680, 1.442695
  %v1736 = vpow.pop %v1735
  %v1737 = vmul.f32 %v1681, 1.442695
  %v1738 = vpow.pop %v1737
  %v1739 = vmul.f32 %v1682, 1.442695
  %v1740 = vpow.pop %v1739
  %v1741 = vmul.f32 %v1683, 1.442695
  %v1742 = vpow.pop %v1741
  %v1743 = vmul.f32 %v1684, 1.442695
  %v1744 = vpow.pop %v1743
  %v1745 = vmul.f32 %v1685, 1.442695
  %v1746 = vpow.pop %v1745
  %v1747 = vmul.f32 %v1686, 1.442695
  %v1748 = vpow.pop %v1747
  %v1749 = vmul.f32 %v1687, 1.442695
  %v1750 = vpow.pop %v1749
  %v1751 = vmul.f32 %v1688, 1.442695
  %v1752 = vpow.pop %v1751
  %v1753 = vadd.f32 %v1690, 1.0
  %v1754 = vadd.f32 %v1692, 1.0
  %v1755 = vadd.f32 %v1694, 1.0
  %v1756 = vadd.f32 %v1696, 1.0
  %v1757 = vadd.f32 %v1698, 1.0
  %v1758 = vadd.f32 %v1700, 1.0
  %v1759 = vadd.f32 %v1702, 1.0
  %v1760 = vadd.f32 %v1704, 1.0
  %v1761 = vadd.f32 %v1706, 1.0
  %v1762 = vadd.f32 %v1708, 1.0
  %v1763 = vadd.f32 %v1710, 1.0
  %v1764 = vadd.f32 %v1712, 1.0
  %v1765 = vadd.f32 %v1714, 1.0
  %v1766 = vadd.f32 %v1716, 1.0
  %v1767 = vadd.f32 %v1718, 1.0
  %v1768 = vadd.f32 %v1720, 1.0
  %v1769 = vadd.f32 %v1722, 1.0
  %v1770 = vadd.f32 %v1724, 1.0
  %v1771 = vadd.f32 %v1726, 1.0
  %v1772 = vadd.f32 %v1728, 1.0
  %v1773 = vadd.f32 %v1730, 1.0
  %v1774 = vadd.f32 %v1732, 1.0
  %v1775 = vadd.f32 %v1734, 1.0
  %v1776 = vadd.f32 %v1736, 1.0
  %v1777 = vadd.f32 %v1738, 1.0
  %v1778 = vadd.f32 %v1740, 1.0
  %v1779 = vadd.f32 %v1742, 1.0
  %v1780 = vadd.f32 %v1744, 1.0
  %v1781 = vadd.f32 %v1746, 1.0
  %v1782 = vadd.f32 %v1748, 1.0
  %v1783 = vadd.f32 %v1750, 1.0
  %v1784 = vadd.f32 %v1752, 1.0
  %v1785 = vrcp.pop %v1753
  %v1786 = vmul.f32 1.0, %v1785
  %v1787 = vrcp.pop %v1754
  %v1788 = vmul.f32 1.0, %v1787
  %v1789 = vrcp.pop %v1755
  %v1790 = vmul.f32 1.0, %v1789
  %v1791 = vrcp.pop %v1756
  %v1792 = vmul.f32 1.0, %v1791
  %v1793 = vrcp.pop %v1757
  %v1794 = vmul.f32 1.0, %v1793
  %v1795 = vrcp.pop %v1758
  %v1796 = vmul.f32 1.0, %v1795
  %v1797 = vrcp.pop %v1759
  %v1798 = vmul.f32 1.0, %v1797
  %v1799 = vrcp.pop %v1760
  %v1800 = vmul.f32 1.0, %v1799
  %v1801 = vrcp.pop %v1761
  %v1802 = vmul.f32 1.0, %v1801
  %v1803 = vrcp.pop %v1762
  %v1804 = vmul.f32 1.0, %v1803
  %v1805 = vrcp.pop %v1763
  %v1806 = vmul.f32 1.0, %v1805
  %v1807 = vrcp.pop %v1764
  %v1808 = vmul.f32 1.0, %v1807
  %v1809 = vrcp.pop %v1765
  %v1810 = vmul.f32 1.0, %v1809
  %v1811 = vrcp.pop %v1766
  %v1812 = vmul.f32 1.0, %v1811
  %v1813 = vrcp.pop %v1767
  %v1814 = vmul.f32 1.0, %v1813
  %v1815 = vrcp.pop %v1768
  %v1816 = vmul.f32 1.0, %v1815
  %v1817 = vrcp.pop %v1769
  %v1818 = vmul.f32 1.0, %v1817
  %v1819 = vrcp.pop %v1770
  %v1820 = vmul.f32 1.0, %v1819
  %v1821 = vrcp.pop %v1771
  %v1822 = vmul.f32 1.0, %v1821
  %v1823 = vrcp.pop %v1772
  %v1824 = vmul.f32 1.0, %v1823
  %v1825 = vrcp.pop %v1773
  %v1826 = vmul.f32 1.0, %v1825
  %v1827 = vrcp.pop %v1774
  %v1828 = vmul.f32 1.0, %v1827
  %v1829 = vrcp.pop %v1775
  %v1830 = vmul.f32 1.0, %v1829
  %v1831 = vrcp.pop %v1776
  %v1832 = vmul.f32 1.0, %v1831
  %v1833 = vrcp.pop %v1777
  %v1834 = vmul.f32 1.0, %v1833
  %v1835 = vrcp.pop %v1778
  %v1836 = vmul.f32 1.0, %v1835
  %v1837 = vrcp.pop %v1779
  %v1838 = vmul.f32 1.0, %v1837
  %v1839 = vrcp.pop %v1780
  %v1840 = vmul.f32 1.0, %v1839
  %v1841 = vrcp.pop %v1781
  %v1842 = vmul.f32 1.0, %v1841
  %v1843 = vrcp.pop %v1782
  %v1844 = vmul.f32 1.0, %v1843
  %v1845 = vrcp.pop %v1783
  %v1846 = vmul.f32 1.0, %v1845
  %v1847 = vrcp.pop %v1784
  %v1848 = vmul.f32 1.0, %v1847
  %v1849 = vld [vmem:[%s4] sm:$0xff]
  %v1850 = vld [vmem:[%s4 + $0x8] sm:$0xff]
  %v1851 = vld [vmem:[%s4 + $0x10] sm:$0xff]
  %v1852 = vld [vmem:[%s4 + $0x18] sm:$0xff]
  %v1853 = vld [vmem:[%s4 + $0x20] sm:$0xff]
  %v1854 = vld [vmem:[%s4 + $0x28] sm:$0xff]
  %v1855 = vld [vmem:[%s4 + $0x30] sm:$0xff]
  %v1856 = vld [vmem:[%s4 + $0x38] sm:$0xff]
  %v1857 = vld [vmem:[%s4 + $0x40] sm:$0xff]
  %v1858 = vld [vmem:[%s4 + $0x48] sm:$0xff]
  %v1859 = vld [vmem:[%s4 + $0x50] sm:$0xff]
  %v1860 = vld [vmem:[%s4 + $0x58] sm:$0xff]
  %v1861 = vld [vmem:[%s4 + $0x60] sm:$0xff]
  %v1862 = vld [vmem:[%s4 + $0x68] sm:$0xff]
  %v1863 = vld [vmem:[%s4 + $0x70] sm:$0xff]
  %v1864 = vld [vmem:[%s4 + $0x78] sm:$0xff]
  %v1865 = vld [vmem:[%s4 + $0x80] sm:$0xff]
  %v1866 = vld [vmem:[%s4 + $0x88] sm:$0xff]
  %v1867 = vld [vmem:[%s4 + $0x90] sm:$0xff]
  %v1868 = vld [vmem:[%s4 + $0x98] sm:$0xff]
  %v1869 = vld [vmem:[%s4 + $0xa0] sm:$0xff]
  %v1870 = vld [vmem:[%s4 + $0xa8] sm:$0xff]
  %v1871 = vld [vmem:[%s4 + $0xb0] sm:$0xff]
  %v1872 = vld [vmem:[%s4 + $0xb8] sm:$0xff]
  %v1873 = vld [vmem:[%s4 + $0xc0] sm:$0xff]
  %v1874 = vld [vmem:[%s4 + $0xc8] sm:$0xff]
  %v1875 = vld [vmem:[%s4 + $0xd0] sm:$0xff]
  %v1876 = vld [vmem:[%s4 + $0xd8] sm:$0xff]
  %v1877 = vld [vmem:[%s4 + $0xe0] sm:$0xff]
  %v1878 = vld [vmem:[%s4 + $0xe8] sm:$0xff]
  %v1879 = vld [vmem:[%s4 + $0xf0] sm:$0xff]
  %v1880 = vld [vmem:[%s4 + $0xf8] sm:$0xff]
  %1882 = vset.pattern.permute.xlu0 0
  %1883 = vperm.xlu0 %1882, %v1849
  %v1884 = vpop.permute.xlu0 %1883
  %1887 = vset.pattern.permute.xlu0 0
  %1888 = vperm.xlu0 %1887, %v1850
  %v1889 = vpop.permute.xlu0 %1888
  %1892 = vset.pattern.permute.xlu0 0
  %1893 = vperm.xlu0 %1892, %v1851
  %v1894 = vpop.permute.xlu0 %1893
  %1897 = vset.pattern.permute.xlu0 0
  %1898 = vperm.xlu0 %1897, %v1852
  %v1899 = vpop.permute.xlu0 %1898
  %1902 = vset.pattern.permute.xlu0 0
  %1903 = vperm.xlu0 %1902, %v1853
  %v1904 = vpop.permute.xlu0 %1903
  %1907 = vset.pattern.permute.xlu0 0
  %1908 = vperm.xlu0 %1907, %v1854
  %v1909 = vpop.permute.xlu0 %1908
  %1912 = vset.pattern.permute.xlu0 0
  %1913 = vperm.xlu0 %1912, %v1855
  %v1914 = vpop.permute.xlu0 %1913
  %1917 = vset.pattern.permute.xlu0 0
  %1918 = vperm.xlu0 %1917, %v1856
  %v1919 = vpop.permute.xlu0 %1918
  %1922 = vset.pattern.permute.xlu0 0
  %1923 = vperm.xlu0 %1922, %v1857
  %v1924 = vpop.permute.xlu0 %1923
  %1927 = vset.pattern.permute.xlu0 0
  %1928 = vperm.xlu0 %1927, %v1858
  %v1929 = vpop.permute.xlu0 %1928
  %1932 = vset.pattern.permute.xlu0 0
  %1933 = vperm.xlu0 %1932, %v1859
  %v1934 = vpop.permute.xlu0 %1933
  %1937 = vset.pattern.permute.xlu0 0
  %1938 = vperm.xlu0 %1937, %v1860
  %v1939 = vpop.permute.xlu0 %1938
  %1942 = vset.pattern.permute.xlu0 0
  %1943 = vperm.xlu0 %1942, %v1861
  %v1944 = vpop.permute.xlu0 %1943
  %1947 = vset.pattern.permute.xlu0 0
  %1948 = vperm.xlu0 %1947, %v1862
  %v1949 = vpop.permute.xlu0 %1948
  %1952 = vset.pattern.permute.xlu0 0
  %1953 = vperm.xlu0 %1952, %v1863
  %v1954 = vpop.permute.xlu0 %1953
  %1957 = vset.pattern.permute.xlu0 0
  %1958 = vperm.xlu0 %1957, %v1864
  %v1959 = vpop.permute.xlu0 %1958
  %1962 = vset.pattern.permute.xlu0 0
  %1963 = vperm.xlu0 %1962, %v1865
  %v1964 = vpop.permute.xlu0 %1963
  %1967 = vset.pattern.permute.xlu0 0
  %1968 = vperm.xlu0 %1967, %v1866
  %v1969 = vpop.permute.xlu0 %1968
  %1972 = vset.pattern.permute.xlu0 0
  %1973 = vperm.xlu0 %1972, %v1867
  %v1974 = vpop.permute.xlu0 %1973
  %1977 = vset.pattern.permute.xlu0 0
  %1978 = vperm.xlu0 %1977, %v1868
  %v1979 = vpop.permute.xlu0 %1978
  %1982 = vset.pattern.permute.xlu0 0
  %1983 = vperm.xlu0 %1982, %v1869
  %v1984 = vpop.permute.xlu0 %1983
  %1987 = vset.pattern.permute.xlu0 0
  %1988 = vperm.xlu0 %1987, %v1870
  %v1989 = vpop.permute.xlu0 %1988
  %1992 = vset.pattern.permute.xlu0 0
  %1993 = vperm.xlu0 %1992, %v1871
  %v1994 = vpop.permute.xlu0 %1993
  %1997 = vset.pattern.permute.xlu0 0
  %1998 = vperm.xlu0 %1997, %v1872
  %v1999 = vpop.permute.xlu0 %1998
  %2002 = vset.pattern.permute.xlu0 0
  %2003 = vperm.xlu0 %2002, %v1873
  %v2004 = vpop.permute.xlu0 %2003
  %2007 = vset.pattern.permute.xlu0 0
  %2008 = vperm.xlu0 %2007, %v1874
  %v2009 = vpop.permute.xlu0 %2008
  %2012 = vset.pattern.permute.xlu0 0
  %2013 = vperm.xlu0 %2012, %v1875
  %v2014 = vpop.permute.xlu0 %2013
  %2017 = vset.pattern.permute.xlu0 0
  %2018 = vperm.xlu0 %2017, %v1876
  %v2019 = vpop.permute.xlu0 %2018
  %2022 = vset.pattern.permute.xlu0 0
  %2023 = vperm.xlu0 %2022, %v1877
  %v2024 = vpop.permute.xlu0 %2023
  %2027 = vset.pattern.permute.xlu0 0
  %2028 = vperm.xlu0 %2027, %v1878
  %v2029 = vpop.permute.xlu0 %2028
  %2032 = vset.pattern.permute.xlu0 0
  %2033 = vperm.xlu0 %2032, %v1879
  %v2034 = vpop.permute.xlu0 %2033
  %2037 = vset.pattern.permute.xlu0 0
  %2038 = vperm.xlu0 %2037, %v1880
  %v2039 = vpop.permute.xlu0 %2038
  %v2041 = vmul.f32 %v1786, %v1884
  %v2042 = vmul.f32 %v1788, %v1889
  %v2043 = vmul.f32 %v1790, %v1894
  %v2044 = vmul.f32 %v1792, %v1899
  %v2045 = vmul.f32 %v1794, %v1904
  %v2046 = vmul.f32 %v1796, %v1909
  %v2047 = vmul.f32 %v1798, %v1914
  %v2048 = vmul.f32 %v1800, %v1919
  %v2049 = vmul.f32 %v1802, %v1924
  %v2050 = vmul.f32 %v1804, %v1929
  %v2051 = vmul.f32 %v1806, %v1934
  %v2052 = vmul.f32 %v1808, %v1939
  %v2053 = vmul.f32 %v1810, %v1944
  %v2054 = vmul.f32 %v1812, %v1949
  %v2055 = vmul.f32 %v1814, %v1954
  %v2056 = vmul.f32 %v1816, %v1959
  %v2057 = vmul.f32 %v1818, %v1964
  %v2058 = vmul.f32 %v1820, %v1969
  %v2059 = vmul.f32 %v1822, %v1974
  %v2060 = vmul.f32 %v1824, %v1979
  %v2061 = vmul.f32 %v1826, %v1984
  %v2062 = vmul.f32 %v1828, %v1989
  %v2063 = vmul.f32 %v1830, %v1994
  %v2064 = vmul.f32 %v1832, %v1999
  %v2065 = vmul.f32 %v1834, %v2004
  %v2066 = vmul.f32 %v1836, %v2009
  %v2067 = vmul.f32 %v1838, %v2014
  %v2068 = vmul.f32 %v1840, %v2019
  %v2069 = vmul.f32 %v1842, %v2024
  %v2070 = vmul.f32 %v1844, %v2029
  %v2071 = vmul.f32 %v1846, %v2034
  %v2072 = vmul.f32 %v1848, %v2039
  %v2073 = vld [vmem:[%s7] sm:$0xff]
  %v2075 = vcombine.high %v2073, %v2073
  %v2077 = vunpack.c.l.s4 1983009808
  %v2078 = vunpack.c.0.s8 %v2077
  %v2079 = vlaneseq
  %v2080 = vshrl.u32 %v2079, 7
  %v2081 = vsub.s32 %v2078, %v2080
  %v2082 = vrot.slane %v2073, %v2081
  %v2084 = vunpack.c.l.s4 1983009808
  %v2085 = vunpack.c.0.s8 %v2084
  %v2086 = vlaneseq
  %v2087 = vshrl.u32 %v2086, 7
  %v2088 = vsub.s32 %v2085, %v2087
  %v2089 = vrot.slane %v2075, %v2088
  %v2090 = vcombine.high %v2082, %v2082
  %v2091 = vcombine.high %v2089, %v2089
  %vm2092 = vcmask 15360
  %v2094 = vsel %vm2092, %v2041, 0
  %v2097 = vsel %vm2092, %v2042, 0
  %v2100 = vsel %vm2092, %v2043, 0
  %v2103 = vsel %vm2092, %v2044, 0
  %v2106 = vsel %vm2092, %v2045, 0
  %v2109 = vsel %vm2092, %v2046, 0
  %v2112 = vsel %vm2092, %v2047, 0
  %v2115 = vsel %vm2092, %v2048, 0
  %v2118 = vsel %vm2092, %v2049, 0
  %v2121 = vsel %vm2092, %v2050, 0
  %v2124 = vsel %vm2092, %v2051, 0
  %v2127 = vsel %vm2092, %v2052, 0
  %v2130 = vsel %vm2092, %v2053, 0
  %v2133 = vsel %vm2092, %v2054, 0
  %v2136 = vsel %vm2092, %v2055, 0
  %v2139 = vsel %vm2092, %v2056, 0
  %v2142 = vsel %vm2092, %v2057, 0
  %v2145 = vsel %vm2092, %v2058, 0
  %v2148 = vsel %vm2092, %v2059, 0
  %v2151 = vsel %vm2092, %v2060, 0
  %v2154 = vsel %vm2092, %v2061, 0
  %v2157 = vsel %vm2092, %v2062, 0
  %v2160 = vsel %vm2092, %v2063, 0
  %v2163 = vsel %vm2092, %v2064, 0
  %v2166 = vsel %vm2092, %v2065, 0
  %v2169 = vsel %vm2092, %v2066, 0
  %v2172 = vsel %vm2092, %v2067, 0
  %v2175 = vsel %vm2092, %v2068, 0
  %v2178 = vsel %vm2092, %v2069, 0
  %v2181 = vsel %vm2092, %v2070, 0
  %v2184 = vsel %vm2092, %v2071, 0
  %v2187 = vsel %vm2092, %v2072, 0
  %vm2189 = vcmask 1041408
  %v2190 = vsel %vm2189, %v2082, 0
  %v2192 = vsel %vm2189, %v2090, 0
  %v2194 = vsel %vm2189, %v2089, 0
  %v2196 = vsel %vm2189, %v2091, 0
  %2198 = vmatprep.subr.mxu0 0.0
  %2199 = vmatpush1.msra.mxu0 0.0
  %2200 = vmatprep.subr.mxu0 0.0
  %2201 = vmatpush1.msra.mxu0 0.0
  %2202 = vmatprep.subr.mxu0 0.0
  %2203 = vmatpush1.msra.mxu0 0.0
  %2204 = vmatprep.subr.mxu0 0.0
  %2205 = vmatpush1.msra.mxu0 0.0
  %2206 = vmatprep.subr.mxu0 0.0
  %2207 = vmatpush1.msra.mxu0 0.0
  %2208 = vmatprep.subr.mxu0 0.0
  %2209 = vmatpush1.msra.mxu0 0.0
  %2210 = vmatprep.subr.mxu0 0.0
  %2211 = vmatpush1.msra.mxu0 0.0
  %2212 = vmatprep.subr.mxu0 0.0
  %2213 = vmatpush1.msra.mxu0 0.0
  %2214 = vmatprep.subr.mxu0 0.0
  %2215 = vmatpush1.msra.mxu0 0.0
  %2216 = vmatprep.subr.mxu0 0.0
  %2217 = vmatpush1.msra.mxu0 0.0
  %2218 = vmatprep.subr.mxu0 0.0
  %2219 = vmatpush1.msra.mxu0 0.0
  %2220 = vmatprep.subr.mxu0 0.0
  %2221 = vmatpush1.msra.mxu0 0.0
  %2222 = vmatprep.subr.mxu0 0.0
  %2223 = vmatpush1.msra.mxu0 0.0
  %2224 = vmatprep.subr.mxu0 0.0
  %2225 = vmatpush1.msra.mxu0 0.0
  %2226 = vmatprep.subr.mxu0 0.0
  %2227 = vmatpush1.msra.mxu0 0.0
  %2228 = vmatprep.subr.mxu0 %v2192
  %2229 = vmatpush1.msra.mxu0 %v2190
  %2230 = vmatprep.subr.mxu0 0.0
  %2231 = vmatpush2.msra.mxu0 0.0
  %2232 = vmatprep.subr.mxu0 0.0
  %2233 = vmatpush2.msra.mxu0 0.0
  %2234 = vmatprep.subr.mxu0 0.0
  %2235 = vmatpush2.msra.mxu0 0.0
  %2236 = vmatprep.subr.mxu0 0.0
  %2237 = vmatpush2.msra.mxu0 0.0
  %2238 = vmatprep.subr.mxu0 0.0
  %2239 = vmatpush2.msra.mxu0 0.0
  %2240 = vmatprep.subr.mxu0 0.0
  %2241 = vmatpush2.msra.mxu0 0.0
  %2242 = vmatprep.subr.mxu0 0.0
  %2243 = vmatpush2.msra.mxu0 0.0
  %2244 = vmatprep.subr.mxu0 0.0
  %2245 = vmatpush2.msra.mxu0 0.0
  %2246 = vmatprep.subr.mxu0 0.0
  %2247 = vmatpush2.msra.mxu0 0.0
  %2248 = vmatprep.subr.mxu0 0.0
  %2249 = vmatpush2.msra.mxu0 0.0
  %2250 = vmatprep.subr.mxu0 0.0
  %2251 = vmatpush2.msra.mxu0 0.0
  %2252 = vmatprep.subr.mxu0 0.0
  %2253 = vmatpush2.msra.mxu0 0.0
  %2254 = vmatprep.subr.mxu0 0.0
  %2255 = vmatpush2.msra.mxu0 0.0
  %2256 = vmatprep.subr.mxu0 0.0
  %2257 = vmatpush2.msra.mxu0 0.0
  %2258 = vmatprep.subr.mxu0 0.0
  %2259 = vmatpush2.msra.mxu0 0.0
  %2260 = vmatprep.subr.mxu0 0.0
  %2261 = vmatpush2.msra.mxu0 0.0
  %2262 = vmatprep.mubr.f32.mxu0 0.0
  %2263 = vmatmul.mubr.f32.gmra.mxu0 %v2094
  %v2264 = vpop.f32.mrf.mxu0
  %v2265 = vadd.f32 0.0, %v2264
  %v2266 = vpop.f32.mrf.mxu0
  %v2267 = vadd.f32 0.0, %v2266
  %2268 = vmatprep.mubr.f32.mxu0 0.0
  %2269 = vmatmul.mubr.f32.gmra.mxu0 %v2097
  %v2270 = vpop.f32.mrf.mxu0
  %v2271 = vadd.f32 0.0, %v2270
  %v2272 = vpop.f32.mrf.mxu0
  %v2273 = vadd.f32 0.0, %v2272
  %2274 = vmatprep.mubr.f32.mxu0 0.0
  %2275 = vmatmul.mubr.f32.gmra.mxu0 %v2100
  %v2276 = vpop.f32.mrf.mxu0
  %v2277 = vadd.f32 0.0, %v2276
  %v2278 = vpop.f32.mrf.mxu0
  %v2279 = vadd.f32 0.0, %v2278
  %2280 = vmatprep.mubr.f32.mxu0 0.0
  %2281 = vmatmul.mubr.f32.gmra.mxu0 %v2103
  %v2282 = vpop.f32.mrf.mxu0
  %v2283 = vadd.f32 0.0, %v2282
  %v2284 = vpop.f32.mrf.mxu0
  %v2285 = vadd.f32 0.0, %v2284
  %2286 = vmatprep.mubr.f32.mxu0 0.0
  %2287 = vmatmul.mubr.f32.gmra.mxu0 %v2106
  %v2288 = vpop.f32.mrf.mxu0
  %v2289 = vadd.f32 0.0, %v2288
  %v2290 = vpop.f32.mrf.mxu0
  %v2291 = vadd.f32 0.0, %v2290
  %2292 = vmatprep.mubr.f32.mxu0 0.0
  %2293 = vmatmul.mubr.f32.gmra.mxu0 %v2109
  %v2294 = vpop.f32.mrf.mxu0
  %v2295 = vadd.f32 0.0, %v2294
  %v2296 = vpop.f32.mrf.mxu0
  %v2297 = vadd.f32 0.0, %v2296
  %2298 = vmatprep.mubr.f32.mxu0 0.0
  %2299 = vmatmul.mubr.f32.gmra.mxu0 %v2112
  %v2300 = vpop.f32.mrf.mxu0
  %v2301 = vadd.f32 0.0, %v2300
  %v2302 = vpop.f32.mrf.mxu0
  %v2303 = vadd.f32 0.0, %v2302
  %2304 = vmatprep.mubr.f32.mxu0 0.0
  %2305 = vmatmul.mubr.f32.gmra.mxu0 %v2115
  %v2306 = vpop.f32.mrf.mxu0
  %v2307 = vadd.f32 0.0, %v2306
  %v2308 = vpop.f32.mrf.mxu0
  %v2309 = vadd.f32 0.0, %v2308
  %2310 = vmatprep.mubr.f32.mxu0 0.0
  %2311 = vmatmul.mubr.f32.gmra.mxu0 %v2118
  %v2312 = vpop.f32.mrf.mxu0
  %v2313 = vadd.f32 0.0, %v2312
  %v2314 = vpop.f32.mrf.mxu0
  %v2315 = vadd.f32 0.0, %v2314
  %2316 = vmatprep.mubr.f32.mxu0 0.0
  %2317 = vmatmul.mubr.f32.gmra.mxu0 %v2121
  %v2318 = vpop.f32.mrf.mxu0
  %v2319 = vadd.f32 0.0, %v2318
  %v2320 = vpop.f32.mrf.mxu0
  %v2321 = vadd.f32 0.0, %v2320
  %2322 = vmatprep.mubr.f32.mxu0 0.0
  %2323 = vmatmul.mubr.f32.gmra.mxu0 %v2124
  %v2324 = vpop.f32.mrf.mxu0
  %v2325 = vadd.f32 0.0, %v2324
  %v2326 = vpop.f32.mrf.mxu0
  %v2327 = vadd.f32 0.0, %v2326
  %2328 = vmatprep.mubr.f32.mxu0 0.0
  %2329 = vmatmul.mubr.f32.gmra.mxu0 %v2127
  %v2330 = vpop.f32.mrf.mxu0
  %v2331 = vadd.f32 0.0, %v2330
  %v2332 = vpop.f32.mrf.mxu0
  %v2333 = vadd.f32 0.0, %v2332
  %2334 = vmatprep.mubr.f32.mxu0 0.0
  %2335 = vmatmul.mubr.f32.gmra.mxu0 %v2130
  %v2336 = vpop.f32.mrf.mxu0
  %v2337 = vadd.f32 0.0, %v2336
  %v2338 = vpop.f32.mrf.mxu0
  %v2339 = vadd.f32 0.0, %v2338
  %2340 = vmatprep.mubr.f32.mxu0 0.0
  %2341 = vmatmul.mubr.f32.gmra.mxu0 %v2133
  %v2342 = vpop.f32.mrf.mxu0
  %v2343 = vadd.f32 0.0, %v2342
  %v2344 = vpop.f32.mrf.mxu0
  %v2345 = vadd.f32 0.0, %v2344
  %2346 = vmatprep.mubr.f32.mxu0 0.0
  %2347 = vmatmul.mubr.f32.gmra.mxu0 %v2136
  %v2348 = vpop.f32.mrf.mxu0
  %v2349 = vadd.f32 0.0, %v2348
  %v2350 = vpop.f32.mrf.mxu0
  %v2351 = vadd.f32 0.0, %v2350
  %2352 = vmatprep.mubr.f32.mxu0 0.0
  %2353 = vmatmul.mubr.f32.gmra.mxu0 %v2139
  %v2354 = vpop.f32.mrf.mxu0
  %v2355 = vadd.f32 0.0, %v2354
  %v2356 = vpop.f32.mrf.mxu0
  %v2357 = vadd.f32 0.0, %v2356
  %2358 = vmatprep.mubr.f32.mxu0 0.0
  %2359 = vmatmul.mubr.f32.gmra.mxu0 %v2142
  %v2360 = vpop.f32.mrf.mxu0
  %v2361 = vadd.f32 0.0, %v2360
  %v2362 = vpop.f32.mrf.mxu0
  %v2363 = vadd.f32 0.0, %v2362
  %2364 = vmatprep.mubr.f32.mxu0 0.0
  %2365 = vmatmul.mubr.f32.gmra.mxu0 %v2145
  %v2366 = vpop.f32.mrf.mxu0
  %v2367 = vadd.f32 0.0, %v2366
  %v2368 = vpop.f32.mrf.mxu0
  %v2369 = vadd.f32 0.0, %v2368
  %2370 = vmatprep.mubr.f32.mxu0 0.0
  %2371 = vmatmul.mubr.f32.gmra.mxu0 %v2148
  %v2372 = vpop.f32.mrf.mxu0
  %v2373 = vadd.f32 0.0, %v2372
  %v2374 = vpop.f32.mrf.mxu0
  %v2375 = vadd.f32 0.0, %v2374
  %2376 = vmatprep.mubr.f32.mxu0 0.0
  %2377 = vmatmul.mubr.f32.gmra.mxu0 %v2151
  %v2378 = vpop.f32.mrf.mxu0
  %v2379 = vadd.f32 0.0, %v2378
  %v2380 = vpop.f32.mrf.mxu0
  %v2381 = vadd.f32 0.0, %v2380
  %2382 = vmatprep.mubr.f32.mxu0 0.0
  %2383 = vmatmul.mubr.f32.gmra.mxu0 %v2154
  %v2384 = vpop.f32.mrf.mxu0
  %v2385 = vadd.f32 0.0, %v2384
  %v2386 = vpop.f32.mrf.mxu0
  %v2387 = vadd.f32 0.0, %v2386
  %2388 = vmatprep.mubr.f32.mxu0 0.0
  %2389 = vmatmul.mubr.f32.gmra.mxu0 %v2157
  %v2390 = vpop.f32.mrf.mxu0
  %v2391 = vadd.f32 0.0, %v2390
  %v2392 = vpop.f32.mrf.mxu0
  %v2393 = vadd.f32 0.0, %v2392
  %2394 = vmatprep.mubr.f32.mxu0 0.0
  %2395 = vmatmul.mubr.f32.gmra.mxu0 %v2160
  %v2396 = vpop.f32.mrf.mxu0
  %v2397 = vadd.f32 0.0, %v2396
  %v2398 = vpop.f32.mrf.mxu0
  %v2399 = vadd.f32 0.0, %v2398
  %2400 = vmatprep.mubr.f32.mxu0 0.0
  %2401 = vmatmul.mubr.f32.gmra.mxu0 %v2163
  %v2402 = vpop.f32.mrf.mxu0
  %v2403 = vadd.f32 0.0, %v2402
  %v2404 = vpop.f32.mrf.mxu0
  %v2405 = vadd.f32 0.0, %v2404
  %2406 = vmatprep.mubr.f32.mxu0 0.0
  %2407 = vmatmul.mubr.f32.gmra.mxu0 %v2166
  %v2408 = vpop.f32.mrf.mxu0
  %v2409 = vadd.f32 0.0, %v2408
  %v2410 = vpop.f32.mrf.mxu0
  %v2411 = vadd.f32 0.0, %v2410
  %2412 = vmatprep.mubr.f32.mxu0 0.0
  %2413 = vmatmul.mubr.f32.gmra.mxu0 %v2169
  %v2414 = vpop.f32.mrf.mxu0
  %v2415 = vadd.f32 0.0, %v2414
  %v2416 = vpop.f32.mrf.mxu0
  %v2417 = vadd.f32 0.0, %v2416
  %2418 = vmatprep.mubr.f32.mxu0 0.0
  %2419 = vmatmul.mubr.f32.gmra.mxu0 %v2172
  %v2420 = vpop.f32.mrf.mxu0
  %v2421 = vadd.f32 0.0, %v2420
  %v2422 = vpop.f32.mrf.mxu0
  %v2423 = vadd.f32 0.0, %v2422
  %2424 = vmatprep.mubr.f32.mxu0 0.0
  %2425 = vmatmul.mubr.f32.gmra.mxu0 %v2175
  %v2426 = vpop.f32.mrf.mxu0
  %v2427 = vadd.f32 0.0, %v2426
  %v2428 = vpop.f32.mrf.mxu0
  %v2429 = vadd.f32 0.0, %v2428
  %2430 = vmatprep.mubr.f32.mxu0 0.0
  %2431 = vmatmul.mubr.f32.gmra.mxu0 %v2178
  %v2432 = vpop.f32.mrf.mxu0
  %v2433 = vadd.f32 0.0, %v2432
  %v2434 = vpop.f32.mrf.mxu0
  %v2435 = vadd.f32 0.0, %v2434
  %2436 = vmatprep.mubr.f32.mxu0 0.0
  %2437 = vmatmul.mubr.f32.gmra.mxu0 %v2181
  %v2438 = vpop.f32.mrf.mxu0
  %v2439 = vadd.f32 0.0, %v2438
  %v2440 = vpop.f32.mrf.mxu0
  %v2441 = vadd.f32 0.0, %v2440
  %2442 = vmatprep.mubr.f32.mxu0 0.0
  %2443 = vmatmul.mubr.f32.gmra.mxu0 %v2184
  %v2444 = vpop.f32.mrf.mxu0
  %v2445 = vadd.f32 0.0, %v2444
  %v2446 = vpop.f32.mrf.mxu0
  %v2447 = vadd.f32 0.0, %v2446
  %2448 = vmatprep.mubr.f32.mxu0 0.0
  %2449 = vmatmul.mubr.f32.gmra.mxu0 %v2187
  %v2450 = vpop.f32.mrf.mxu0
  %v2451 = vadd.f32 0.0, %v2450
  %v2452 = vpop.f32.mrf.mxu0
  %v2453 = vadd.f32 0.0, %v2452
  %2454 = vdwg.mxu0
  %2455 = vmatprep.subr.mxu0 0.0
  %2456 = vmatpush1.msra.mxu0 0.0
  %2457 = vmatprep.subr.mxu0 0.0
  %2458 = vmatpush1.msra.mxu0 0.0
  %2459 = vmatprep.subr.mxu0 0.0
  %2460 = vmatpush1.msra.mxu0 0.0
  %2461 = vmatprep.subr.mxu0 0.0
  %2462 = vmatpush1.msra.mxu0 0.0
  %2463 = vmatprep.subr.mxu0 0.0
  %2464 = vmatpush1.msra.mxu0 0.0
  %2465 = vmatprep.subr.mxu0 0.0
  %2466 = vmatpush1.msra.mxu0 0.0
  %2467 = vmatprep.subr.mxu0 0.0
  %2468 = vmatpush1.msra.mxu0 0.0
  %2469 = vmatprep.subr.mxu0 0.0
  %2470 = vmatpush1.msra.mxu0 0.0
  %2471 = vmatprep.subr.mxu0 0.0
  %2472 = vmatpush1.msra.mxu0 0.0
  %2473 = vmatprep.subr.mxu0 0.0
  %2474 = vmatpush1.msra.mxu0 0.0
  %2475 = vmatprep.subr.mxu0 0.0
  %2476 = vmatpush1.msra.mxu0 0.0
  %2477 = vmatprep.subr.mxu0 0.0
  %2478 = vmatpush1.msra.mxu0 0.0
  %2479 = vmatprep.subr.mxu0 0.0
  %2480 = vmatpush1.msra.mxu0 0.0
  %2481 = vmatprep.subr.mxu0 0.0
  %2482 = vmatpush1.msra.mxu0 0.0
  %2483 = vmatprep.subr.mxu0 0.0
  %2484 = vmatpush1.msra.mxu0 0.0
  %2485 = vmatprep.subr.mxu0 %v2196
  %2486 = vmatpush1.msra.mxu0 %v2194
  %2487 = vmatprep.subr.mxu0 0.0
  %2488 = vmatpush2.msra.mxu0 0.0
  %2489 = vmatprep.subr.mxu0 0.0
  %2490 = vmatpush2.msra.mxu0 0.0
  %2491 = vmatprep.subr.mxu0 0.0
  %2492 = vmatpush2.msra.mxu0 0.0
  %2493 = vmatprep.subr.mxu0 0.0
  %2494 = vmatpush2.msra.mxu0 0.0
  %2495 = vmatprep.subr.mxu0 0.0
  %2496 = vmatpush2.msra.mxu0 0.0
  %2497 = vmatprep.subr.mxu0 0.0
  %2498 = vmatpush2.msra.mxu0 0.0
  %2499 = vmatprep.subr.mxu0 0.0
  %2500 = vmatpush2.msra.mxu0 0.0
  %2501 = vmatprep.subr.mxu0 0.0
  %2502 = vmatpush2.msra.mxu0 0.0
  %2503 = vmatprep.subr.mxu0 0.0
  %2504 = vmatpush2.msra.mxu0 0.0
  %2505 = vmatprep.subr.mxu0 0.0
  %2506 = vmatpush2.msra.mxu0 0.0
  %2507 = vmatprep.subr.mxu0 0.0
  %2508 = vmatpush2.msra.mxu0 0.0
  %2509 = vmatprep.subr.mxu0 0.0
  %2510 = vmatpush2.msra.mxu0 0.0
  %2511 = vmatprep.subr.mxu0 0.0
  %2512 = vmatpush2.msra.mxu0 0.0
  %2513 = vmatprep.subr.mxu0 0.0
  %2514 = vmatpush2.msra.mxu0 0.0
  %2515 = vmatprep.subr.mxu0 0.0
  %2516 = vmatpush2.msra.mxu0 0.0
  %2517 = vmatprep.subr.mxu0 0.0
  %2518 = vmatpush2.msra.mxu0 0.0
  %2519 = vmatprep.mubr.f32.mxu0 0.0
  %2520 = vmatmul.mubr.f32.gmra.mxu0 %v2094
  %v2521 = vpop.f32.mrf.mxu0
  %v2522 = vadd.f32 0.0, %v2521
  %v2523 = vpop.f32.mrf.mxu0
  %v2524 = vadd.f32 0.0, %v2523
  %2525 = vmatprep.mubr.f32.mxu0 0.0
  %2526 = vmatmul.mubr.f32.gmra.mxu0 %v2097
  %v2527 = vpop.f32.mrf.mxu0
  %v2528 = vadd.f32 0.0, %v2527
  %v2529 = vpop.f32.mrf.mxu0
  %v2530 = vadd.f32 0.0, %v2529
  %2531 = vmatprep.mubr.f32.mxu0 0.0
  %2532 = vmatmul.mubr.f32.gmra.mxu0 %v2100
  %v2533 = vpop.f32.mrf.mxu0
  %v2534 = vadd.f32 0.0, %v2533
  %v2535 = vpop.f32.mrf.mxu0
  %v2536 = vadd.f32 0.0, %v2535
  %2537 = vmatprep.mubr.f32.mxu0 0.0
  %2538 = vmatmul.mubr.f32.gmra.mxu0 %v2103
  %v2539 = vpop.f32.mrf.mxu0
  %v2540 = vadd.f32 0.0, %v2539
  %v2541 = vpop.f32.mrf.mxu0
  %v2542 = vadd.f32 0.0, %v2541
  %2543 = vmatprep.mubr.f32.mxu0 0.0
  %2544 = vmatmul.mubr.f32.gmra.mxu0 %v2106
  %v2545 = vpop.f32.mrf.mxu0
  %v2546 = vadd.f32 0.0, %v2545
  %v2547 = vpop.f32.mrf.mxu0
  %v2548 = vadd.f32 0.0, %v2547
  %2549 = vmatprep.mubr.f32.mxu0 0.0
  %2550 = vmatmul.mubr.f32.gmra.mxu0 %v2109
  %v2551 = vpop.f32.mrf.mxu0
  %v2552 = vadd.f32 0.0, %v2551
  %v2553 = vpop.f32.mrf.mxu0
  %v2554 = vadd.f32 0.0, %v2553
  %2555 = vmatprep.mubr.f32.mxu0 0.0
  %2556 = vmatmul.mubr.f32.gmra.mxu0 %v2112
  %v2557 = vpop.f32.mrf.mxu0
  %v2558 = vadd.f32 0.0, %v2557
  %v2559 = vpop.f32.mrf.mxu0
  %v2560 = vadd.f32 0.0, %v2559
  %2561 = vmatprep.mubr.f32.mxu0 0.0
  %2562 = vmatmul.mubr.f32.gmra.mxu0 %v2115
  %v2563 = vpop.f32.mrf.mxu0
  %v2564 = vadd.f32 0.0, %v2563
  %v2565 = vpop.f32.mrf.mxu0
  %v2566 = vadd.f32 0.0, %v2565
  %2567 = vmatprep.mubr.f32.mxu0 0.0
  %2568 = vmatmul.mubr.f32.gmra.mxu0 %v2118
  %v2569 = vpop.f32.mrf.mxu0
  %v2570 = vadd.f32 0.0, %v2569
  %v2571 = vpop.f32.mrf.mxu0
  %v2572 = vadd.f32 0.0, %v2571
  %2573 = vmatprep.mubr.f32.mxu0 0.0
  %2574 = vmatmul.mubr.f32.gmra.mxu0 %v2121
  %v2575 = vpop.f32.mrf.mxu0
  %v2576 = vadd.f32 0.0, %v2575
  %v2577 = vpop.f32.mrf.mxu0
  %v2578 = vadd.f32 0.0, %v2577
  %2579 = vmatprep.mubr.f32.mxu0 0.0
  %2580 = vmatmul.mubr.f32.gmra.mxu0 %v2124
  %v2581 = vpop.f32.mrf.mxu0
  %v2582 = vadd.f32 0.0, %v2581
  %v2583 = vpop.f32.mrf.mxu0
  %v2584 = vadd.f32 0.0, %v2583
  %2585 = vmatprep.mubr.f32.mxu0 0.0
  %2586 = vmatmul.mubr.f32.gmra.mxu0 %v2127
  %v2587 = vpop.f32.mrf.mxu0
  %v2588 = vadd.f32 0.0, %v2587
  %v2589 = vpop.f32.mrf.mxu0
  %v2590 = vadd.f32 0.0, %v2589
  %2591 = vmatprep.mubr.f32.mxu0 0.0
  %2592 = vmatmul.mubr.f32.gmra.mxu0 %v2130
  %v2593 = vpop.f32.mrf.mxu0
  %v2594 = vadd.f32 0.0, %v2593
  %v2595 = vpop.f32.mrf.mxu0
  %v2596 = vadd.f32 0.0, %v2595
  %2597 = vmatprep.mubr.f32.mxu0 0.0
  %2598 = vmatmul.mubr.f32.gmra.mxu0 %v2133
  %v2599 = vpop.f32.mrf.mxu0
  %v2600 = vadd.f32 0.0, %v2599
  %v2601 = vpop.f32.mrf.mxu0
  %v2602 = vadd.f32 0.0, %v2601
  %2603 = vmatprep.mubr.f32.mxu0 0.0
  %2604 = vmatmul.mubr.f32.gmra.mxu0 %v2136
  %v2605 = vpop.f32.mrf.mxu0
  %v2606 = vadd.f32 0.0, %v2605
  %v2607 = vpop.f32.mrf.mxu0
  %v2608 = vadd.f32 0.0, %v2607
  %2609 = vmatprep.mubr.f32.mxu0 0.0
  %2610 = vmatmul.mubr.f32.gmra.mxu0 %v2139
  %v2611 = vpop.f32.mrf.mxu0
  %v2612 = vadd.f32 0.0, %v2611
  %v2613 = vpop.f32.mrf.mxu0
  %v2614 = vadd.f32 0.0, %v2613
  %2615 = vmatprep.mubr.f32.mxu0 0.0
  %2616 = vmatmul.mubr.f32.gmra.mxu0 %v2142
  %v2617 = vpop.f32.mrf.mxu0
  %v2618 = vadd.f32 0.0, %v2617
  %v2619 = vpop.f32.mrf.mxu0
  %v2620 = vadd.f32 0.0, %v2619
  %2621 = vmatprep.mubr.f32.mxu0 0.0
  %2622 = vmatmul.mubr.f32.gmra.mxu0 %v2145
  %v2623 = vpop.f32.mrf.mxu0
  %v2624 = vadd.f32 0.0, %v2623
  %v2625 = vpop.f32.mrf.mxu0
  %v2626 = vadd.f32 0.0, %v2625
  %2627 = vmatprep.mubr.f32.mxu0 0.0
  %2628 = vmatmul.mubr.f32.gmra.mxu0 %v2148
  %v2629 = vpop.f32.mrf.mxu0
  %v2630 = vadd.f32 0.0, %v2629
  %v2631 = vpop.f32.mrf.mxu0
  %v2632 = vadd.f32 0.0, %v2631
  %2633 = vmatprep.mubr.f32.mxu0 0.0
  %2634 = vmatmul.mubr.f32.gmra.mxu0 %v2151
  %v2635 = vpop.f32.mrf.mxu0
  %v2636 = vadd.f32 0.0, %v2635
  %v2637 = vpop.f32.mrf.mxu0
  %v2638 = vadd.f32 0.0, %v2637
  %2639 = vmatprep.mubr.f32.mxu0 0.0
  %2640 = vmatmul.mubr.f32.gmra.mxu0 %v2154
  %v2641 = vpop.f32.mrf.mxu0
  %v2642 = vadd.f32 0.0, %v2641
  %v2643 = vpop.f32.mrf.mxu0
  %v2644 = vadd.f32 0.0, %v2643
  %2645 = vmatprep.mubr.f32.mxu0 0.0
  %2646 = vmatmul.mubr.f32.gmra.mxu0 %v2157
  %v2647 = vpop.f32.mrf.mxu0
  %v2648 = vadd.f32 0.0, %v2647
  %v2649 = vpop.f32.mrf.mxu0
  %v2650 = vadd.f32 0.0, %v2649
  %2651 = vmatprep.mubr.f32.mxu0 0.0
  %2652 = vmatmul.mubr.f32.gmra.mxu0 %v2160
  %v2653 = vpop.f32.mrf.mxu0
  %v2654 = vadd.f32 0.0, %v2653
  %v2655 = vpop.f32.mrf.mxu0
  %v2656 = vadd.f32 0.0, %v2655
  %2657 = vmatprep.mubr.f32.mxu0 0.0
  %2658 = vmatmul.mubr.f32.gmra.mxu0 %v2163
  %v2659 = vpop.f32.mrf.mxu0
  %v2660 = vadd.f32 0.0, %v2659
  %v2661 = vpop.f32.mrf.mxu0
  %v2662 = vadd.f32 0.0, %v2661
  %2663 = vmatprep.mubr.f32.mxu0 0.0
  %2664 = vmatmul.mubr.f32.gmra.mxu0 %v2166
  %v2665 = vpop.f32.mrf.mxu0
  %v2666 = vadd.f32 0.0, %v2665
  %v2667 = vpop.f32.mrf.mxu0
  %v2668 = vadd.f32 0.0, %v2667
  %2669 = vmatprep.mubr.f32.mxu0 0.0
  %2670 = vmatmul.mubr.f32.gmra.mxu0 %v2169
  %v2671 = vpop.f32.mrf.mxu0
  %v2672 = vadd.f32 0.0, %v2671
  %v2673 = vpop.f32.mrf.mxu0
  %v2674 = vadd.f32 0.0, %v2673
  %2675 = vmatprep.mubr.f32.mxu0 0.0
  %2676 = vmatmul.mubr.f32.gmra.mxu0 %v2172
  %v2677 = vpop.f32.mrf.mxu0
  %v2678 = vadd.f32 0.0, %v2677
  %v2679 = vpop.f32.mrf.mxu0
  %v2680 = vadd.f32 0.0, %v2679
  %2681 = vmatprep.mubr.f32.mxu0 0.0
  %2682 = vmatmul.mubr.f32.gmra.mxu0 %v2175
  %v2683 = vpop.f32.mrf.mxu0
  %v2684 = vadd.f32 0.0, %v2683
  %v2685 = vpop.f32.mrf.mxu0
  %v2686 = vadd.f32 0.0, %v2685
  %2687 = vmatprep.mubr.f32.mxu0 0.0
  %2688 = vmatmul.mubr.f32.gmra.mxu0 %v2178
  %v2689 = vpop.f32.mrf.mxu0
  %v2690 = vadd.f32 0.0, %v2689
  %v2691 = vpop.f32.mrf.mxu0
  %v2692 = vadd.f32 0.0, %v2691
  %2693 = vmatprep.mubr.f32.mxu0 0.0
  %2694 = vmatmul.mubr.f32.gmra.mxu0 %v2181
  %v2695 = vpop.f32.mrf.mxu0
  %v2696 = vadd.f32 0.0, %v2695
  %v2697 = vpop.f32.mrf.mxu0
  %v2698 = vadd.f32 0.0, %v2697
  %2699 = vmatprep.mubr.f32.mxu0 0.0
  %2700 = vmatmul.mubr.f32.gmra.mxu0 %v2184
  %v2701 = vpop.f32.mrf.mxu0
  %v2702 = vadd.f32 0.0, %v2701
  %v2703 = vpop.f32.mrf.mxu0
  %v2704 = vadd.f32 0.0, %v2703
  %2705 = vmatprep.mubr.f32.mxu0 0.0
  %2706 = vmatmul.mubr.f32.gmra.mxu0 %v2187
  %v2707 = vpop.f32.mrf.mxu0
  %v2708 = vadd.f32 0.0, %v2707
  %v2709 = vpop.f32.mrf.mxu0
  %v2710 = vadd.f32 0.0, %v2709
  %2711 = vdwg.mxu0
  %v2712 = vmul.f32 %v261, %v2265
  %v2713 = vmul.f32 %v263, %v2267
  %v2714 = vmul.f32 %v518, %v2522
  %v2715 = vmul.f32 %v520, %v2524
  %v2716 = vmul.f32 %v267, %v2271
  %v2717 = vmul.f32 %v269, %v2273
  %v2718 = vmul.f32 %v524, %v2528
  %v2719 = vmul.f32 %v526, %v2530
  %v2720 = vmul.f32 %v273, %v2277
  %v2721 = vmul.f32 %v275, %v2279
  %v2722 = vmul.f32 %v530, %v2534
  %v2723 = vmul.f32 %v532, %v2536
  %v2724 = vmul.f32 %v279, %v2283
  %v2725 = vmul.f32 %v281, %v2285
  %v2726 = vmul.f32 %v536, %v2540
  %v2727 = vmul.f32 %v538, %v2542
  %v2728 = vmul.f32 %v285, %v2289
  %v2729 = vmul.f32 %v287, %v2291
  %v2730 = vmul.f32 %v542, %v2546
  %v2731 = vmul.f32 %v544, %v2548
  %v2732 = vmul.f32 %v291, %v2295
  %v2733 = vmul.f32 %v293, %v2297
  %v2734 = vmul.f32 %v548, %v2552
  %v2735 = vmul.f32 %v550, %v2554
  %v2736 = vmul.f32 %v297, %v2301
  %v2737 = vmul.f32 %v299, %v2303
  %v2738 = vmul.f32 %v554, %v2558
  %v2739 = vmul.f32 %v556, %v2560
  %v2740 = vmul.f32 %v303, %v2307
  %v2741 = vmul.f32 %v305, %v2309
  %v2742 = vmul.f32 %v560, %v2564
  %v2743 = vmul.f32 %v562, %v2566
  %v2744 = vmul.f32 %v309, %v2313
  %v2745 = vmul.f32 %v311, %v2315
  %v2746 = vmul.f32 %v566, %v2570
  %v2747 = vmul.f32 %v568, %v2572
  %v2748 = vmul.f32 %v315, %v2319
  %v2749 = vmul.f32 %v317, %v2321
  %v2750 = vmul.f32 %v572, %v2576
  %v2751 = vmul.f32 %v574, %v2578
  %v2752 = vmul.f32 %v321, %v2325
  %v2753 = vmul.f32 %v323, %v2327
  %v2754 = vmul.f32 %v578, %v2582
  %v2755 = vmul.f32 %v580, %v2584
  %v2756 = vmul.f32 %v327, %v2331
  %v2757 = vmul.f32 %v329, %v2333
  %v2758 = vmul.f32 %v584, %v2588
  %v2759 = vmul.f32 %v586, %v2590
  %v2760 = vmul.f32 %v333, %v2337
  %v2761 = vmul.f32 %v335, %v2339
  %v2762 = vmul.f32 %v590, %v2594
  %v2763 = vmul.f32 %v592, %v2596
  %v2764 = vmul.f32 %v339, %v2343
  %v2765 = vmul.f32 %v341, %v2345
  %v2766 = vmul.f32 %v596, %v2600
  %v2767 = vmul.f32 %v598, %v2602
  %v2768 = vmul.f32 %v345, %v2349
  %v2769 = vmul.f32 %v347, %v2351
  %v2770 = vmul.f32 %v602, %v2606
  %v2771 = vmul.f32 %v604, %v2608
  %v2772 = vmul.f32 %v351, %v2355
  %v2773 = vmul.f32 %v353, %v2357
  %v2774 = vmul.f32 %v608, %v2612
  %v2775 = vmul.f32 %v610, %v2614
  %v2776 = vmul.f32 %v357, %v2361
  %v2777 = vmul.f32 %v359, %v2363
  %v2778 = vmul.f32 %v614, %v2618
  %v2779 = vmul.f32 %v616, %v2620
  %v2780 = vmul.f32 %v363, %v2367
  %v2781 = vmul.f32 %v365, %v2369
  %v2782 = vmul.f32 %v620, %v2624
  %v2783 = vmul.f32 %v622, %v2626
  %v2784 = vmul.f32 %v369, %v2373
  %v2785 = vmul.f32 %v371, %v2375
  %v2786 = vmul.f32 %v626, %v2630
  %v2787 = vmul.f32 %v628, %v2632
  %v2788 = vmul.f32 %v375, %v2379
  %v2789 = vmul.f32 %v377, %v2381
  %v2790 = vmul.f32 %v632, %v2636
  %v2791 = vmul.f32 %v634, %v2638
  %v2792 = vmul.f32 %v381, %v2385
  %v2793 = vmul.f32 %v383, %v2387
  %v2794 = vmul.f32 %v638, %v2642
  %v2795 = vmul.f32 %v640, %v2644
  %v2796 = vmul.f32 %v387, %v2391
  %v2797 = vmul.f32 %v389, %v2393
  %v2798 = vmul.f32 %v644, %v2648
  %v2799 = vmul.f32 %v646, %v2650
  %v2800 = vmul.f32 %v393, %v2397
  %v2801 = vmul.f32 %v395, %v2399
  %v2802 = vmul.f32 %v650, %v2654
  %v2803 = vmul.f32 %v652, %v2656
  %v2804 = vmul.f32 %v399, %v2403
  %v2805 = vmul.f32 %v401, %v2405
  %v2806 = vmul.f32 %v656, %v2660
  %v2807 = vmul.f32 %v658, %v2662
  %v2808 = vmul.f32 %v405, %v2409
  %v2809 = vmul.f32 %v407, %v2411
  %v2810 = vmul.f32 %v662, %v2666
  %v2811 = vmul.f32 %v664, %v2668
  %v2812 = vmul.f32 %v411, %v2415
  %v2813 = vmul.f32 %v413, %v2417
  %v2814 = vmul.f32 %v668, %v2672
  %v2815 = vmul.f32 %v670, %v2674
  %v2816 = vmul.f32 %v417, %v2421
  %v2817 = vmul.f32 %v419, %v2423
  %v2818 = vmul.f32 %v674, %v2678
  %v2819 = vmul.f32 %v676, %v2680
  %v2820 = vmul.f32 %v423, %v2427
  %v2821 = vmul.f32 %v425, %v2429
  %v2822 = vmul.f32 %v680, %v2684
  %v2823 = vmul.f32 %v682, %v2686
  %v2824 = vmul.f32 %v429, %v2433
  %v2825 = vmul.f32 %v431, %v2435
  %v2826 = vmul.f32 %v686, %v2690
  %v2827 = vmul.f32 %v688, %v2692
  %v2828 = vmul.f32 %v435, %v2439
  %v2829 = vmul.f32 %v437, %v2441
  %v2830 = vmul.f32 %v692, %v2696
  %v2831 = vmul.f32 %v694, %v2698
  %v2832 = vmul.f32 %v441, %v2445
  %v2833 = vmul.f32 %v443, %v2447
  %v2834 = vmul.f32 %v698, %v2702
  %v2835 = vmul.f32 %v700, %v2704
  %v2836 = vmul.f32 %v447, %v2451
  %v2837 = vmul.f32 %v449, %v2453
  %v2838 = vmul.f32 %v704, %v2708
  %v2839 = vmul.f32 %v706, %v2710
  %v2840 = vld [vmem:[%s4] sm:$0xff]
  %v2841 = vld [vmem:[%s4 + $0x8] sm:$0xff]
  %v2842 = vld [vmem:[%s4 + $0x10] sm:$0xff]
  %v2843 = vld [vmem:[%s4 + $0x18] sm:$0xff]
  %v2844 = vld [vmem:[%s4 + $0x20] sm:$0xff]
  %v2845 = vld [vmem:[%s4 + $0x28] sm:$0xff]
  %v2846 = vld [vmem:[%s4 + $0x30] sm:$0xff]
  %v2847 = vld [vmem:[%s4 + $0x38] sm:$0xff]
  %v2848 = vld [vmem:[%s4 + $0x40] sm:$0xff]
  %v2849 = vld [vmem:[%s4 + $0x48] sm:$0xff]
  %v2850 = vld [vmem:[%s4 + $0x50] sm:$0xff]
  %v2851 = vld [vmem:[%s4 + $0x58] sm:$0xff]
  %v2852 = vld [vmem:[%s4 + $0x60] sm:$0xff]
  %v2853 = vld [vmem:[%s4 + $0x68] sm:$0xff]
  %v2854 = vld [vmem:[%s4 + $0x70] sm:$0xff]
  %v2855 = vld [vmem:[%s4 + $0x78] sm:$0xff]
  %v2856 = vld [vmem:[%s4 + $0x80] sm:$0xff]
  %v2857 = vld [vmem:[%s4 + $0x88] sm:$0xff]
  %v2858 = vld [vmem:[%s4 + $0x90] sm:$0xff]
  %v2859 = vld [vmem:[%s4 + $0x98] sm:$0xff]
  %v2860 = vld [vmem:[%s4 + $0xa0] sm:$0xff]
  %v2861 = vld [vmem:[%s4 + $0xa8] sm:$0xff]
  %v2862 = vld [vmem:[%s4 + $0xb0] sm:$0xff]
  %v2863 = vld [vmem:[%s4 + $0xb8] sm:$0xff]
  %v2864 = vld [vmem:[%s4 + $0xc0] sm:$0xff]
  %v2865 = vld [vmem:[%s4 + $0xc8] sm:$0xff]
  %v2866 = vld [vmem:[%s4 + $0xd0] sm:$0xff]
  %v2867 = vld [vmem:[%s4 + $0xd8] sm:$0xff]
  %v2868 = vld [vmem:[%s4 + $0xe0] sm:$0xff]
  %v2869 = vld [vmem:[%s4 + $0xe8] sm:$0xff]
  %v2870 = vld [vmem:[%s4 + $0xf0] sm:$0xff]
  %v2871 = vld [vmem:[%s4 + $0xf8] sm:$0xff]
  %2873 = vset.pattern.permute.xlu0 1
  %2874 = vperm.xlu0 %2873, %v2840
  %v2875 = vpop.permute.xlu0 %2874
  %2878 = vset.pattern.permute.xlu0 1
  %2879 = vperm.xlu0 %2878, %v2841
  %v2880 = vpop.permute.xlu0 %2879
  %2883 = vset.pattern.permute.xlu0 1
  %2884 = vperm.xlu0 %2883, %v2842
  %v2885 = vpop.permute.xlu0 %2884
  %2888 = vset.pattern.permute.xlu0 1
  %2889 = vperm.xlu0 %2888, %v2843
  %v2890 = vpop.permute.xlu0 %2889
  %2893 = vset.pattern.permute.xlu0 1
  %2894 = vperm.xlu0 %2893, %v2844
  %v2895 = vpop.permute.xlu0 %2894
  %2898 = vset.pattern.permute.xlu0 1
  %2899 = vperm.xlu0 %2898, %v2845
  %v2900 = vpop.permute.xlu0 %2899
  %2903 = vset.pattern.permute.xlu0 1
  %2904 = vperm.xlu0 %2903, %v2846
  %v2905 = vpop.permute.xlu0 %2904
  %2908 = vset.pattern.permute.xlu0 1
  %2909 = vperm.xlu0 %2908, %v2847
  %v2910 = vpop.permute.xlu0 %2909
  %2913 = vset.pattern.permute.xlu0 1
  %2914 = vperm.xlu0 %2913, %v2848
  %v2915 = vpop.permute.xlu0 %2914
  %2918 = vset.pattern.permute.xlu0 1
  %2919 = vperm.xlu0 %2918, %v2849
  %v2920 = vpop.permute.xlu0 %2919
  %2923 = vset.pattern.permute.xlu0 1
  %2924 = vperm.xlu0 %2923, %v2850
  %v2925 = vpop.permute.xlu0 %2924
  %2928 = vset.pattern.permute.xlu0 1
  %2929 = vperm.xlu0 %2928, %v2851
  %v2930 = vpop.permute.xlu0 %2929
  %2933 = vset.pattern.permute.xlu0 1
  %2934 = vperm.xlu0 %2933, %v2852
  %v2935 = vpop.permute.xlu0 %2934
  %2938 = vset.pattern.permute.xlu0 1
  %2939 = vperm.xlu0 %2938, %v2853
  %v2940 = vpop.permute.xlu0 %2939
  %2943 = vset.pattern.permute.xlu0 1
  %2944 = vperm.xlu0 %2943, %v2854
  %v2945 = vpop.permute.xlu0 %2944
  %2948 = vset.pattern.permute.xlu0 1
  %2949 = vperm.xlu0 %2948, %v2855
  %v2950 = vpop.permute.xlu0 %2949
  %2953 = vset.pattern.permute.xlu0 1
  %2954 = vperm.xlu0 %2953, %v2856
  %v2955 = vpop.permute.xlu0 %2954
  %2958 = vset.pattern.permute.xlu0 1
  %2959 = vperm.xlu0 %2958, %v2857
  %v2960 = vpop.permute.xlu0 %2959
  %2963 = vset.pattern.permute.xlu0 1
  %2964 = vperm.xlu0 %2963, %v2858
  %v2965 = vpop.permute.xlu0 %2964
  %2968 = vset.pattern.permute.xlu0 1
  %2969 = vperm.xlu0 %2968, %v2859
  %v2970 = vpop.permute.xlu0 %2969
  %2973 = vset.pattern.permute.xlu0 1
  %2974 = vperm.xlu0 %2973, %v2860
  %v2975 = vpop.permute.xlu0 %2974
  %2978 = vset.pattern.permute.xlu0 1
  %2979 = vperm.xlu0 %2978, %v2861
  %v2980 = vpop.permute.xlu0 %2979
  %2983 = vset.pattern.permute.xlu0 1
  %2984 = vperm.xlu0 %2983, %v2862
  %v2985 = vpop.permute.xlu0 %2984
  %2988 = vset.pattern.permute.xlu0 1
  %2989 = vperm.xlu0 %2988, %v2863
  %v2990 = vpop.permute.xlu0 %2989
  %2993 = vset.pattern.permute.xlu0 1
  %2994 = vperm.xlu0 %2993, %v2864
  %v2995 = vpop.permute.xlu0 %2994
  %2998 = vset.pattern.permute.xlu0 1
  %2999 = vperm.xlu0 %2998, %v2865
  %v3000 = vpop.permute.xlu0 %2999
  %3003 = vset.pattern.permute.xlu0 1
  %3004 = vperm.xlu0 %3003, %v2866
  %v3005 = vpop.permute.xlu0 %3004
  %3008 = vset.pattern.permute.xlu0 1
  %3009 = vperm.xlu0 %3008, %v2867
  %v3010 = vpop.permute.xlu0 %3009
  %3013 = vset.pattern.permute.xlu0 1
  %3014 = vperm.xlu0 %3013, %v2868
  %v3015 = vpop.permute.xlu0 %3014
  %3018 = vset.pattern.permute.xlu0 1
  %3019 = vperm.xlu0 %3018, %v2869
  %v3020 = vpop.permute.xlu0 %3019
  %3023 = vset.pattern.permute.xlu0 1
  %3024 = vperm.xlu0 %3023, %v2870
  %v3025 = vpop.permute.xlu0 %3024
  %3028 = vset.pattern.permute.xlu0 1
  %3029 = vperm.xlu0 %3028, %v2871
  %v3030 = vpop.permute.xlu0 %3029
  %v3032 = vadd.f32 %v2712, %v2875
  %v3033 = vadd.f32 %v2713, %v2875
  %v3034 = vadd.f32 %v2714, %v2875
  %v3035 = vadd.f32 %v2715, %v2875
  %v3036 = vadd.f32 %v2716, %v2880
  %v3037 = vadd.f32 %v2717, %v2880
  %v3038 = vadd.f32 %v2718, %v2880
  %v3039 = vadd.f32 %v2719, %v2880
  %v3040 = vadd.f32 %v2720, %v2885
  %v3041 = vadd.f32 %v2721, %v2885
  %v3042 = vadd.f32 %v2722, %v2885
  %v3043 = vadd.f32 %v2723, %v2885
  %v3044 = vadd.f32 %v2724, %v2890
  %v3045 = vadd.f32 %v2725, %v2890
  %v3046 = vadd.f32 %v2726, %v2890
  %v3047 = vadd.f32 %v2727, %v2890
  %v3048 = vadd.f32 %v2728, %v2895
  %v3049 = vadd.f32 %v2729, %v2895
  %v3050 = vadd.f32 %v2730, %v2895
  %v3051 = vadd.f32 %v2731, %v2895
  %v3052 = vadd.f32 %v2732, %v2900
  %v3053 = vadd.f32 %v2733, %v2900
  %v3054 = vadd.f32 %v2734, %v2900
  %v3055 = vadd.f32 %v2735, %v2900
  %v3056 = vadd.f32 %v2736, %v2905
  %v3057 = vadd.f32 %v2737, %v2905
  %v3058 = vadd.f32 %v2738, %v2905
  %v3059 = vadd.f32 %v2739, %v2905
  %v3060 = vadd.f32 %v2740, %v2910
  %v3061 = vadd.f32 %v2741, %v2910
  %v3062 = vadd.f32 %v2742, %v2910
  %v3063 = vadd.f32 %v2743, %v2910
  %v3064 = vadd.f32 %v2744, %v2915
  %v3065 = vadd.f32 %v2745, %v2915
  %v3066 = vadd.f32 %v2746, %v2915
  %v3067 = vadd.f32 %v2747, %v2915
  %v3068 = vadd.f32 %v2748, %v2920
  %v3069 = vadd.f32 %v2749, %v2920
  %v3070 = vadd.f32 %v2750, %v2920
  %v3071 = vadd.f32 %v2751, %v2920
  %v3072 = vadd.f32 %v2752, %v2925
  %v3073 = vadd.f32 %v2753, %v2925
  %v3074 = vadd.f32 %v2754, %v2925
  %v3075 = vadd.f32 %v2755, %v2925
  %v3076 = vadd.f32 %v2756, %v2930
  %v3077 = vadd.f32 %v2757, %v2930
  %v3078 = vadd.f32 %v2758, %v2930
  %v3079 = vadd.f32 %v2759, %v2930
  %v3080 = vadd.f32 %v2760, %v2935
  %v3081 = vadd.f32 %v2761, %v2935
  %v3082 = vadd.f32 %v2762, %v2935
  %v3083 = vadd.f32 %v2763, %v2935
  %v3084 = vadd.f32 %v2764, %v2940
  %v3085 = vadd.f32 %v2765, %v2940
  %v3086 = vadd.f32 %v2766, %v2940
  %v3087 = vadd.f32 %v2767, %v2940
  %v3088 = vadd.f32 %v2768, %v2945
  %v3089 = vadd.f32 %v2769, %v2945
  %v3090 = vadd.f32 %v2770, %v2945
  %v3091 = vadd.f32 %v2771, %v2945
  %v3092 = vadd.f32 %v2772, %v2950
  %v3093 = vadd.f32 %v2773, %v2950
  %v3094 = vadd.f32 %v2774, %v2950
  %v3095 = vadd.f32 %v2775, %v2950
  %v3096 = vadd.f32 %v2776, %v2955
  %v3097 = vadd.f32 %v2777, %v2955
  %v3098 = vadd.f32 %v2778, %v2955
  %v3099 = vadd.f32 %v2779, %v2955
  %v3100 = vadd.f32 %v2780, %v2960
  %v3101 = vadd.f32 %v2781, %v2960
  %v3102 = vadd.f32 %v2782, %v2960
  %v3103 = vadd.f32 %v2783, %v2960
  %v3104 = vadd.f32 %v2784, %v2965
  %v3105 = vadd.f32 %v2785, %v2965
  %v3106 = vadd.f32 %v2786, %v2965
  %v3107 = vadd.f32 %v2787, %v2965
  %v3108 = vadd.f32 %v2788, %v2970
  %v3109 = vadd.f32 %v2789, %v2970
  %v3110 = vadd.f32 %v2790, %v2970
  %v3111 = vadd.f32 %v2791, %v2970
  %v3112 = vadd.f32 %v2792, %v2975
  %v3113 = vadd.f32 %v2793, %v2975
  %v3114 = vadd.f32 %v2794, %v2975
  %v3115 = vadd.f32 %v2795, %v2975
  %v3116 = vadd.f32 %v2796, %v2980
  %v3117 = vadd.f32 %v2797, %v2980
  %v3118 = vadd.f32 %v2798, %v2980
  %v3119 = vadd.f32 %v2799, %v2980
  %v3120 = vadd.f32 %v2800, %v2985
  %v3121 = vadd.f32 %v2801, %v2985
  %v3122 = vadd.f32 %v2802, %v2985
  %v3123 = vadd.f32 %v2803, %v2985
  %v3124 = vadd.f32 %v2804, %v2990
  %v3125 = vadd.f32 %v2805, %v2990
  %v3126 = vadd.f32 %v2806, %v2990
  %v3127 = vadd.f32 %v2807, %v2990
  %v3128 = vadd.f32 %v2808, %v2995
  %v3129 = vadd.f32 %v2809, %v2995
  %v3130 = vadd.f32 %v2810, %v2995
  %v3131 = vadd.f32 %v2811, %v2995
  %v3132 = vadd.f32 %v2812, %v3000
  %v3133 = vadd.f32 %v2813, %v3000
  %v3134 = vadd.f32 %v2814, %v3000
  %v3135 = vadd.f32 %v2815, %v3000
  %v3136 = vadd.f32 %v2816, %v3005
  %v3137 = vadd.f32 %v2817, %v3005
  %v3138 = vadd.f32 %v2818, %v3005
  %v3139 = vadd.f32 %v2819, %v3005
  %v3140 = vadd.f32 %v2820, %v3010
  %v3141 = vadd.f32 %v2821, %v3010
  %v3142 = vadd.f32 %v2822, %v3010
  %v3143 = vadd.f32 %v2823, %v3010
  %v3144 = vadd.f32 %v2824, %v3015
  %v3145 = vadd.f32 %v2825, %v3015
  %v3146 = vadd.f32 %v2826, %v3015
  %v3147 = vadd.f32 %v2827, %v3015
  %v3148 = vadd.f32 %v2828, %v3020
  %v3149 = vadd.f32 %v2829, %v3020
  %v3150 = vadd.f32 %v2830, %v3020
  %v3151 = vadd.f32 %v2831, %v3020
  %v3152 = vadd.f32 %v2832, %v3025
  %v3153 = vadd.f32 %v2833, %v3025
  %v3154 = vadd.f32 %v2834, %v3025
  %v3155 = vadd.f32 %v2835, %v3025
  %v3156 = vadd.f32 %v2836, %v3030
  %v3157 = vadd.f32 %v2837, %v3030
  %v3158 = vadd.f32 %v2838, %v3030
  %v3159 = vadd.f32 %v2839, %v3030
  %v3160 = vmax.f32 %v3032, 0.0
  %v3161 = vmax.f32 %v3033, 0.0
  %v3162 = vmax.f32 %v3034, 0.0
  %v3163 = vmax.f32 %v3035, 0.0
  %v3164 = vmax.f32 %v3036, 0.0
  %v3165 = vmax.f32 %v3037, 0.0
  %v3166 = vmax.f32 %v3038, 0.0
  %v3167 = vmax.f32 %v3039, 0.0
  %v3168 = vmax.f32 %v3040, 0.0
  %v3169 = vmax.f32 %v3041, 0.0
  %v3170 = vmax.f32 %v3042, 0.0
  %v3171 = vmax.f32 %v3043, 0.0
  %v3172 = vmax.f32 %v3044, 0.0
  %v3173 = vmax.f32 %v3045, 0.0
  %v3174 = vmax.f32 %v3046, 0.0
  %v3175 = vmax.f32 %v3047, 0.0
  %v3176 = vmax.f32 %v3048, 0.0
  %v3177 = vmax.f32 %v3049, 0.0
  %v3178 = vmax.f32 %v3050, 0.0
  %v3179 = vmax.f32 %v3051, 0.0
  %v3180 = vmax.f32 %v3052, 0.0
  %v3181 = vmax.f32 %v3053, 0.0
  %v3182 = vmax.f32 %v3054, 0.0
  %v3183 = vmax.f32 %v3055, 0.0
  %v3184 = vmax.f32 %v3056, 0.0
  %v3185 = vmax.f32 %v3057, 0.0
  %v3186 = vmax.f32 %v3058, 0.0
  %v3187 = vmax.f32 %v3059, 0.0
  %v3188 = vmax.f32 %v3060, 0.0
  %v3189 = vmax.f32 %v3061, 0.0
  %v3190 = vmax.f32 %v3062, 0.0
  %v3191 = vmax.f32 %v3063, 0.0
  %v3192 = vmax.f32 %v3064, 0.0
  %v3193 = vmax.f32 %v3065, 0.0
  %v3194 = vmax.f32 %v3066, 0.0
  %v3195 = vmax.f32 %v3067, 0.0
  %v3196 = vmax.f32 %v3068, 0.0
  %v3197 = vmax.f32 %v3069, 0.0
  %v3198 = vmax.f32 %v3070, 0.0
  %v3199 = vmax.f32 %v3071, 0.0
  %v3200 = vmax.f32 %v3072, 0.0
  %v3201 = vmax.f32 %v3073, 0.0
  %v3202 = vmax.f32 %v3074, 0.0
  %v3203 = vmax.f32 %v3075, 0.0
  %v3204 = vmax.f32 %v3076, 0.0
  %v3205 = vmax.f32 %v3077, 0.0
  %v3206 = vmax.f32 %v3078, 0.0
  %v3207 = vmax.f32 %v3079, 0.0
  %v3208 = vmax.f32 %v3080, 0.0
  %v3209 = vmax.f32 %v3081, 0.0
  %v3210 = vmax.f32 %v3082, 0.0
  %v3211 = vmax.f32 %v3083, 0.0
  %v3212 = vmax.f32 %v3084, 0.0
  %v3213 = vmax.f32 %v3085, 0.0
  %v3214 = vmax.f32 %v3086, 0.0
  %v3215 = vmax.f32 %v3087, 0.0
  %v3216 = vmax.f32 %v3088, 0.0
  %v3217 = vmax.f32 %v3089, 0.0
  %v3218 = vmax.f32 %v3090, 0.0
  %v3219 = vmax.f32 %v3091, 0.0
  %v3220 = vmax.f32 %v3092, 0.0
  %v3221 = vmax.f32 %v3093, 0.0
  %v3222 = vmax.f32 %v3094, 0.0
  %v3223 = vmax.f32 %v3095, 0.0
  %v3224 = vmax.f32 %v3096, 0.0
  %v3225 = vmax.f32 %v3097, 0.0
  %v3226 = vmax.f32 %v3098, 0.0
  %v3227 = vmax.f32 %v3099, 0.0
  %v3228 = vmax.f32 %v3100, 0.0
  %v3229 = vmax.f32 %v3101, 0.0
  %v3230 = vmax.f32 %v3102, 0.0
  %v3231 = vmax.f32 %v3103, 0.0
  %v3232 = vmax.f32 %v3104, 0.0
  %v3233 = vmax.f32 %v3105, 0.0
  %v3234 = vmax.f32 %v3106, 0.0
  %v3235 = vmax.f32 %v3107, 0.0
  %v3236 = vmax.f32 %v3108, 0.0
  %v3237 = vmax.f32 %v3109, 0.0
  %v3238 = vmax.f32 %v3110, 0.0
  %v3239 = vmax.f32 %v3111, 0.0
  %v3240 = vmax.f32 %v3112, 0.0
  %v3241 = vmax.f32 %v3113, 0.0
  %v3242 = vmax.f32 %v3114, 0.0
  %v3243 = vmax.f32 %v3115, 0.0
  %v3244 = vmax.f32 %v3116, 0.0
  %v3245 = vmax.f32 %v3117, 0.0
  %v3246 = vmax.f32 %v3118, 0.0
  %v3247 = vmax.f32 %v3119, 0.0
  %v3248 = vmax.f32 %v3120, 0.0
  %v3249 = vmax.f32 %v3121, 0.0
  %v3250 = vmax.f32 %v3122, 0.0
  %v3251 = vmax.f32 %v3123, 0.0
  %v3252 = vmax.f32 %v3124, 0.0
  %v3253 = vmax.f32 %v3125, 0.0
  %v3254 = vmax.f32 %v3126, 0.0
  %v3255 = vmax.f32 %v3127, 0.0
  %v3256 = vmax.f32 %v3128, 0.0
  %v3257 = vmax.f32 %v3129, 0.0
  %v3258 = vmax.f32 %v3130, 0.0
  %v3259 = vmax.f32 %v3131, 0.0
  %v3260 = vmax.f32 %v3132, 0.0
  %v3261 = vmax.f32 %v3133, 0.0
  %v3262 = vmax.f32 %v3134, 0.0
  %v3263 = vmax.f32 %v3135, 0.0
  %v3264 = vmax.f32 %v3136, 0.0
  %v3265 = vmax.f32 %v3137, 0.0
  %v3266 = vmax.f32 %v3138, 0.0
  %v3267 = vmax.f32 %v3139, 0.0
  %v3268 = vmax.f32 %v3140, 0.0
  %v3269 = vmax.f32 %v3141, 0.0
  %v3270 = vmax.f32 %v3142, 0.0
  %v3271 = vmax.f32 %v3143, 0.0
  %v3272 = vmax.f32 %v3144, 0.0
  %v3273 = vmax.f32 %v3145, 0.0
  %v3274 = vmax.f32 %v3146, 0.0
  %v3275 = vmax.f32 %v3147, 0.0
  %v3276 = vmax.f32 %v3148, 0.0
  %v3277 = vmax.f32 %v3149, 0.0
  %v3278 = vmax.f32 %v3150, 0.0
  %v3279 = vmax.f32 %v3151, 0.0
  %v3280 = vmax.f32 %v3152, 0.0
  %v3281 = vmax.f32 %v3153, 0.0
  %v3282 = vmax.f32 %v3154, 0.0
  %v3283 = vmax.f32 %v3155, 0.0
  %v3284 = vmax.f32 %v3156, 0.0
  %v3285 = vmax.f32 %v3157, 0.0
  %v3286 = vmax.f32 %v3158, 0.0
  %v3287 = vmax.f32 %v3159, 0.0
  %v3288 = vld [vmem:[%s5] sm:$0xf]
  %v3289 = vld [vmem:[%s5 + $0x8] sm:$0xf]
  %v3290 = vld [vmem:[%s5] sm:$0xf0]
  %3292 = vset.pattern.permute.xlu0 0
  %3293 = vperm.xlu0 %3292, %v3290
  %v3294 = vpop.permute.xlu0 %3293
  %v3295 = vrot.slane %v3294, 4
  %3297 = vmatprep.subr.mxu0 %v3221
  %3298 = vmatpush1.msra.mxu0 %v3220
  %3299 = vmatprep.subr.mxu0 %v3217
  %3300 = vmatpush1.msra.mxu0 %v3216
  %3301 = vmatprep.subr.mxu0 %v3213
  %3302 = vmatpush1.msra.mxu0 %v3212
  %3303 = vmatprep.subr.mxu0 %v3209
  %3304 = vmatpush1.msra.mxu0 %v3208
  %3305 = vmatprep.subr.mxu0 %v3205
  %3306 = vmatpush1.msra.mxu0 %v3204
  %3307 = vmatprep.subr.mxu0 %v3201
  %3308 = vmatpush1.msra.mxu0 %v3200
  %3309 = vmatprep.subr.mxu0 %v3197
  %3310 = vmatpush1.msra.mxu0 %v3196
  %3311 = vmatprep.subr.mxu0 %v3193
  %3312 = vmatpush1.msra.mxu0 %v3192
  %3313 = vmatprep.subr.mxu0 %v3189
  %3314 = vmatpush1.msra.mxu0 %v3188
  %3315 = vmatprep.subr.mxu0 %v3185
  %3316 = vmatpush1.msra.mxu0 %v3184
  %3317 = vmatprep.subr.mxu0 %v3181
  %3318 = vmatpush1.msra.mxu0 %v3180
  %3319 = vmatprep.subr.mxu0 %v3177
  %3320 = vmatpush1.msra.mxu0 %v3176
  %3321 = vmatprep.subr.mxu0 %v3173
  %3322 = vmatpush1.msra.mxu0 %v3172
  %3323 = vmatprep.subr.mxu0 %v3169
  %3324 = vmatpush1.msra.mxu0 %v3168
  %3325 = vmatprep.subr.mxu0 %v3165
  %3326 = vmatpush1.msra.mxu0 %v3164
  %3327 = vmatprep.subr.mxu0 %v3161
  %3328 = vmatpush1.msra.mxu0 %v3160
  %3329 = vmatprep.subr.mxu0 %v3285
  %3330 = vmatpush2.msra.mxu0 %v3284
  %3331 = vmatprep.subr.mxu0 %v3281
  %3332 = vmatpush2.msra.mxu0 %v3280
  %3333 = vmatprep.subr.mxu0 %v3277
  %3334 = vmatpush2.msra.mxu0 %v3276
  %3335 = vmatprep.subr.mxu0 %v3273
  %3336 = vmatpush2.msra.mxu0 %v3272
  %3337 = vmatprep.subr.mxu0 %v3269
  %3338 = vmatpush2.msra.mxu0 %v3268
  %3339 = vmatprep.subr.mxu0 %v3265
  %3340 = vmatpush2.msra.mxu0 %v3264
  %3341 = vmatprep.subr.mxu0 %v3261
  %3342 = vmatpush2.msra.mxu0 %v3260
  %3343 = vmatprep.subr.mxu0 %v3257
  %3344 = vmatpush2.msra.mxu0 %v3256
  %3345 = vmatprep.subr.mxu0 %v3253
  %3346 = vmatpush2.msra.mxu0 %v3252
  %3347 = vmatprep.subr.mxu0 %v3249
  %3348 = vmatpush2.msra.mxu0 %v3248
  %3349 = vmatprep.subr.mxu0 %v3245
  %3350 = vmatpush2.msra.mxu0 %v3244
  %3351 = vmatprep.subr.mxu0 %v3241
  %3352 = vmatpush2.msra.mxu0 %v3240
  %3353 = vmatprep.subr.mxu0 %v3237
  %3354 = vmatpush2.msra.mxu0 %v3236
  %3355 = vmatprep.subr.mxu0 %v3233
  %3356 = vmatpush2.msra.mxu0 %v3232
  %3357 = vmatprep.subr.mxu0 %v3229
  %3358 = vmatpush2.msra.mxu0 %v3228
  %3359 = vmatprep.subr.mxu0 %v3225
  %3360 = vmatpush2.msra.mxu0 %v3224
  %3361 = vmatprep.mubr.f32.mxu0 %v3289
  %3362 = vmatmul.mubr.f32.gmra.mxu0 %v3288
  %v3363 = vpop.f32.mrf.mxu0
  %v3364 = vadd.f32 %v3295, %v3363
  %v3365 = vpop.f32.mrf.mxu0
  %v3366 = vadd.f32 %v3295, %v3365
  %3367 = vdwg.mxu0
  %3368 = vmatprep.subr.mxu0 %v3223
  %3369 = vmatpush1.msra.mxu0 %v3222
  %3370 = vmatprep.subr.mxu0 %v3219
  %3371 = vmatpush1.msra.mxu0 %v3218
  %3372 = vmatprep.subr.mxu0 %v3215
  %3373 = vmatpush1.msra.mxu0 %v3214
  %3374 = vmatprep.subr.mxu0 %v3211
  %3375 = vmatpush1.msra.mxu0 %v3210
  %3376 = vmatprep.subr.mxu0 %v3207
  %3377 = vmatpush1.msra.mxu0 %v3206
  %3378 = vmatprep.subr.mxu0 %v3203
  %3379 = vmatpush1.msra.mxu0 %v3202
  %3380 = vmatprep.subr.mxu0 %v3199
  %3381 = vmatpush1.msra.mxu0 %v3198
  %3382 = vmatprep.subr.mxu0 %v3195
  %3383 = vmatpush1.msra.mxu0 %v3194
  %3384 = vmatprep.subr.mxu0 %v3191
  %3385 = vmatpush1.msra.mxu0 %v3190
  %3386 = vmatprep.subr.mxu0 %v3187
  %3387 = vmatpush1.msra.mxu0 %v3186
  %3388 = vmatprep.subr.mxu0 %v3183
  %3389 = vmatpush1.msra.mxu0 %v3182
  %3390 = vmatprep.subr.mxu0 %v3179
  %3391 = vmatpush1.msra.mxu0 %v3178
  %3392 = vmatprep.subr.mxu0 %v3175
  %3393 = vmatpush1.msra.mxu0 %v3174
  %3394 = vmatprep.subr.mxu0 %v3171
  %3395 = vmatpush1.msra.mxu0 %v3170
  %3396 = vmatprep.subr.mxu0 %v3167
  %3397 = vmatpush1.msra.mxu0 %v3166
  %3398 = vmatprep.subr.mxu0 %v3163
  %3399 = vmatpush1.msra.mxu0 %v3162
  %3400 = vmatprep.subr.mxu0 %v3287
  %3401 = vmatpush2.msra.mxu0 %v3286
  %3402 = vmatprep.subr.mxu0 %v3283
  %3403 = vmatpush2.msra.mxu0 %v3282
  %3404 = vmatprep.subr.mxu0 %v3279
  %3405 = vmatpush2.msra.mxu0 %v3278
  %3406 = vmatprep.subr.mxu0 %v3275
  %3407 = vmatpush2.msra.mxu0 %v3274
  %3408 = vmatprep.subr.mxu0 %v3271
  %3409 = vmatpush2.msra.mxu0 %v3270
  %3410 = vmatprep.subr.mxu0 %v3267
  %3411 = vmatpush2.msra.mxu0 %v3266
  %3412 = vmatprep.subr.mxu0 %v3263
  %3413 = vmatpush2.msra.mxu0 %v3262
  %3414 = vmatprep.subr.mxu0 %v3259
  %3415 = vmatpush2.msra.mxu0 %v3258
  %3416 = vmatprep.subr.mxu0 %v3255
  %3417 = vmatpush2.msra.mxu0 %v3254
  %3418 = vmatprep.subr.mxu0 %v3251
  %3419 = vmatpush2.msra.mxu0 %v3250
  %3420 = vmatprep.subr.mxu0 %v3247
  %3421 = vmatpush2.msra.mxu0 %v3246
  %3422 = vmatprep.subr.mxu0 %v3243
  %3423 = vmatpush2.msra.mxu0 %v3242
  %3424 = vmatprep.subr.mxu0 %v3239
  %3425 = vmatpush2.msra.mxu0 %v3238
  %3426 = vmatprep.subr.mxu0 %v3235
  %3427 = vmatpush2.msra.mxu0 %v3234
  %3428 = vmatprep.subr.mxu0 %v3231
  %3429 = vmatpush2.msra.mxu0 %v3230
  %3430 = vmatprep.subr.mxu0 %v3227
  %3431 = vmatpush2.msra.mxu0 %v3226
  %3432 = vmatprep.mubr.f32.mxu0 %v3289
  %3433 = vmatmul.mubr.f32.gmra.mxu0 %v3288
  %v3434 = vpop.f32.mrf.mxu0
  %v3435 = vadd.f32 %v3295, %v3434
  %v3436 = vpop.f32.mrf.mxu0
  %v3437 = vadd.f32 %v3295, %v3436
  %3438 = vdwg.mxu0
  %v3443 = vcombine.low %v3364, %v3366
  %v3444 = vcombine.low %v3435, %v3437
  %3447 = vst [vmem:[%s8] sm:$0xff] %v3443
  %3448 = vst [vmem:[%s8 + $0x8] sm:$0xff] %v3444
  // Predicated region
  $region34: #{csmnet_heads.1} parent=0 // pred_check
    _
  $region35: #{csmnet_heads.1} parent=0 // pred_check_branch
    %3450 = sbr.rel (0) target = $region37
  $region36: #{csmnet_heads.1} parent=0 // pred_region
    _
  $region37: #{csmnet_heads.1} parent=0 // pred_fallthru
    _
  // Predicated region
  $region38: #{csmnet_heads.1} parent=0 // pred_check
    _
  $region39: #{csmnet_heads.1} parent=0 // pred_check_branch
    %3452 = sbr.rel (0) target = $region41
  $region40: #{csmnet_heads.1} parent=0 // pred_region
    _
  $region41: #{csmnet_heads.1} parent=0 // pred_fallthru
    _

</llo_original>
